<compile_context>
chip_gen: v6e
topology: v6e:2x2x1
jax: 0.10.0
libtpu: 0.0.40
codegen_flags: <defaults>
</compile_context>

<pallas_src>
import functools

import jax
import jax.numpy as jnp
from jax import lax
from jax.experimental import pallas as pl
from jax.experimental.pallas import tpu as pltpu

BN_EPS = 1e-5
_LANE = 128                        # lane width for every block's last dim
_TM_MAX = 512                      # pass-1 row-tile upper bound (multiple of 8)
_TM2_MAX_ELEMS = 2 << 20           # pass-2 block budget (elements, ~4 MiB bf16)
_VMEM_LIMIT = 48 * 1024 * 1024     # scoped-VMEM cap (leaves headroom on v7x)


def _round_up(x, m):
    return ((x + m - 1) // m) * m


def _pick_tk(k_pad):
    """Largest K tile <= 1024 (multiple of 128) that divides the padded K."""
    for cand in (1024, 768, 512, 384, 256, 128):
        if k_pad % cand == 0:
            return cand
    return _LANE


# ---------------------------------------------------------------------------
# Pallas kernels
# ---------------------------------------------------------------------------
def _conv_stats_kernel(p_ref, w_ref, conv_ref, stats_ref, acc_ref):
    """Tiled GEMM (bf16 in, f32 accumulate on the MXU).

    Epilogue (last K step) stores the conv tile in bf16 plus per-channel
    partial sum / sum-of-squares for the global BatchNorm statistics.  Only
    rows 0 and 1 of the 8-row stats block are meaningful; the rest are never
    read back."""
    k = pl.program_id(2)

    @pl.when(k == 0)
    def _():
        acc_ref[...] = jnp.zeros_like(acc_ref)

    acc_ref[...] += jnp.dot(p_ref[...], w_ref[...],
                            preferred_element_type=jnp.float32)

    @pl.when(k == pl.num_programs(2) - 1)
    def _():
        acc = acc_ref[...]
        conv_ref[...] = acc.astype(conv_ref.dtype)
        stats_ref[0:1, :] = jnp.sum(acc, axis=0, keepdims=True)        # [1, TN]
        stats_ref[1:2, :] = jnp.sum(acc * acc, axis=0, keepdims=True)  # [1, TN]


def _bn_mish_kernel(conv_ref, scale_ref, shift_ref, o_ref):
    """Folded BN affine (single FMA) + cheap rational Mish epilogue.

    mish(y) = y * tanh(softplus(y)) = y * (w^2 - 1) / (w^2 + 1), w = 1 + e^y,
    i.e. one exp + one reciprocal instead of exp + log1p + tanh."""
    y = conv_ref[...].astype(jnp.float32) * scale_ref[0:1, :] + shift_ref[0:1, :]
    w = 1.0 + jnp.exp(jnp.minimum(y, 20.0))
    w2 = w * w
    o_ref[...] = (y * (w2 - 1.0) / (w2 + 1.0)).astype(o_ref.dtype)


# ---------------------------------------------------------------------------
# Fused Conv + BN + Mish wrapper (NHWC)
# ---------------------------------------------------------------------------
def _im2col_nhwc(x, ksize, stride):
    """x: [N, H, W, C] -> patches [N*Ho*Wo, k*k*C] (tap-major, channel fastest)."""
    n, h, w, c = x.shape
    p = ksize // 2
    if p:
        x = jnp.pad(x, ((0, 0), (p, p), (p, p), (0, 0)))
    ho = (h + 2 * p - ksize) // stride + 1
    wo = (w + 2 * p - ksize) // stride + 1
    if ksize == 1 and stride == 1:
        return x.reshape(n * ho * wo, c), ho, wo
    cols = []
    for i in range(ksize):
        for j in range(ksize):
            cols.append(x[:, i:i + stride * ho:stride, j:j + stride * wo:stride, :])
    patches = jnp.concatenate(cols, axis=-1)               # [N, Ho, Wo, k*k*C]
    return patches.reshape(n * ho * wo, ksize * ksize * c), ho, wo


@functools.partial(jax.jit, static_argnames=("kernel_size", "stride"))
def conv_bn_mish_nhwc(x, weight, gamma, beta, *, kernel_size, stride=1):
    """Fused Conv2d(bias=False) + BatchNorm2d(batch stats) + Mish.

    x: [N, H, W, Cin] NHWC (f32 or bf16).  weight: [Cout, Cin, k, k] (OIHW).
    Returns [N, Ho, Wo, Cout] bf16.
    """
    n = x.shape[0]
    cout = weight.shape[0]
    k = kernel_size

    # bf16 MXU operands; accumulation stays f32 inside the kernel.
    patches, ho, wo = _im2col_nhwc(x.astype(jnp.bfloat16), k, stride)
    m_true, k_true = patches.shape
    w_flat = jnp.transpose(weight.astype(jnp.bfloat16), (2, 3, 1, 0)).reshape(k_true, cout)

    # Lane-dense padding / tile derivation.
    cout_pad = _round_up(cout, _LANE)
    k_pad = _round_up(k_true, _LANE)
    tk = _pick_tk(k_pad)
    tm = min(_TM_MAX, _round_up(m_true, 8))
    m_pad = _round_up(m_true, tm)
    tn = 256 if cout_pad % 256 == 0 else _LANE
    # Keep >=2 blocks on the parallel (M, Cout) axes when possible so both
    # v7x TensorCores get work on the deep, small-M layers.
    if m_pad // tm == 1 and cout_pad // tn == 1:
        if tn == 256:
            tn = _LANE
        elif tm >= 16:
            tm = _round_up(tm // 2, 8)
            m_pad = _round_up(m_true, tm)

    patches = jnp.pad(patches, ((0, m_pad - m_true), (0, k_pad - k_true)))
    w_flat = jnp.pad(w_flat, ((0, k_pad - k_true), (0, cout_pad - cout)))

    grid_m, grid_n, grid_k = m_pad // tm, cout_pad // tn, k_pad // tk

    # ---- pass 1: conv GEMM (bf16 out) + per-tile partial BN moments ---------
    conv_bf16, part = pl.pallas_call(
        _conv_stats_kernel,
        out_shape=(jax.ShapeDtypeStruct((m_pad, cout_pad), jnp.bfloat16),
                   jax.ShapeDtypeStruct((grid_m * 8, cout_pad), jnp.float32)),
        grid=(grid_m, grid_n, grid_k),
        in_specs=[
            pl.BlockSpec((tm, tk), lambda m, c, kk: (m, kk)),
            pl.BlockSpec((tk, tn), lambda m, c, kk: (kk, c)),
        ],
        out_specs=(
            pl.BlockSpec((tm, tn), lambda m, c, kk: (m, c)),
            pl.BlockSpec((8, tn), lambda m, c, kk: (m, c)),
        ),
        scratch_shapes=[pltpu.VMEM((tm, tn), jnp.float32)],
        compiler_params=pltpu.CompilerParams(
            dimension_semantics=("parallel", "parallel", "arbitrary"),
            vmem_limit_bytes=_VMEM_LIMIT),
        cost_estimate=pl.CostEstimate(
            flops=2 * m_pad * k_pad * cout_pad,
            transcendentals=0,
            bytes_accessed=2 * (grid_n * m_pad * k_pad + grid_m * k_pad * cout_pad)
                           + 2 * m_pad * cout_pad + 32 * grid_m * cout_pad),
    )(patches, w_flat)

    # Global (training-mode) BatchNorm stats from the partial moments, folded
    # into a single per-channel scale/shift for the apply pass.
    # TODO(synk): Welford-style combine of the per-tile moments would avoid the
    #             E[x^2]-E[x]^2 cancellation for channels with |mean| >> std.
    part = part.reshape(grid_m, 8, cout_pad)
    count = jnp.float32(m_true)
    mean = jnp.sum(part[:, 0, :], axis=0) / count
    var = jnp.maximum(jnp.sum(part[:, 1, :], axis=0) / count - mean * mean, 0.0)
    inv_std = lax.rsqrt(var + BN_EPS)
    gamma_p = jnp.pad(gamma.astype(jnp.float32), (0, cout_pad - cout))
    beta_p = jnp.pad(beta.astype(jnp.float32), (0, cout_pad - cout))
    scale = gamma_p * inv_std
    shift = beta_p - mean * scale
    scale8 = jnp.broadcast_to(scale[None, :], (8, cout_pad))
    shift8 = jnp.broadcast_to(shift[None, :], (8, cout_pad))

    # ---- pass 2: memory-bound BN-affine + Mish apply -------------------------
    # Large lane-dense blocks: full Cout width, up to 8 merged pass-1 row tiles.
    tm2 = tm
    for mult in (8, 4, 2):
        cand = tm * mult
        if m_pad % cand == 0 and cand * cout_pad <= _TM2_MAX_ELEMS:
            tm2 = cand
            break

    out_flat = pl.pallas_call(
        _bn_mish_kernel,
        out_shape=jax.ShapeDtypeStruct((m_pad, cout_pad), jnp.bfloat16),
        grid=(m_pad // tm2,),
        in_specs=[
            pl.BlockSpec((tm2, cout_pad), lambda m: (m, 0)),
            pl.BlockSpec((8, cout_pad), lambda m: (0, 0)),
            pl.BlockSpec((8, cout_pad), lambda m: (0, 0)),
        ],
        out_specs=pl.BlockSpec((tm2, cout_pad), lambda m: (m, 0)),
        compiler_params=pltpu.CompilerParams(
            dimension_semantics=("parallel",),
            vmem_limit_bytes=_VMEM_LIMIT),
        cost_estimate=pl.CostEstimate(
            flops=8 * m_pad * cout_pad,
            transcendentals=2 * m_pad * cout_pad,
            bytes_accessed=4 * m_pad * cout_pad + 64 * cout_pad),
    )(conv_bf16, scale8, shift8)

    return out_flat[:m_true, :cout].reshape(n, ho, wo, cout)


# ---------------------------------------------------------------------------
# Parameter construction (mirrors the PyTorch module structure)
# ---------------------------------------------------------------------------
def init_conv(key, cin, cout, ksize, stride=1):
    kw, kg, kb = jax.random.split(key, 3)
    fan_in = cin * ksize * ksize
    w = jax.random.normal(kw, (cout, cin, ksize, ksize), jnp.float32) / jnp.sqrt(float(fan_in))
    g = 1.0 + 0.1 * jax.random.normal(kg, (cout,), jnp.float32)
    b = 0.1 * jax.random.normal(kb, (cout,), jnp.float32)
    return {"w": w, "g": g, "b": b, "ksize": ksize, "stride": stride}


def init_csp_block(key, cin, cout, hidden=None):
    hidden = cout if hidden is None else hidden
    k1, k2 = jax.random.split(key)
    return {"c1": init_conv(k1, cin, hidden, 1), "c2": init_conv(k2, hidden, cout, 3)}


def init_csp_first_stage(key, cin, cout):
    ks = jax.random.split(key, 6)
    return {"type": "first",
            "down": init_conv(ks[0], cin, cout, 3, 2),
            "split0": init_conv(ks[1], cout, cout, 1),
            "split1": init_conv(ks[2], cout, cout, 1),
            "block": init_csp_block(ks[3], cout, cout, hidden=cin),
            "block_out": init_conv(ks[4], cout, cout, 1),
            "concat": init_conv(ks[5], 2 * cout, cout, 1)}


def init_csp_stage(key, cin, cout, num_blocks):
    ks = jax.random.split(key, 5 + num_blocks)
    return {"type": "stage",
            "down": init_conv(ks[0], cin, cout, 3, 2),
            "split0": init_conv(ks[1], cout, cout // 2, 1),
            "split1": init_conv(ks[2], cout, cout // 2, 1),
            "blocks": [init_csp_block(ks[3 + i], cout // 2, cout // 2)
                       for i in range(num_blocks)],
            "blocks_out": init_conv(ks[3 + num_blocks], cout // 2, cout // 2, 1),
            "concat": init_conv(ks[4 + num_blocks], cout, cout, 1)}


def init_cspdarknet53(key, stem_channels=32, feature_channels=(16, 32, 64, 128, 256)):
    ks = jax.random.split(key, 6)
    stages = [
        init_csp_first_stage(ks[1], stem_channels, feature_channels[0]),
        init_csp_stage(ks[2], feature_channels[0], feature_channels[1], 2),
        init_csp_stage(ks[3], feature_channels[1], feature_channels[2], 8),
        init_csp_stage(ks[4], feature_channels[2], feature_channels[3], 8),
        init_csp_stage(ks[5], feature_channels[3], feature_channels[4], 4),
    ]
    return {"stem": init_conv(ks[0], 3, stem_channels, 3), "stages": stages}


# ---------------------------------------------------------------------------
# Forward pass (NHWC bf16 internally, Pallas fused Conv everywhere)
# ---------------------------------------------------------------------------
def conv_fwd(x, p):
    return conv_bn_mish_nhwc(x, p["w"], p["g"], p["b"],
                             kernel_size=p["ksize"], stride=p["stride"])


def fused_split_fwd(x, p0, p1):
    """split_conv0 + split_conv1 share the same input and are both 1x1 convs:
    run them as one GEMM over the concatenated Cout, then slice the halves."""
    w = jnp.concatenate([p0["w"], p1["w"]], axis=0)
    g = jnp.concatenate([p0["g"], p1["g"]], axis=0)
    b = jnp.concatenate([p0["b"], p1["b"]], axis=0)
    y = conv_bn_mish_nhwc(x, w, g, b, kernel_size=1, stride=1)
    c0 = p0["w"].shape[0]
    return y[..., :c0], y[..., c0:]


def csp_block_fwd(x, p):
    # residual_activation='linear'
    # TODO(synk): fuse this residual add into the pass-2 BN/Mish kernel.
    return x + conv_fwd(conv_fwd(x, p["c1"]), p["c2"])


def csp_first_stage_fwd(x, p):
    x = conv_fwd(x, p["down"])
    x0, x1 = fused_split_fwd(x, p["split0"], p["split1"])
    x1 = csp_block_fwd(x1, p["block"])
    x1 = conv_fwd(x1, p["block_out"])
    # TODO(synk): feed x0/x1 as two K segments of the concat 1x1 conv instead of
    #             materializing the concatenated activation.
    return conv_fwd(jnp.concatenate([x0, x1], axis=-1), p["concat"])


def csp_stage_fwd(x, p):
    x = conv_fwd(x, p["down"])
    x0, x1 = fused_split_fwd(x, p["split0"], p["split1"])
    for bp in p["blocks"]:
        x1 = csp_block_fwd(x1, bp)
    x1 = conv_fwd(x1, p["blocks_out"])
    return conv_fwd(jnp.concatenate([x0, x1], axis=-1), p["concat"])


def cspdarknet53_fwd(x_nchw, params, num_features=1):
    x = jnp.transpose(x_nchw, (0, 2, 3, 1)).astype(jnp.bfloat16)   # NCHW->NHWC once
    x = conv_fwd(x, params["stem"])
    feats = []
    for sp in params["stages"]:
        x = csp_first_stage_fwd(x, sp) if sp["type"] == "first" else csp_stage_fwd(x, sp)
        feats.append(x)
    feats = [jnp.transpose(f, (0, 3, 1, 2)).astype(jnp.float32) for f in feats]
    return feats[-num_features:]


# ---------------------------------------------------------------------------
# Pure-JAX reference for a single fused Conv layer (validation only).
# Mirrors the kernel's numerics: bf16 operands, f32 conv accumulation and BN
# statistics, bf16 conv intermediate, bf16 output.
# ---------------------------------------------------------------------------
def _ref_conv(x, p):
    k, s = p["ksize"], p["stride"]
    pad = k // 2
    w = jnp.transpose(p["w"], (2, 3, 1, 0)).astype(jnp.bfloat16)   # HWIO
    conv = lax.conv_general_dilated(
        x.astype(jnp.bfloat16), w, (s, s), ((pad, pad), (pad, pad)),
        dimension_numbers=("NHWC", "HWIO", "NHWC"),
        preferred_element_type=jnp.float32)
    mean = jnp.mean(conv, axis=(0, 1, 2))
    var = jnp.maximum(jnp.mean(conv * conv, axis=(0, 1, 2)) - mean * mean, 0.0)
    scale = p["g"] * lax.rsqrt(var + BN_EPS)
    shift = p["b"] - mean * scale
    y = conv.astype(jnp.bfloat16).astype(jnp.float32) * scale + shift
    return (y * jnp.tanh(jnp.logaddexp(y, 0.0))).astype(jnp.bfloat16)


# ---------------------------------------------------------------------------
if __name__ == "__main__":
    root = jax.random.PRNGKey(0)
    keys = jax.random.split(root, 8)

    def _assert_close(got, ref, tag, tol=4e-2):
        got = jnp.asarray(got, jnp.float32)
        ref = jnp.asarray(ref, jnp.float32)
        assert got.shape == ref.shape, (tag, got.shape, ref.shape)
        err = float(jnp.max(jnp.abs(got - ref)))
        bound = tol * (1.0 + float(jnp.max(jnp.abs(ref))))
        assert err < bound, (tag, err, bound)

    # -- 1. fused Conv kernel vs pure-JAX reference on representative layers --
    def _check_conv(key, shape, cin, cout, ksize, stride, tag):
        kx, kp = jax.random.split(key)
        x = jax.random.normal(kx, shape, jnp.float32)
        p = init_conv(kp, cin, cout, ksize, stride)
        _assert_close(conv_fwd(x, p), _ref_conv(x, p), tag)

    _check_conv(keys[1], (2, 32, 32, 3), 3, 32, 3, 1, "stem 3x3")
    _check_conv(keys[2], (2, 32, 32, 32), 32, 16, 3, 2, "down 3x3 s2")
    _check_conv(keys[3], (2, 16, 16, 16), 16, 32, 1, 1, "pointwise 1x1")
    _check_conv(keys[4], (2, 32, 32, 64), 64, 256, 1, 1, "wide 1x1 (TN=256)")

    # -- 2. fused split0+split1 (single GEMM over concatenated Cout) ----------
    kx, k0, k1 = jax.random.split(keys[5], 3)
    xs = jax.random.normal(kx, (2, 16, 16, 32), jnp.float32)
    p0 = init_conv(k0, 32, 16, 1)
    p1 = init_conv(k1, 32, 16, 1)
    y0, y1 = fused_split_fwd(xs, p0, p1)
    _assert_close(y0, _ref_conv(xs, p0), "fused split 0")
    _assert_close(y1, _ref_conv(xs, p1), "fused split 1")

    # NOTE: composite CSP stages are intentionally not compared element-wise
    # against a reference: training-mode BatchNorm divides by the per-channel
    # batch std, so bf16 / accumulation-order noise is re-amplified at every
    # layer and exact agreement between two numerically different conv
    # implementations is not meaningful after several stacked BN layers.

    # -- 3. full CSPDarknet53 forward (default architecture, small input) -----
    params = init_cspdarknet53(keys[6])
    x = jax.random.normal(keys[7], (2, 3, 64, 64), jnp.float32)    # NCHW like PyTorch
    feats = cspdarknet53_fwd(x, params, num_features=1)
    feats = jax.block_until_ready(feats)
    assert len(feats) == 1
    assert feats[0].shape == (2, 256, 2, 2), feats[0].shape
    assert feats[0].dtype == jnp.float32
    assert bool(jnp.all(jnp.isfinite(feats[0])))

    print("KERNEL_OK")
</pallas_src>

<mosaic_0001>
module attributes {stable_mosaic.version = 11 : i64} {
  func.func @_conv_stats_kernel(%arg0: i32, %arg1: i32, %arg2: i32, %arg3: memref<512x128xbf16, #tpu.memory_space<vmem>>, %arg4: memref<128x128xbf16, #tpu.memory_space<vmem>>, %arg5: memref<512x128xbf16, #tpu.memory_space<vmem>>, %arg6: memref<8x128xf32, #tpu.memory_space<vmem>>, %arg7: memref<512x128xf32, #tpu.memory_space<vmem>>) attributes {dimension_semantics = [#tpu.dimension_semantics<parallel>, #tpu.dimension_semantics<parallel>, #tpu.dimension_semantics<arbitrary>], iteration_bounds = array<i64: 4, 1, 1>, scalar_prefetch = 0 : i64, scratch_operands = 1 : i64, tpu.core_type = #tpu.core_type<tc>, window_params = [{transform_indices = @transform_0, window_bounds = array<i64: 512, 128>}, {transform_indices = @transform_1, window_bounds = array<i64: 128, 128>}, {transform_indices = @transform_2, window_bounds = array<i64: 512, 128>}, {transform_indices = @transform_3, window_bounds = array<i64: 8, 128>}]} {
    %c0_i32 = arith.constant 0 : i32
    %0 = arith.cmpi eq, %arg2, %c0_i32 : i32
    %1 = arith.extui %0 : i1 to i32
    %c0_i32_0 = arith.constant 0 : i32
    %2 = arith.cmpi ne, %1, %c0_i32_0 : i32
    scf.if %2 {
      %cst_10 = arith.constant 0.000000e+00 : f32
      %12 = vector.broadcast %cst_10 : f32 to vector<512x128xf32>
      %c0_11 = arith.constant 0 : index
      %c0_12 = arith.constant 0 : index
      %13 = vector.load %arg7[%c0_11, %c0_12] : memref<512x128xf32, #tpu.memory_space<vmem>>, vector<512x128xf32>
      tpu.vector_store %arg7[%c0_11, %c0_12], %12 {strides = array<i32>} : memref<512x128xf32, #tpu.memory_space<vmem>>, vector<512x128xf32>,
    } else {
    }
    %c0 = arith.constant 0 : index
    %c0_1 = arith.constant 0 : index
    %3 = vector.load %arg7[%c0, %c0_1] : memref<512x128xf32, #tpu.memory_space<vmem>>, vector<512x128xf32>
    %c0_2 = arith.constant 0 : index
    %c0_3 = arith.constant 0 : index
    %4 = vector.load %arg3[%c0_2, %c0_3] : memref<512x128xbf16, #tpu.memory_space<vmem>>, vector<512x128xbf16>
    %c0_4 = arith.constant 0 : index
    %c0_5 = arith.constant 0 : index
    %5 = vector.load %arg4[%c0_4, %c0_5] : memref<128x128xbf16, #tpu.memory_space<vmem>>, vector<128x128xbf16>
    %cst = arith.constant dense<0.000000e+00> : vector<512x128xf32>
    %6 = tpu.matmul %4, %5, %cst {dimension_numbers = #tpu.dot_dimension_numbers<[1], [0], [0], [1], [0, 0, 1, 1], [], []>} : vector<512x128xbf16>, vector<128x128xbf16>, vector<512x128xf32> -> vector<512x128xf32>
    %7 = arith.addf %3, %6 : vector<512x128xf32>
    %c0_6 = arith.constant 0 : index
    %c0_7 = arith.constant 0 : index
    %8 = vector.load %arg7[%c0_6, %c0_7] : memref<512x128xf32, #tpu.memory_space<vmem>>, vector<512x128xf32>
    tpu.vector_store %arg7[%c0_6, %c0_7], %7 {strides = array<i32>} : memref<512x128xf32, #tpu.memory_space<vmem>>, vector<512x128xf32>,
    %c0_i32_8 = arith.constant 0 : i32
    %9 = arith.cmpi eq, %arg2, %c0_i32_8 : i32
    %10 = arith.extui %9 : i1 to i32
    %c0_i32_9 = arith.constant 0 : i32
    %11 = arith.cmpi ne, %10, %c0_i32_9 : i32
    scf.if %11 {
      %c0_10 = arith.constant 0 : index
      %c0_11 = arith.constant 0 : index
      %12 = vector.load %arg7[%c0_10, %c0_11] : memref<512x128xf32, #tpu.memory_space<vmem>>, vector<512x128xf32>
      %13 = arith.truncf %12 : vector<512x128xf32> to vector<512x128xbf16>
      %c0_12 = arith.constant 0 : index
      %c0_13 = arith.constant 0 : index
      %14 = vector.load %arg5[%c0_12, %c0_13] : memref<512x128xbf16, #tpu.memory_space<vmem>>, vector<512x128xbf16>
      tpu.vector_store %arg5[%c0_12, %c0_13], %13 {strides = array<i32>} : memref<512x128xbf16, #tpu.memory_space<vmem>>, vector<512x128xbf16>,
      %cst_14 = arith.constant dense<0.000000e+00> : vector<128xf32>
      %15 = vector.multi_reduction <add>, %12, %cst_14 [0] : vector<512x128xf32> to vector<128xf32>
      %16 = vector.shape_cast %15 : vector<128xf32> to vector<1x128xf32>
      %c0_15 = arith.constant 0 : index
      %c0_16 = arith.constant 0 : index
      %17 = vector.load %arg6[%c0_15, %c0_16] : memref<8x128xf32, #tpu.memory_space<vmem>>, vector<1x128xf32>
      tpu.vector_store %arg6[%c0_15, %c0_16], %16 {strides = array<i32>} : memref<8x128xf32, #tpu.memory_space<vmem>>, vector<1x128xf32>,
      %18 = arith.mulf %12, %12 : vector<512x128xf32>
      %cst_17 = arith.constant dense<0.000000e+00> : vector<128xf32>
      %19 = vector.multi_reduction <add>, %18, %cst_17 [0] : vector<512x128xf32> to vector<128xf32>
      %20 = vector.shape_cast %19 : vector<128xf32> to vector<1x128xf32>
      %c1 = arith.constant 1 : index
      %c0_18 = arith.constant 0 : index
      %21 = vector.load %arg6[%c1, %c0_18] : memref<8x128xf32, #tpu.memory_space<vmem>>, vector<1x128xf32>
      tpu.vector_store %arg6[%c1, %c0_18], %20 {strides = array<i32>} : memref<8x128xf32, #tpu.memory_space<vmem>>, vector<1x128xf32>,
    } else {
    }
    return
  }
  func.func @transform_0(%arg0: i32, %arg1: i32, %arg2: i32) -> (i32, i32) {
    %c0_i32 = arith.constant 0 : i32
    return %arg0, %arg2 : i32, i32
  }
  func.func @transform_1(%arg0: i32, %arg1: i32, %arg2: i32) -> (i32, i32) {
    %c0_i32 = arith.constant 0 : i32
    return %arg2, %arg1 : i32, i32
  }
  func.func @transform_2(%arg0: i32, %arg1: i32, %arg2: i32) -> (i32, i32) {
    %c0_i32 = arith.constant 0 : i32
    return %arg0, %arg1 : i32, i32
  }
  func.func @transform_3(%arg0: i32, %arg1: i32, %arg2: i32) -> (i32, i32) {
    %c0_i32 = arith.constant 0 : i32
    return %arg0, %arg1 : i32, i32
  }
}

module attributes {stable_mosaic.version = 11 : i64} {
  func.func @_bn_mish_kernel(%arg0: i32, %arg1: memref<2048x128xbf16, #tpu.memory_space<vmem>>, %arg2: memref<8x128xf32, #tpu.memory_space<vmem>>, %arg3: memref<8x128xf32, #tpu.memory_space<vmem>>, %arg4: memref<2048x128xbf16, #tpu.memory_space<vmem>>) attributes {dimension_semantics = [#tpu.dimension_semantics<parallel>], iteration_bounds = array<i64: 1>, scalar_prefetch = 0 : i64, scratch_operands = 0 : i64, tpu.core_type = #tpu.core_type<tc>, window_params = [{transform_indices = @transform_0, window_bounds = array<i64: 2048, 128>}, {pipeline_mode = #tpu.pipeline_mode<synchronous>, transform_indices = @transform_1, window_bounds = array<i64: 8, 128>}, {pipeline_mode = #tpu.pipeline_mode<synchronous>, transform_indices = @transform_2, window_bounds = array<i64: 8, 128>}, {transform_indices = @transform_3, window_bounds = array<i64: 2048, 128>}]} {
    %c0 = arith.constant 0 : index
    %c0_0 = arith.constant 0 : index
    %0 = vector.load %arg1[%c0, %c0_0] : memref<2048x128xbf16, #tpu.memory_space<vmem>>, vector<2048x128xbf16>
    %1 = arith.extf %0 : vector<2048x128xbf16> to vector<2048x128xf32>
    %c0_1 = arith.constant 0 : index
    %c0_2 = arith.constant 0 : index
    %2 = vector.load %arg2[%c0_1, %c0_2] : memref<8x128xf32, #tpu.memory_space<vmem>>, vector<1x128xf32>
    %3 = vector.broadcast %2 : vector<1x128xf32> to vector<2048x128xf32>
    %4 = arith.mulf %1, %3 : vector<2048x128xf32>
    %c0_3 = arith.constant 0 : index
    %c0_4 = arith.constant 0 : index
    %5 = vector.load %arg3[%c0_3, %c0_4] : memref<8x128xf32, #tpu.memory_space<vmem>>, vector<1x128xf32>
    %6 = vector.broadcast %5 : vector<1x128xf32> to vector<2048x128xf32>
    %7 = arith.addf %4, %6 : vector<2048x128xf32>
    %cst = arith.constant 2.000000e+01 : f32
    %8 = vector.broadcast %cst : f32 to vector<2048x128xf32>
    %9 = arith.minimumf %7, %8 : vector<2048x128xf32>
    %10 = math.exp %9 : vector<2048x128xf32>
    %cst_5 = arith.constant 1.000000e+00 : f32
    %11 = vector.broadcast %cst_5 : f32 to vector<2048x128xf32>
    %12 = arith.addf %11, %10 : vector<2048x128xf32>
    %13 = arith.mulf %12, %12 : vector<2048x128xf32>
    %cst_6 = arith.constant 1.000000e+00 : f32
    %14 = vector.broadcast %cst_6 : f32 to vector<2048x128xf32>
    %15 = arith.subf %13, %14 : vector<2048x128xf32>
    %16 = arith.mulf %7, %15 : vector<2048x128xf32>
    %cst_7 = arith.constant 1.000000e+00 : f32
    %17 = vector.broadcast %cst_7 : f32 to vector<2048x128xf32>
    %18 = arith.addf %13, %17 : vector<2048x128xf32>
    %19 = arith.divf %16, %18 : vector<2048x128xf32>
    %20 = arith.truncf %19 : vector<2048x128xf32> to vector<2048x128xbf16>
    %c0_8 = arith.constant 0 : index
    %c0_9 = arith.constant 0 : index
    %21 = vector.load %arg4[%c0_8, %c0_9] : memref<2048x128xbf16, #tpu.memory_space<vmem>>, vector<2048x128xbf16>
    tpu.vector_store %arg4[%c0_8, %c0_9], %20 {strides = array<i32>} : memref<2048x128xbf16, #tpu.memory_space<vmem>>, vector<2048x128xbf16>,
    return
  }
  func.func @transform_0(%arg0: i32) -> (i32, i32) {
    %c0_i32 = arith.constant 0 : i32
    %c0_i32_0 = arith.constant 0 : i32
    return %arg0, %c0_i32 : i32, i32
  }
  func.func @transform_1(%arg0: i32) -> (i32, i32) {
    %c0_i32 = arith.constant 0 : i32
    %c0_i32_0 = arith.constant 0 : i32
    %c0_i32_1 = arith.constant 0 : i32
    return %c0_i32, %c0_i32_0 : i32, i32
  }
  func.func @transform_2(%arg0: i32) -> (i32, i32) {
    %c0_i32 = arith.constant 0 : i32
    %c0_i32_0 = arith.constant 0 : i32
    %c0_i32_1 = arith.constant 0 : i32
    return %c0_i32, %c0_i32_0 : i32, i32
  }
  func.func @transform_3(%arg0: i32) -> (i32, i32) {
    %c0_i32 = arith.constant 0 : i32
    %c0_i32_0 = arith.constant 0 : i32
    return %arg0, %c0_i32 : i32, i32
  }
}

</mosaic_0001>

<llo_original>
// kernel: conv_bn_mish_nhwc.2
$region0: #{conv_bn_mish_nhwc.2}
  #allocation0 [shape = 'u32[]', space=smem, size = 0x4, offset = 0x4, fixed_abs, tag = 'smem constant byte address 0x4 - core index']
  #allocation1 [shape = 'u32[144,128]{1,0:T(1,128)}', space=vmem, size = 0x12000, scoped, tag = 'internal scratch']
  #allocation2 [shape = 'f32[512,128]{1,0:T(8,128)}', space=vmem, size = 0x40000, scoped, tag = 'scratch operand']
  %s0 = inlined_call_operand.vmem [shape: bf16[2048,128], index: 0, kind: input, shape index: {}]
  %s1 = inlined_call_operand.vmem [shape: bf16[128,128], index: 1, kind: input, shape index: {}]
  %s2 = inlined_call_operand.vmem [shape: bf16[2048,128], index: 2, kind: output, shape index: {0}]
  %s3 = inlined_call_operand.vmem [shape: f32[32,128], index: 3, kind: output, shape index: {1}]
  %4 = xla_tuple %s2, %s3
  %s5 = sld [smem:[#allocation0]]
  $region57: #{conv_bn_mish_nhwc.2} parent=0
    _
  %s7 = ssub.s32 1, %s5
  %s8 = scalar_select 0, %s7, %s5
  loop: start=0, step=1, limit=6
  $region2: #{conv_bn_mish_nhwc.2} parent=0 // loop_pre_header
    _
  $region3: #{conv_bn_mish_nhwc.2} parent=0 // loop_header
    %s10 = sphi 0, %s14
    %p11 = scmp.ge.s32.totalorder %s10, 6
    %s17 = sphi 0, %s36
    %s18 = sphi 0, %s32
    %s19 = sphi 0, %s28
    %s20 = sphi 0, %s17
    %s21 = sphi 0, %s18
    %s22 = sphi 0, %s19
    %s23 = sphi 0, %s20
    %s24 = sphi 0, %s21
    %s25 = sphi 0, %s22
    %s41 = sphi 0, %s43
    %s44 = sphi 0, %s41
    %s45 = sphi 0, %s44
    %s61 = sphi 0, %s45
    %s69 = sphi 0, %s71
    %s72 = sphi 0, %s69
    %s73 = sphi 0, %s72
    %s89 = sphi 0, %s73
    %s97 = sphi 0, %s99
    %s100 = sphi 0, %s97
    %s101 = sphi 0, %s100
    %s117 = sphi 0, %s101
    %s125 = sphi 0, %s127
    %s128 = sphi 0, %s125
    %s129 = sphi 0, %s128
    %s145 = sphi 0, %s129
  $region4: #{conv_bn_mish_nhwc.2} parent=0 // loop_header_branch
    %13 = sbr.rel (%p11) target = $region8
  $region5: #{conv_bn_mish_nhwc.2} parent=0 // loop_body
    %s15 = ssub.s32 %s10, 1
    %s16 = ssub.s32 %s10, 2
    %s26 = sadd.s32 1, %s19
    %p27 = scmp.ge.s32.totalorder %s26, 1
    %s28 = scalar_select %p27, 0, %s26
    %s29 = sadd.s32 1, %s18
    %s30 = scalar_select %p27, %s29, %s18
    %p31 = scmp.ge.s32.totalorder %s30, 1
    %s32 = scalar_select %p31, 0, %s30
    %s33 = sadd.s32 1, %s17
    %s34 = scalar_select %p31, %s33, %s17
    %p35 = scmp.ge.s32.totalorder %s34, 4
    %s36 = scalar_select %p35, 0, %s34
    %s37 = ssub.s32 %s17, %s36
    %s38 = ssub.s32 %s19, %s28
    %s39 = sor.u32 %s37, %s38
    %p40 = scmp.eq.s32.totalorder %s39, 0
    %s42 = sadd.s32 %s41, 1
    %s43 = scalar_select %p40, %s41, %s42
    %p46 = pneg %p40
    %p47 = scmp.eq.s32.totalorder %s10, 3
    %p48 = por %p46, %p47
    %p49 = scmp.ne.s32.totalorder %s41, %s44
    %p50 = scmp.eq.s32.totalorder %s10, 0
    %p51 = por %p49, %p50
    %p52 = scmp.ne.s32.totalorder %s41, %s44
    %p53 = scmp.eq.s32.totalorder %s15, 3
    %p54 = por %p52, %p53
    %p55 = scmp.ne.s32.totalorder %s44, %s45
    %p56 = scmp.eq.s32.totalorder %s15, 0
    %p57 = por %p55, %p56
    %p58 = scmp.ne.s32.totalorder %s44, %s45
    %p59 = scmp.eq.s32.totalorder %s16, 3
    %p60 = por %p58, %p59
    %p62 = scmp.ne.s32.totalorder %s45, %s61
    %p63 = scmp.eq.s32.totalorder %s16, 0
    %p64 = por %p62, %p63
    %s65 = ssub.s32 %s19, %s28
    %s66 = ssub.s32 %s18, %s32
    %s67 = sor.u32 %s65, %s66
    %p68 = scmp.eq.s32.totalorder %s67, 0
    %s70 = sadd.s32 %s69, 1
    %s71 = scalar_select %p68, %s69, %s70
    %p74 = pneg %p68
    %p75 = scmp.eq.s32.totalorder %s10, 3
    %p76 = por %p74, %p75
    %p77 = scmp.ne.s32.totalorder %s69, %s72
    %p78 = scmp.eq.s32.totalorder %s10, 0
    %p79 = por %p77, %p78
    %p80 = scmp.ne.s32.totalorder %s69, %s72
    %p81 = scmp.eq.s32.totalorder %s15, 3
    %p82 = por %p80, %p81
    %p83 = scmp.ne.s32.totalorder %s72, %s73
    %p84 = scmp.eq.s32.totalorder %s15, 0
    %p85 = por %p83, %p84
    %p86 = scmp.ne.s32.totalorder %s72, %s73
    %p87 = scmp.eq.s32.totalorder %s16, 3
    %p88 = por %p86, %p87
    %p90 = scmp.ne.s32.totalorder %s73, %s89
    %p91 = scmp.eq.s32.totalorder %s16, 0
    %p92 = por %p90, %p91
    %s93 = ssub.s32 %s17, %s36
    %s94 = ssub.s32 %s18, %s32
    %s95 = sor.u32 %s93, %s94
    %p96 = scmp.eq.s32.totalorder %s95, 0
    %s98 = sadd.s32 %s97, 1
    %s99 = scalar_select %p96, %s97, %s98
    %p102 = pneg %p96
    %p103 = scmp.eq.s32.totalorder %s10, 3
    %p104 = por %p102, %p103
    %p105 = scmp.ne.s32.totalorder %s97, %s100
    %p106 = scmp.eq.s32.totalorder %s10, 0
    %p107 = por %p105, %p106
    %p108 = scmp.ne.s32.totalorder %s97, %s100
    %p109 = scmp.eq.s32.totalorder %s15, 3
    %p110 = por %p108, %p109
    %p111 = scmp.ne.s32.totalorder %s100, %s101
    %p112 = scmp.eq.s32.totalorder %s15, 0
    %p113 = por %p111, %p112
    %p114 = scmp.ne.s32.totalorder %s100, %s101
    %p115 = scmp.eq.s32.totalorder %s16, 3
    %p116 = por %p114, %p115
    %p118 = scmp.ne.s32.totalorder %s101, %s117
    %p119 = scmp.eq.s32.totalorder %s16, 0
    %p120 = por %p118, %p119
    %s121 = ssub.s32 %s17, %s36
    %s122 = ssub.s32 %s18, %s32
    %s123 = sor.u32 %s121, %s122
    %p124 = scmp.eq.s32.totalorder %s123, 0
    %s126 = sadd.s32 %s125, 1
    %s127 = scalar_select %p124, %s125, %s126
    %p130 = pneg %p124
    %p131 = scmp.eq.s32.totalorder %s10, 3
    %p132 = por %p130, %p131
    %p133 = scmp.ne.s32.totalorder %s125, %s128
    %p134 = scmp.eq.s32.totalorder %s10, 0
    %p135 = por %p133, %p134
    %p136 = scmp.ne.s32.totalorder %s125, %s128
    %p137 = scmp.eq.s32.totalorder %s15, 3
    %p138 = por %p136, %p137
    %p139 = scmp.ne.s32.totalorder %s128, %s129
    %p140 = scmp.eq.s32.totalorder %s15, 0
    %p141 = por %p139, %p140
    %p142 = scmp.ne.s32.totalorder %s128, %s129
    %p143 = scmp.eq.s32.totalorder %s16, 3
    %p144 = por %p142, %p143
    %p146 = scmp.ne.s32.totalorder %s129, %s145
    %p147 = scmp.eq.s32.totalorder %s16, 0
    %p148 = por %p146, %p147
    %p149 = scmp.le.s32.totalorder 1, %s10
    %p150 = scmp.lt.s32.totalorder %s10, 5
    %p151 = pnand %p149, %p150
    %p152 = pneg %p151
    // Predicated region
    $region9: #{conv_bn_mish_nhwc.2} parent=5 // pred_check
      _
    $region10: #{conv_bn_mish_nhwc.2} parent=5 // pred_check_branch
      %154 = sbr.rel (%p151) target = $region12
    $region11: #{conv_bn_mish_nhwc.2} parent=5 // pred_region
      %s155 = ssub.s32 %s10, 1
      // Predicated region
      $region13: #{conv_bn_mish_nhwc.2} parent=11 // pred_check
        %p156 = pneg %p85
      $region14: #{conv_bn_mish_nhwc.2} parent=11 // pred_check_branch
        %158 = sbr.rel (%p156) target = $region16
      $region15: #{conv_bn_mish_nhwc.2} parent=11 // pred_region
        %s159 = smul.u32 16, %s22
        %p160 = scmp.lt.s32.totalorder %s159, 15
        %s161 = scalar_select %p160, %s159, 15
        %p162 = scmp.lt.s32.totalorder %s21, 0
        %s163 = scalar_select %p162, %s21, 0
        %s164 = sadd.s32 %s163, %s161
        %s165 = smul.addr %s164, 4
        %s166 = scalar_lea.vmem %s1, %s165
        %s167 = smul.u32 16, %s22
      $region16: #{conv_bn_mish_nhwc.2} parent=11 // pred_fallthru
        _
    $region12: #{conv_bn_mish_nhwc.2} parent=5 // pred_fallthru
      _
    %p168 = scmp.lt.s32.totalorder %s10, 4
    // Predicated region
    $region17: #{conv_bn_mish_nhwc.2} parent=5 // pred_check
      %p169 = pneg %p168
    $region18: #{conv_bn_mish_nhwc.2} parent=5 // pred_check_branch
      %171 = sbr.rel (%p169) target = $region20
    $region19: #{conv_bn_mish_nhwc.2} parent=5 // pred_region
      // Predicated region
      $region21: #{conv_bn_mish_nhwc.2} parent=19 // pred_check
        %p172 = pneg %p51
      $region22: #{conv_bn_mish_nhwc.2} parent=19 // pred_check_branch
        %174 = sbr.rel (%p172) target = $region24
      $region23: #{conv_bn_mish_nhwc.2} parent=19 // pred_region
        %s175 = smul.u32 64, %s17
        %p176 = scmp.lt.s32.totalorder %s175, 255
        %s177 = scalar_select %p176, %s175, 255
        %p178 = scmp.lt.s32.totalorder %s19, 0
        %s179 = scalar_select %p178, %s19, 0
        %s180 = sadd.s32 %s179, %s177
        %s181 = smul.addr %s180, 4
        %s182 = scalar_lea.vmem %s0, %s181
        %s183 = smul.u32 64, %s17
      $region24: #{conv_bn_mish_nhwc.2} parent=19 // pred_fallthru
        _
    $region20: #{conv_bn_mish_nhwc.2} parent=5 // pred_fallthru
      _
    %p184 = scmp.le.s32.totalorder 1, %s10
    %p185 = scmp.lt.s32.totalorder %s10, 5
    %p186 = pnand %p184, %p185
    %p187 = pneg %p186
    // Predicated region
    $region25: #{conv_bn_mish_nhwc.2} parent=5 // pred_check
      _
    $region26: #{conv_bn_mish_nhwc.2} parent=5 // pred_check_branch
      %189 = sbr.rel (%p186) target = $region28
    $region27: #{conv_bn_mish_nhwc.2} parent=5 // pred_region
      %s190 = ssub.s32 %s10, 1
      %s191 = smul.u32 64, %s20
      %p192 = scmp.lt.s32.totalorder %s191, 255
      %s193 = scalar_select %p192, %s191, 255
      %p194 = scmp.lt.s32.totalorder %s22, 0
      %s195 = scalar_select %p194, %s22, 0
      %s196 = sadd.s32 %s195, %s193
      %s197 = smul.addr %s196, 4
      %s198 = scalar_lea.vmem %s0, %s197
      %p199 = pneg %p57
      %p200 = pneg %p54
      %s201 = smul.u32 16, %s22
      %p202 = scmp.lt.s32.totalorder %s201, 15
      %s203 = scalar_select %p202, %s201, 15
      %p204 = scmp.lt.s32.totalorder %s21, 0
      %s205 = scalar_select %p204, %s21, 0
      %s206 = sadd.s32 %s205, %s203
      %s207 = smul.addr %s206, 4
      %s208 = scalar_lea.vmem %s1, %s207
      %p209 = pneg %p85
      %p210 = pneg %p82
      %p211 = pneg %p113
      %p212 = pneg %p110
      %s213 = smul.u32 64, %s20
      %p214 = scmp.lt.s32.totalorder %s213, 255
      %s215 = scalar_select %p214, %s213, 255
      %p216 = scmp.lt.s32.totalorder %s21, 0
      %s217 = scalar_select %p216, %s21, 0
      %s218 = sadd.s32 %s217, %s215
      %s219 = smul.addr %s218, 4
      %s220 = scalar_lea.vmem %s2, %s219
      %p221 = pneg %p141
      %p222 = pneg %p138
      %p223 = scmp.lt.s32.totalorder %s20, 3
      %s224 = scalar_select %p223, %s20, 3
      %p225 = scmp.lt.s32.totalorder %s21, 0
      %s226 = scalar_select %p225, %s21, 0
      %s227 = sadd.s32 %s226, %s224
      %s228 = smul.addr %s227, 8
      %s229 = scalar_lea.vmem %s3, %s228
      %s230 = smul.u32 64, %s20
      %p231 = scmp.lt.s32.totalorder %s230, 255
      %s232 = scalar_select %p231, %s230, 255
      %p233 = scmp.lt.s32.totalorder %s22, 0
      %s234 = scalar_select %p233, %s22, 0
      %s235 = sadd.s32 %s234, %s232
      %s236 = smul.addr %s235, 4
      %s237 = scalar_lea.vmem %s0, %s236
      %s238 = smul.u32 64, %s20
      %s239 = smul.u32 16, %s22
      %p240 = scmp.lt.s32.totalorder %s239, 15
      %s241 = scalar_select %p240, %s239, 15
      %p242 = scmp.lt.s32.totalorder %s21, 0
      %s243 = scalar_select %p242, %s21, 0
      %s244 = sadd.s32 %s243, %s241
      %s245 = smul.addr %s244, 4
      %s246 = scalar_lea.vmem %s1, %s245
      %s247 = smul.u32 16, %s22
      %s248 = smul.u32 64, %s20
      %p249 = scmp.lt.s32.totalorder %s248, 255
      %s250 = scalar_select %p249, %s248, 255
      %p251 = scmp.lt.s32.totalorder %s21, 0
      %s252 = scalar_select %p251, %s21, 0
      %s253 = sadd.s32 %s252, %s250
      %s254 = smul.addr %s253, 4
      %s255 = scalar_lea.vmem %s2, %s254
      %s256 = smul.u32 64, %s20
      %p257 = scmp.lt.s32.totalorder %s20, 3
      %s258 = scalar_select %p257, %s20, 3
      %p259 = scmp.lt.s32.totalorder %s21, 0
      %s260 = scalar_select %p259, %s21, 0
      %s261 = sadd.s32 %s260, %s258
      %s262 = smul.addr %s261, 8
      %s263 = scalar_lea.vmem %s3, %s262
      %p265 = scmp.eq.s32.totalorder %s22, 0
      // Predicated region
      $region29: #{conv_bn_mish_nhwc.2} parent=27 // pred_check
        %p266 = pneg %p265
      $region30: #{conv_bn_mish_nhwc.2} parent=27 // pred_check_branch
        %268 = sbr.rel (%p266) target = $region32
      $region31: #{conv_bn_mish_nhwc.2} parent=27 // pred_region
        %269 = vst [vmem:[#allocation2] sm:$0xff] 0.0
        %270 = vst [vmem:[#allocation2 + $0x8] sm:$0xff] 0.0
        %271 = vst [vmem:[#allocation2 + $0x10] sm:$0xff] 0.0
        %272 = vst [vmem:[#allocation2 + $0x18] sm:$0xff] 0.0
        %273 = vst [vmem:[#allocation2 + $0x20] sm:$0xff] 0.0
        %274 = vst [vmem:[#allocation2 + $0x28] sm:$0xff] 0.0
        %275 = vst [vmem:[#allocation2 + $0x30] sm:$0xff] 0.0
        %276 = vst [vmem:[#allocation2 + $0x38] sm:$0xff] 0.0
        %277 = vst [vmem:[#allocation2 + $0x40] sm:$0xff] 0.0
        %278 = vst [vmem:[#allocation2 + $0x48] sm:$0xff] 0.0
        %279 = vst [vmem:[#allocation2 + $0x50] sm:$0xff] 0.0
        %280 = vst [vmem:[#allocation2 + $0x58] sm:$0xff] 0.0
        %281 = vst [vmem:[#allocation2 + $0x60] sm:$0xff] 0.0
        %282 = vst [vmem:[#allocation2 + $0x68] sm:$0xff] 0.0
        %283 = vst [vmem:[#allocation2 + $0x70] sm:$0xff] 0.0
        %284 = vst [vmem:[#allocation2 + $0x78] sm:$0xff] 0.0
        %285 = vst [vmem:[#allocation2 + $0x80] sm:$0xff] 0.0
        %286 = vst [vmem:[#allocation2 + $0x88] sm:$0xff] 0.0
        %287 = vst [vmem:[#allocation2 + $0x90] sm:$0xff] 0.0
        %288 = vst [vmem:[#allocation2 + $0x98] sm:$0xff] 0.0
        %289 = vst [vmem:[#allocation2 + $0xa0] sm:$0xff] 0.0
        %290 = vst [vmem:[#allocation2 + $0xa8] sm:$0xff] 0.0
        %291 = vst [vmem:[#allocation2 + $0xb0] sm:$0xff] 0.0
        %292 = vst [vmem:[#allocation2 + $0xb8] sm:$0xff] 0.0
        %293 = vst [vmem:[#allocation2 + $0xc0] sm:$0xff] 0.0
        %294 = vst [vmem:[#allocation2 + $0xc8] sm:$0xff] 0.0
        %295 = vst [vmem:[#allocation2 + $0xd0] sm:$0xff] 0.0
        %296 = vst [vmem:[#allocation2 + $0xd8] sm:$0xff] 0.0
        %297 = vst [vmem:[#allocation2 + $0xe0] sm:$0xff] 0.0
        %298 = vst [vmem:[#allocation2 + $0xe8] sm:$0xff] 0.0
        %299 = vst [vmem:[#allocation2 + $0xf0] sm:$0xff] 0.0
        %300 = vst [vmem:[#allocation2 + $0xf8] sm:$0xff] 0.0
        %301 = vst [vmem:[#allocation2 + $0x100] sm:$0xff] 0.0
        %302 = vst [vmem:[#allocation2 + $0x108] sm:$0xff] 0.0
        %303 = vst [vmem:[#allocation2 + $0x110] sm:$0xff] 0.0
        %304 = vst [vmem:[#allocation2 + $0x118] sm:$0xff] 0.0
        %305 = vst [vmem:[#allocation2 + $0x120] sm:$0xff] 0.0
        %306 = vst [vmem:[#allocation2 + $0x128] sm:$0xff] 0.0
        %307 = vst [vmem:[#allocation2 + $0x130] sm:$0xff] 0.0
        %308 = vst [vmem:[#allocation2 + $0x138] sm:$0xff] 0.0
        %309 = vst [vmem:[#allocation2 + $0x140] sm:$0xff] 0.0
        %310 = vst [vmem:[#allocation2 + $0x148] sm:$0xff] 0.0
        %311 = vst [vmem:[#allocation2 + $0x150] sm:$0xff] 0.0
        %312 = vst [vmem:[#allocation2 + $0x158] sm:$0xff] 0.0
        %313 = vst [vmem:[#allocation2 + $0x160] sm:$0xff] 0.0
        %314 = vst [vmem:[#allocation2 + $0x168] sm:$0xff] 0.0
        %315 = vst [vmem:[#allocation2 + $0x170] sm:$0xff] 0.0
        %316 = vst [vmem:[#allocation2 + $0x178] sm:$0xff] 0.0
        %317 = vst [vmem:[#allocation2 + $0x180] sm:$0xff] 0.0
        %318 = vst [vmem:[#allocation2 + $0x188] sm:$0xff] 0.0
        %319 = vst [vmem:[#allocation2 + $0x190] sm:$0xff] 0.0
        %320 = vst [vmem:[#allocation2 + $0x198] sm:$0xff] 0.0
        %321 = vst [vmem:[#allocation2 + $0x1a0] sm:$0xff] 0.0
        %322 = vst [vmem:[#allocation2 + $0x1a8] sm:$0xff] 0.0
        %323 = vst [vmem:[#allocation2 + $0x1b0] sm:$0xff] 0.0
        %324 = vst [vmem:[#allocation2 + $0x1b8] sm:$0xff] 0.0
        %325 = vst [vmem:[#allocation2 + $0x1c0] sm:$0xff] 0.0
        %326 = vst [vmem:[#allocation2 + $0x1c8] sm:$0xff] 0.0
        %327 = vst [vmem:[#allocation2 + $0x1d0] sm:$0xff] 0.0
        %328 = vst [vmem:[#allocation2 + $0x1d8] sm:$0xff] 0.0
        %329 = vst [vmem:[#allocation2 + $0x1e0] sm:$0xff] 0.0
        %330 = vst [vmem:[#allocation2 + $0x1e8] sm:$0xff] 0.0
        %331 = vst [vmem:[#allocation2 + $0x1f0] sm:$0xff] 0.0
        %332 = vst [vmem:[#allocation2 + $0x1f8] sm:$0xff] 0.0
      $region32: #{conv_bn_mish_nhwc.2} parent=27 // pred_fallthru
        _
      %v333 = vld [vmem:[#allocation2] sm:$0xff]
      %v334 = vld [vmem:[#allocation2 + $0x8] sm:$0xff]
      %v335 = vld [vmem:[#allocation2 + $0x10] sm:$0xff]
      %v336 = vld [vmem:[#allocation2 + $0x18] sm:$0xff]
      %v337 = vld [vmem:[#allocation2 + $0x20] sm:$0xff]
      %v338 = vld [vmem:[#allocation2 + $0x28] sm:$0xff]
      %v339 = vld [vmem:[#allocation2 + $0x30] sm:$0xff]
      %v340 = vld [vmem:[#allocation2 + $0x38] sm:$0xff]
      %v341 = vld [vmem:[#allocation2 + $0x40] sm:$0xff]
      %v342 = vld [vmem:[#allocation2 + $0x48] sm:$0xff]
      %v343 = vld [vmem:[#allocation2 + $0x50] sm:$0xff]
      %v344 = vld [vmem:[#allocation2 + $0x58] sm:$0xff]
      %v345 = vld [vmem:[#allocation2 + $0x60] sm:$0xff]
      %v346 = vld [vmem:[#allocation2 + $0x68] sm:$0xff]
      %v347 = vld [vmem:[#allocation2 + $0x70] sm:$0xff]
      %v348 = vld [vmem:[#allocation2 + $0x78] sm:$0xff]
      %v349 = vld [vmem:[#allocation2 + $0x80] sm:$0xff]
      %v350 = vld [vmem:[#allocation2 + $0x88] sm:$0xff]
      %v351 = vld [vmem:[#allocation2 + $0x90] sm:$0xff]
      %v352 = vld [vmem:[#allocation2 + $0x98] sm:$0xff]
      %v353 = vld [vmem:[#allocation2 + $0xa0] sm:$0xff]
      %v354 = vld [vmem:[#allocation2 + $0xa8] sm:$0xff]
      %v355 = vld [vmem:[#allocation2 + $0xb0] sm:$0xff]
      %v356 = vld [vmem:[#allocation2 + $0xb8] sm:$0xff]
      %v357 = vld [vmem:[#allocation2 + $0xc0] sm:$0xff]
      %v358 = vld [vmem:[#allocation2 + $0xc8] sm:$0xff]
      %v359 = vld [vmem:[#allocation2 + $0xd0] sm:$0xff]
      %v360 = vld [vmem:[#allocation2 + $0xd8] sm:$0xff]
      %v361 = vld [vmem:[#allocation2 + $0xe0] sm:$0xff]
      %v362 = vld [vmem:[#allocation2 + $0xe8] sm:$0xff]
      %v363 = vld [vmem:[#allocation2 + $0xf0] sm:$0xff]
      %v364 = vld [vmem:[#allocation2 + $0xf8] sm:$0xff]
      %v365 = vld [vmem:[#allocation2 + $0x100] sm:$0xff]
      %v366 = vld [vmem:[#allocation2 + $0x108] sm:$0xff]
      %v367 = vld [vmem:[#allocation2 + $0x110] sm:$0xff]
      %v368 = vld [vmem:[#allocation2 + $0x118] sm:$0xff]
      %v369 = vld [vmem:[#allocation2 + $0x120] sm:$0xff]
      %v370 = vld [vmem:[#allocation2 + $0x128] sm:$0xff]
      %v371 = vld [vmem:[#allocation2 + $0x130] sm:$0xff]
      %v372 = vld [vmem:[#allocation2 + $0x138] sm:$0xff]
      %v373 = vld [vmem:[#allocation2 + $0x140] sm:$0xff]
      %v374 = vld [vmem:[#allocation2 + $0x148] sm:$0xff]
      %v375 = vld [vmem:[#allocation2 + $0x150] sm:$0xff]
      %v376 = vld [vmem:[#allocation2 + $0x158] sm:$0xff]
      %v377 = vld [vmem:[#allocation2 + $0x160] sm:$0xff]
      %v378 = vld [vmem:[#allocation2 + $0x168] sm:$0xff]
      %v379 = vld [vmem:[#allocation2 + $0x170] sm:$0xff]
      %v380 = vld [vmem:[#allocation2 + $0x178] sm:$0xff]
      %v381 = vld [vmem:[#allocation2 + $0x180] sm:$0xff]
      %v382 = vld [vmem:[#allocation2 + $0x188] sm:$0xff]
      %v383 = vld [vmem:[#allocation2 + $0x190] sm:$0xff]
      %v384 = vld [vmem:[#allocation2 + $0x198] sm:$0xff]
      %v385 = vld [vmem:[#allocation2 + $0x1a0] sm:$0xff]
      %v386 = vld [vmem:[#allocation2 + $0x1a8] sm:$0xff]
      %v387 = vld [vmem:[#allocation2 + $0x1b0] sm:$0xff]
      %v388 = vld [vmem:[#allocation2 + $0x1b8] sm:$0xff]
      %v389 = vld [vmem:[#allocation2 + $0x1c0] sm:$0xff]
      %v390 = vld [vmem:[#allocation2 + $0x1c8] sm:$0xff]
      %v391 = vld [vmem:[#allocation2 + $0x1d0] sm:$0xff]
      %v392 = vld [vmem:[#allocation2 + $0x1d8] sm:$0xff]
      %v393 = vld [vmem:[#allocation2 + $0x1e0] sm:$0xff]
      %v394 = vld [vmem:[#allocation2 + $0x1e8] sm:$0xff]
      %v395 = vld [vmem:[#allocation2 + $0x1f0] sm:$0xff]
      %v396 = vld [vmem:[#allocation2 + $0x1f8] sm:$0xff]
      %v397 = vld [vmem:[%s237] sm:$0xf]
      %v398 = vld [vmem:[%s237 + $0x4] sm:$0xf]
      %v399 = vld [vmem:[%s237 + $0x8] sm:$0xf]
      %v400 = vld [vmem:[%s237 + $0xc] sm:$0xf]
      %v401 = vld [vmem:[%s237 + $0x10] sm:$0xf]
      %v402 = vld [vmem:[%s237 + $0x14] sm:$0xf]
      %v403 = vld [vmem:[%s237 + $0x18] sm:$0xf]
      %v404 = vld [vmem:[%s237 + $0x1c] sm:$0xf]
      %v405 = vld [vmem:[%s237 + $0x20] sm:$0xf]
      %v406 = vld [vmem:[%s237 + $0x24] sm:$0xf]
      %v407 = vld [vmem:[%s237 + $0x28] sm:$0xf]
      %v408 = vld [vmem:[%s237 + $0x2c] sm:$0xf]
      %v409 = vld [vmem:[%s237 + $0x30] sm:$0xf]
      %v410 = vld [vmem:[%s237 + $0x34] sm:$0xf]
      %v411 = vld [vmem:[%s237 + $0x38] sm:$0xf]
      %v412 = vld [vmem:[%s237 + $0x3c] sm:$0xf]
      %v413 = vld [vmem:[%s237 + $0x40] sm:$0xf]
      %v414 = vld [vmem:[%s237 + $0x44] sm:$0xf]
      %v415 = vld [vmem:[%s237 + $0x48] sm:$0xf]
      %v416 = vld [vmem:[%s237 + $0x4c] sm:$0xf]
      %v417 = vld [vmem:[%s237 + $0x50] sm:$0xf]
      %v418 = vld [vmem:[%s237 + $0x54] sm:$0xf]
      %v419 = vld [vmem:[%s237 + $0x58] sm:$0xf]
      %v420 = vld [vmem:[%s237 + $0x5c] sm:$0xf]
      %v421 = vld [vmem:[%s237 + $0x60] sm:$0xf]
      %v422 = vld [vmem:[%s237 + $0x64] sm:$0xf]
      %v423 = vld [vmem:[%s237 + $0x68] sm:$0xf]
      %v424 = vld [vmem:[%s237 + $0x6c] sm:$0xf]
      %v425 = vld [vmem:[%s237 + $0x70] sm:$0xf]
      %v426 = vld [vmem:[%s237 + $0x74] sm:$0xf]
      %v427 = vld [vmem:[%s237 + $0x78] sm:$0xf]
      %v428 = vld [vmem:[%s237 + $0x7c] sm:$0xf]
      %v429 = vld [vmem:[%s237 + $0x80] sm:$0xf]
      %v430 = vld [vmem:[%s237 + $0x84] sm:$0xf]
      %v431 = vld [vmem:[%s237 + $0x88] sm:$0xf]
      %v432 = vld [vmem:[%s237 + $0x8c] sm:$0xf]
      %v433 = vld [vmem:[%s237 + $0x90] sm:$0xf]
      %v434 = vld [vmem:[%s237 + $0x94] sm:$0xf]
      %v435 = vld [vmem:[%s237 + $0x98] sm:$0xf]
      %v436 = vld [vmem:[%s237 + $0x9c] sm:$0xf]
      %v437 = vld [vmem:[%s237 + $0xa0] sm:$0xf]
      %v438 = vld [vmem:[%s237 + $0xa4] sm:$0xf]
      %v439 = vld [vmem:[%s237 + $0xa8] sm:$0xf]
      %v440 = vld [vmem:[%s237 + $0xac] sm:$0xf]
      %v441 = vld [vmem:[%s237 + $0xb0] sm:$0xf]
      %v442 = vld [vmem:[%s237 + $0xb4] sm:$0xf]
      %v443 = vld [vmem:[%s237 + $0xb8] sm:$0xf]
      %v444 = vld [vmem:[%s237 + $0xbc] sm:$0xf]
      %v445 = vld [vmem:[%s237 + $0xc0] sm:$0xf]
      %v446 = vld [vmem:[%s237 + $0xc4] sm:$0xf]
      %v447 = vld [vmem:[%s237 + $0xc8] sm:$0xf]
      %v448 = vld [vmem:[%s237 + $0xcc] sm:$0xf]
      %v449 = vld [vmem:[%s237 + $0xd0] sm:$0xf]
      %v450 = vld [vmem:[%s237 + $0xd4] sm:$0xf]
      %v451 = vld [vmem:[%s237 + $0xd8] sm:$0xf]
      %v452 = vld [vmem:[%s237 + $0xdc] sm:$0xf]
      %v453 = vld [vmem:[%s237 + $0xe0] sm:$0xf]
      %v454 = vld [vmem:[%s237 + $0xe4] sm:$0xf]
      %v455 = vld [vmem:[%s237 + $0xe8] sm:$0xf]
      %v456 = vld [vmem:[%s237 + $0xec] sm:$0xf]
      %v457 = vld [vmem:[%s237 + $0xf0] sm:$0xf]
      %v458 = vld [vmem:[%s237 + $0xf4] sm:$0xf]
      %v459 = vld [vmem:[%s237 + $0xf8] sm:$0xf]
      %v460 = vld [vmem:[%s237 + $0xfc] sm:$0xf]
      %v461 = vld [vmem:[%s246] sm:$0xf]
      %v462 = vld [vmem:[%s246 + $0x4] sm:$0xf]
      %v463 = vld [vmem:[%s246 + $0x8] sm:$0xf]
      %v464 = vld [vmem:[%s246 + $0xc] sm:$0xf]
      %v465 = vld [vmem:[%s246 + $0x10] sm:$0xf]
      %v466 = vld [vmem:[%s246 + $0x14] sm:$0xf]
      %v467 = vld [vmem:[%s246 + $0x18] sm:$0xf]
      %v468 = vld [vmem:[%s246 + $0x1c] sm:$0xf]
      %v469 = vld [vmem:[%s246 + $0x20] sm:$0xf]
      %v470 = vld [vmem:[%s246 + $0x24] sm:$0xf]
      %v471 = vld [vmem:[%s246 + $0x28] sm:$0xf]
      %v472 = vld [vmem:[%s246 + $0x2c] sm:$0xf]
      %v473 = vld [vmem:[%s246 + $0x30] sm:$0xf]
      %v474 = vld [vmem:[%s246 + $0x34] sm:$0xf]
      %v475 = vld [vmem:[%s246 + $0x38] sm:$0xf]
      %v476 = vld [vmem:[%s246 + $0x3c] sm:$0xf]
      %v541 = vunpack.c.l.b16 %v397
      %v542 = vunpack.c.l.b16 %v398
      %v543 = vunpack.c.l.b16 %v399
      %v544 = vunpack.c.l.b16 %v400
      %v545 = vunpack.c.l.b16 %v401
      %v546 = vunpack.c.l.b16 %v402
      %v547 = vunpack.c.l.b16 %v403
      %v548 = vunpack.c.l.b16 %v404
      %v549 = vunpack.c.l.b16 %v405
      %v550 = vunpack.c.l.b16 %v406
      %v551 = vunpack.c.l.b16 %v407
      %v552 = vunpack.c.l.b16 %v408
      %v553 = vunpack.c.l.b16 %v409
      %v554 = vunpack.c.l.b16 %v410
      %v555 = vunpack.c.l.b16 %v411
      %v556 = vunpack.c.l.b16 %v412
      %v557 = vunpack.c.l.b16 %v413
      %v558 = vunpack.c.l.b16 %v414
      %v559 = vunpack.c.l.b16 %v415
      %v560 = vunpack.c.l.b16 %v416
      %v561 = vunpack.c.l.b16 %v417
      %v562 = vunpack.c.l.b16 %v418
      %v563 = vunpack.c.l.b16 %v419
      %v564 = vunpack.c.l.b16 %v420
      %v565 = vunpack.c.l.b16 %v421
      %v566 = vunpack.c.l.b16 %v422
      %v567 = vunpack.c.l.b16 %v423
      %v568 = vunpack.c.l.b16 %v424
      %v569 = vunpack.c.l.b16 %v425
      %v570 = vunpack.c.l.b16 %v426
      %v571 = vunpack.c.l.b16 %v427
      %v572 = vunpack.c.l.b16 %v428
      %v573 = vunpack.c.l.b16 %v429
      %v574 = vunpack.c.l.b16 %v430
      %v575 = vunpack.c.l.b16 %v431
      %v576 = vunpack.c.l.b16 %v432
      %v577 = vunpack.c.l.b16 %v433
      %v578 = vunpack.c.l.b16 %v434
      %v579 = vunpack.c.l.b16 %v435
      %v580 = vunpack.c.l.b16 %v436
      %v581 = vunpack.c.l.b16 %v437
      %v582 = vunpack.c.l.b16 %v438
      %v583 = vunpack.c.l.b16 %v439
      %v584 = vunpack.c.l.b16 %v440
      %v585 = vunpack.c.l.b16 %v441
      %v586 = vunpack.c.l.b16 %v442
      %v587 = vunpack.c.l.b16 %v443
      %v588 = vunpack.c.l.b16 %v444
      %v589 = vunpack.c.l.b16 %v445
      %v590 = vunpack.c.l.b16 %v446
      %v591 = vunpack.c.l.b16 %v447
      %v592 = vunpack.c.l.b16 %v448
      %v593 = vunpack.c.l.b16 %v449
      %v594 = vunpack.c.l.b16 %v450
      %v595 = vunpack.c.l.b16 %v451
      %v596 = vunpack.c.l.b16 %v452
      %v597 = vunpack.c.l.b16 %v453
      %v598 = vunpack.c.l.b16 %v454
      %v599 = vunpack.c.l.b16 %v455
      %v600 = vunpack.c.l.b16 %v456
      %v601 = vunpack.c.l.b16 %v457
      %v602 = vunpack.c.l.b16 %v458
      %v603 = vunpack.c.l.b16 %v459
      %v604 = vunpack.c.l.b16 %v460
      %v605 = vpack.c.b16 %v542, %v541
      %v606 = vpack.c.b16 %v544, %v543
      %v607 = vpack.c.b16 %v546, %v545
      %v608 = vpack.c.b16 %v548, %v547
      %v609 = vpack.c.b16 %v550, %v549
      %v610 = vpack.c.b16 %v552, %v551
      %v611 = vpack.c.b16 %v554, %v553
      %v612 = vpack.c.b16 %v556, %v555
      %v613 = vpack.c.b16 %v558, %v557
      %v614 = vpack.c.b16 %v560, %v559
      %v615 = vpack.c.b16 %v562, %v561
      %v616 = vpack.c.b16 %v564, %v563
      %v617 = vpack.c.b16 %v566, %v565
      %v618 = vpack.c.b16 %v568, %v567
      %v619 = vpack.c.b16 %v570, %v569
      %v620 = vpack.c.b16 %v572, %v571
      %v621 = vpack.c.b16 %v574, %v573
      %v622 = vpack.c.b16 %v576, %v575
      %v623 = vpack.c.b16 %v578, %v577
      %v624 = vpack.c.b16 %v580, %v579
      %v625 = vpack.c.b16 %v582, %v581
      %v626 = vpack.c.b16 %v584, %v583
      %v627 = vpack.c.b16 %v586, %v585
      %v628 = vpack.c.b16 %v588, %v587
      %v629 = vpack.c.b16 %v590, %v589
      %v630 = vpack.c.b16 %v592, %v591
      %v631 = vpack.c.b16 %v594, %v593
      %v632 = vpack.c.b16 %v596, %v595
      %v633 = vpack.c.b16 %v598, %v597
      %v634 = vpack.c.b16 %v600, %v599
      %v635 = vpack.c.b16 %v602, %v601
      %v636 = vpack.c.b16 %v604, %v603
      %v685 = vunpack.c.l.b16 %v461
      %v686 = vunpack.c.l.b16 %v462
      %v687 = vunpack.c.l.b16 %v463
      %v688 = vunpack.c.l.b16 %v464
      %v689 = vunpack.c.l.b16 %v465
      %v690 = vunpack.c.l.b16 %v466
      %v691 = vunpack.c.l.b16 %v467
      %v692 = vunpack.c.l.b16 %v468
      %v693 = vunpack.c.l.b16 %v469
      %v694 = vunpack.c.l.b16 %v470
      %v695 = vunpack.c.l.b16 %v471
      %v696 = vunpack.c.l.b16 %v472
      %v697 = vunpack.c.l.b16 %v473
      %v698 = vunpack.c.l.b16 %v474
      %v699 = vunpack.c.l.b16 %v475
      %v700 = vunpack.c.l.b16 %v476
      %v701 = vpack.c.b16 %v686, %v685
      %v702 = vpack.c.b16 %v688, %v687
      %v703 = vpack.c.b16 %v690, %v689
      %v704 = vpack.c.b16 %v692, %v691
      %v705 = vpack.c.b16 %v694, %v693
      %v706 = vpack.c.b16 %v696, %v695
      %v707 = vpack.c.b16 %v698, %v697
      %v708 = vpack.c.b16 %v700, %v699
      %717 = vmatprep.subr.bf16.mxu0 0
      %718 = vmatpush1.bf16.msra.mxu0 %v708
      %719 = vmatprep.subr.bf16.mxu0 0
      %720 = vmatpush1.bf16.msra.mxu0 %v707
      %721 = vmatprep.subr.bf16.mxu0 0
      %722 = vmatpush1.bf16.msra.mxu0 %v706
      %723 = vmatprep.subr.bf16.mxu0 0
      %724 = vmatpush1.bf16.msra.mxu0 %v705
      %725 = vmatprep.subr.bf16.mxu0 0
      %726 = vmatpush1.bf16.msra.mxu0 %v704
      %727 = vmatprep.subr.bf16.mxu0 0
      %728 = vmatpush1.bf16.msra.mxu0 %v703
      %729 = vmatprep.subr.bf16.mxu0 0
      %730 = vmatpush1.bf16.msra.mxu0 %v702
      %731 = vmatprep.subr.bf16.mxu0 0
      %732 = vmatpush1.bf16.msra.mxu0 %v701
      %733 = vmatprep.subr.bf16.mxu0 0
      %734 = vmatpush2.bf16.msra.mxu0 0
      %735 = vmatprep.subr.bf16.mxu0 0
      %736 = vmatpush2.bf16.msra.mxu0 0
      %737 = vmatprep.subr.bf16.mxu0 0
      %738 = vmatpush2.bf16.msra.mxu0 0
      %739 = vmatprep.subr.bf16.mxu0 0
      %740 = vmatpush2.bf16.msra.mxu0 0
      %741 = vmatprep.subr.bf16.mxu0 0
      %742 = vmatpush2.bf16.msra.mxu0 0
      %743 = vmatprep.subr.bf16.mxu0 0
      %744 = vmatpush2.bf16.msra.mxu0 0
      %745 = vmatprep.subr.bf16.mxu0 0
      %746 = vmatpush2.bf16.msra.mxu0 0
      %747 = vmatprep.subr.bf16.mxu0 0
      %748 = vmatpush2.bf16.msra.mxu0 0
      %749 = vmatprep.mubr.bf16.mxu0 0
      %750 = vmatmul.mubr.bf16.gmra.mxu0 %v605
      %v751 = vpop.f32.mrf.mxu0
      %v752 = vadd.f32 0.0, %v751
      %v753 = vpop.f32.mrf.mxu0
      %v754 = vpop.f32.mrf.mxu0
      %v755 = vadd.f32 0.0, %v754
      %v756 = vpop.f32.mrf.mxu0
      %757 = vmatprep.mubr.bf16.mxu0 0
      %758 = vmatmul.mubr.bf16.gmra.mxu0 %v606
      %v759 = vpop.f32.mrf.mxu0
      %v760 = vadd.f32 0.0, %v759
      %v761 = vpop.f32.mrf.mxu0
      %v762 = vpop.f32.mrf.mxu0
      %v763 = vadd.f32 0.0, %v762
      %v764 = vpop.f32.mrf.mxu0
      %765 = vmatprep.mubr.bf16.mxu0 0
      %766 = vmatmul.mubr.bf16.gmra.mxu0 %v607
      %v767 = vpop.f32.mrf.mxu0
      %v768 = vadd.f32 0.0, %v767
      %v769 = vpop.f32.mrf.mxu0
      %v770 = vpop.f32.mrf.mxu0
      %v771 = vadd.f32 0.0, %v770
      %v772 = vpop.f32.mrf.mxu0
      %773 = vmatprep.mubr.bf16.mxu0 0
      %774 = vmatmul.mubr.bf16.gmra.mxu0 %v608
      %v775 = vpop.f32.mrf.mxu0
      %v776 = vadd.f32 0.0, %v775
      %v777 = vpop.f32.mrf.mxu0
      %v778 = vpop.f32.mrf.mxu0
      %v779 = vadd.f32 0.0, %v778
      %v780 = vpop.f32.mrf.mxu0
      %781 = vmatprep.mubr.bf16.mxu0 0
      %782 = vmatmul.mubr.bf16.gmra.mxu0 %v609
      %v783 = vpop.f32.mrf.mxu0
      %v784 = vadd.f32 0.0, %v783
      %v785 = vpop.f32.mrf.mxu0
      %v786 = vpop.f32.mrf.mxu0
      %v787 = vadd.f32 0.0, %v786
      %v788 = vpop.f32.mrf.mxu0
      %789 = vmatprep.mubr.bf16.mxu0 0
      %790 = vmatmul.mubr.bf16.gmra.mxu0 %v610
      %v791 = vpop.f32.mrf.mxu0
      %v792 = vadd.f32 0.0, %v791
      %v793 = vpop.f32.mrf.mxu0
      %v794 = vpop.f32.mrf.mxu0
      %v795 = vadd.f32 0.0, %v794
      %v796 = vpop.f32.mrf.mxu0
      %797 = vmatprep.mubr.bf16.mxu0 0
      %798 = vmatmul.mubr.bf16.gmra.mxu0 %v611
      %v799 = vpop.f32.mrf.mxu0
      %v800 = vadd.f32 0.0, %v799
      %v801 = vpop.f32.mrf.mxu0
      %v802 = vpop.f32.mrf.mxu0
      %v803 = vadd.f32 0.0, %v802
      %v804 = vpop.f32.mrf.mxu0
      %805 = vmatprep.mubr.bf16.mxu0 0
      %806 = vmatmul.mubr.bf16.gmra.mxu0 %v612
      %v807 = vpop.f32.mrf.mxu0
      %v808 = vadd.f32 0.0, %v807
      %v809 = vpop.f32.mrf.mxu0
      %v810 = vpop.f32.mrf.mxu0
      %v811 = vadd.f32 0.0, %v810
      %v812 = vpop.f32.mrf.mxu0
      %813 = vmatprep.mubr.bf16.mxu0 0
      %814 = vmatmul.mubr.bf16.gmra.mxu0 %v613
      %v815 = vpop.f32.mrf.mxu0
      %v816 = vadd.f32 0.0, %v815
      %v817 = vpop.f32.mrf.mxu0
      %v818 = vpop.f32.mrf.mxu0
      %v819 = vadd.f32 0.0, %v818
      %v820 = vpop.f32.mrf.mxu0
      %821 = vmatprep.mubr.bf16.mxu0 0
      %822 = vmatmul.mubr.bf16.gmra.mxu0 %v614
      %v823 = vpop.f32.mrf.mxu0
      %v824 = vadd.f32 0.0, %v823
      %v825 = vpop.f32.mrf.mxu0
      %v826 = vpop.f32.mrf.mxu0
      %v827 = vadd.f32 0.0, %v826
      %v828 = vpop.f32.mrf.mxu0
      %829 = vmatprep.mubr.bf16.mxu0 0
      %830 = vmatmul.mubr.bf16.gmra.mxu0 %v615
      %v831 = vpop.f32.mrf.mxu0
      %v832 = vadd.f32 0.0, %v831
      %v833 = vpop.f32.mrf.mxu0
      %v834 = vpop.f32.mrf.mxu0
      %v835 = vadd.f32 0.0, %v834
      %v836 = vpop.f32.mrf.mxu0
      %837 = vmatprep.mubr.bf16.mxu0 0
      %838 = vmatmul.mubr.bf16.gmra.mxu0 %v616
      %v839 = vpop.f32.mrf.mxu0
      %v840 = vadd.f32 0.0, %v839
      %v841 = vpop.f32.mrf.mxu0
      %v842 = vpop.f32.mrf.mxu0
      %v843 = vadd.f32 0.0, %v842
      %v844 = vpop.f32.mrf.mxu0
      %845 = vmatprep.mubr.bf16.mxu0 0
      %846 = vmatmul.mubr.bf16.gmra.mxu0 %v617
      %v847 = vpop.f32.mrf.mxu0
      %v848 = vadd.f32 0.0, %v847
      %v849 = vpop.f32.mrf.mxu0
      %v850 = vpop.f32.mrf.mxu0
      %v851 = vadd.f32 0.0, %v850
      %v852 = vpop.f32.mrf.mxu0
      %853 = vmatprep.mubr.bf16.mxu0 0
      %854 = vmatmul.mubr.bf16.gmra.mxu0 %v618
      %v855 = vpop.f32.mrf.mxu0
      %v856 = vadd.f32 0.0, %v855
      %v857 = vpop.f32.mrf.mxu0
      %v858 = vpop.f32.mrf.mxu0
      %v859 = vadd.f32 0.0, %v858
      %v860 = vpop.f32.mrf.mxu0
      %861 = vmatprep.mubr.bf16.mxu0 0
      %862 = vmatmul.mubr.bf16.gmra.mxu0 %v619
      %v863 = vpop.f32.mrf.mxu0
      %v864 = vadd.f32 0.0, %v863
      %v865 = vpop.f32.mrf.mxu0
      %v866 = vpop.f32.mrf.mxu0
      %v867 = vadd.f32 0.0, %v866
      %v868 = vpop.f32.mrf.mxu0
      %869 = vmatprep.mubr.bf16.mxu0 0
      %870 = vmatmul.mubr.bf16.gmra.mxu0 %v620
      %v871 = vpop.f32.mrf.mxu0
      %v872 = vadd.f32 0.0, %v871
      %v873 = vpop.f32.mrf.mxu0
      %v874 = vpop.f32.mrf.mxu0
      %v875 = vadd.f32 0.0, %v874
      %v876 = vpop.f32.mrf.mxu0
      %877 = vmatprep.mubr.bf16.mxu0 0
      %878 = vmatmul.mubr.bf16.gmra.mxu0 %v621
      %v879 = vpop.f32.mrf.mxu0
      %v880 = vadd.f32 0.0, %v879
      %v881 = vpop.f32.mrf.mxu0
      %v882 = vpop.f32.mrf.mxu0
      %v883 = vadd.f32 0.0, %v882
      %v884 = vpop.f32.mrf.mxu0
      %885 = vmatprep.mubr.bf16.mxu0 0
      %886 = vmatmul.mubr.bf16.gmra.mxu0 %v622
      %v887 = vpop.f32.mrf.mxu0
      %v888 = vadd.f32 0.0, %v887
      %v889 = vpop.f32.mrf.mxu0
      %v890 = vpop.f32.mrf.mxu0
      %v891 = vadd.f32 0.0, %v890
      %v892 = vpop.f32.mrf.mxu0
      %893 = vmatprep.mubr.bf16.mxu0 0
      %894 = vmatmul.mubr.bf16.gmra.mxu0 %v623
      %v895 = vpop.f32.mrf.mxu0
      %v896 = vadd.f32 0.0, %v895
      %v897 = vpop.f32.mrf.mxu0
      %v898 = vpop.f32.mrf.mxu0
      %v899 = vadd.f32 0.0, %v898
      %v900 = vpop.f32.mrf.mxu0
      %901 = vmatprep.mubr.bf16.mxu0 0
      %902 = vmatmul.mubr.bf16.gmra.mxu0 %v624
      %v903 = vpop.f32.mrf.mxu0
      %v904 = vadd.f32 0.0, %v903
      %v905 = vpop.f32.mrf.mxu0
      %v906 = vpop.f32.mrf.mxu0
      %v907 = vadd.f32 0.0, %v906
      %v908 = vpop.f32.mrf.mxu0
      %909 = vmatprep.mubr.bf16.mxu0 0
      %910 = vmatmul.mubr.bf16.gmra.mxu0 %v625
      %v911 = vpop.f32.mrf.mxu0
      %v912 = vadd.f32 0.0, %v911
      %v913 = vpop.f32.mrf.mxu0
      %v914 = vpop.f32.mrf.mxu0
      %v915 = vadd.f32 0.0, %v914
      %v916 = vpop.f32.mrf.mxu0
      %917 = vmatprep.mubr.bf16.mxu0 0
      %918 = vmatmul.mubr.bf16.gmra.mxu0 %v626
      %v919 = vpop.f32.mrf.mxu0
      %v920 = vadd.f32 0.0, %v919
      %v921 = vpop.f32.mrf.mxu0
      %v922 = vpop.f32.mrf.mxu0
      %v923 = vadd.f32 0.0, %v922
      %v924 = vpop.f32.mrf.mxu0
      %925 = vmatprep.mubr.bf16.mxu0 0
      %926 = vmatmul.mubr.bf16.gmra.mxu0 %v627
      %v927 = vpop.f32.mrf.mxu0
      %v928 = vadd.f32 0.0, %v927
      %v929 = vpop.f32.mrf.mxu0
      %v930 = vpop.f32.mrf.mxu0
      %v931 = vadd.f32 0.0, %v930
      %v932 = vpop.f32.mrf.mxu0
      %933 = vmatprep.mubr.bf16.mxu0 0
      %934 = vmatmul.mubr.bf16.gmra.mxu0 %v628
      %v935 = vpop.f32.mrf.mxu0
      %v936 = vadd.f32 0.0, %v935
      %v937 = vpop.f32.mrf.mxu0
      %v938 = vpop.f32.mrf.mxu0
      %v939 = vadd.f32 0.0, %v938
      %v940 = vpop.f32.mrf.mxu0
      %941 = vmatprep.mubr.bf16.mxu0 0
      %942 = vmatmul.mubr.bf16.gmra.mxu0 %v629
      %v943 = vpop.f32.mrf.mxu0
      %v944 = vadd.f32 0.0, %v943
      %v945 = vpop.f32.mrf.mxu0
      %v946 = vpop.f32.mrf.mxu0
      %v947 = vadd.f32 0.0, %v946
      %v948 = vpop.f32.mrf.mxu0
      %949 = vmatprep.mubr.bf16.mxu0 0
      %950 = vmatmul.mubr.bf16.gmra.mxu0 %v630
      %v951 = vpop.f32.mrf.mxu0
      %v952 = vadd.f32 0.0, %v951
      %v953 = vpop.f32.mrf.mxu0
      %v954 = vpop.f32.mrf.mxu0
      %v955 = vadd.f32 0.0, %v954
      %v956 = vpop.f32.mrf.mxu0
      %957 = vmatprep.mubr.bf16.mxu0 0
      %958 = vmatmul.mubr.bf16.gmra.mxu0 %v631
      %v959 = vpop.f32.mrf.mxu0
      %v960 = vadd.f32 0.0, %v959
      %v961 = vpop.f32.mrf.mxu0
      %v962 = vpop.f32.mrf.mxu0
      %v963 = vadd.f32 0.0, %v962
      %v964 = vpop.f32.mrf.mxu0
      %965 = vmatprep.mubr.bf16.mxu0 0
      %966 = vmatmul.mubr.bf16.gmra.mxu0 %v632
      %v967 = vpop.f32.mrf.mxu0
      %v968 = vadd.f32 0.0, %v967
      %v969 = vpop.f32.mrf.mxu0
      %v970 = vpop.f32.mrf.mxu0
      %v971 = vadd.f32 0.0, %v970
      %v972 = vpop.f32.mrf.mxu0
      %973 = vmatprep.mubr.bf16.mxu0 0
      %974 = vmatmul.mubr.bf16.gmra.mxu0 %v633
      %v975 = vpop.f32.mrf.mxu0
      %v976 = vadd.f32 0.0, %v975
      %v977 = vpop.f32.mrf.mxu0
      %v978 = vpop.f32.mrf.mxu0
      %v979 = vadd.f32 0.0, %v978
      %v980 = vpop.f32.mrf.mxu0
      %981 = vmatprep.mubr.bf16.mxu0 0
      %982 = vmatmul.mubr.bf16.gmra.mxu0 %v634
      %v983 = vpop.f32.mrf.mxu0
      %v984 = vadd.f32 0.0, %v983
      %v985 = vpop.f32.mrf.mxu0
      %v986 = vpop.f32.mrf.mxu0
      %v987 = vadd.f32 0.0, %v986
      %v988 = vpop.f32.mrf.mxu0
      %989 = vmatprep.mubr.bf16.mxu0 0
      %990 = vmatmul.mubr.bf16.gmra.mxu0 %v635
      %v991 = vpop.f32.mrf.mxu0
      %v992 = vadd.f32 0.0, %v991
      %v993 = vpop.f32.mrf.mxu0
      %v994 = vpop.f32.mrf.mxu0
      %v995 = vadd.f32 0.0, %v994
      %v996 = vpop.f32.mrf.mxu0
      %997 = vmatprep.mubr.bf16.mxu0 0
      %998 = vmatmul.mubr.bf16.gmra.mxu0 %v636
      %v999 = vpop.f32.mrf.mxu0
      %v1000 = vadd.f32 0.0, %v999
      %v1001 = vpop.f32.mrf.mxu0
      %v1002 = vpop.f32.mrf.mxu0
      %v1003 = vadd.f32 0.0, %v1002
      %v1004 = vpop.f32.mrf.mxu0
      %1005 = vdwg.mxu0
      %v1006 = vadd.f32 %v333, %v752
      %v1007 = vadd.f32 %v334, %v755
      %v1008 = vadd.f32 %v335, %v760
      %v1009 = vadd.f32 %v336, %v763
      %v1010 = vadd.f32 %v337, %v768
      %v1011 = vadd.f32 %v338, %v771
      %v1012 = vadd.f32 %v339, %v776
      %v1013 = vadd.f32 %v340, %v779
      %v1014 = vadd.f32 %v341, %v784
      %v1015 = vadd.f32 %v342, %v787
      %v1016 = vadd.f32 %v343, %v792
      %v1017 = vadd.f32 %v344, %v795
      %v1018 = vadd.f32 %v345, %v800
      %v1019 = vadd.f32 %v346, %v803
      %v1020 = vadd.f32 %v347, %v808
      %v1021 = vadd.f32 %v348, %v811
      %v1022 = vadd.f32 %v349, %v816
      %v1023 = vadd.f32 %v350, %v819
      %v1024 = vadd.f32 %v351, %v824
      %v1025 = vadd.f32 %v352, %v827
      %v1026 = vadd.f32 %v353, %v832
      %v1027 = vadd.f32 %v354, %v835
      %v1028 = vadd.f32 %v355, %v840
      %v1029 = vadd.f32 %v356, %v843
      %v1030 = vadd.f32 %v357, %v848
      %v1031 = vadd.f32 %v358, %v851
      %v1032 = vadd.f32 %v359, %v856
      %v1033 = vadd.f32 %v360, %v859
      %v1034 = vadd.f32 %v361, %v864
      %v1035 = vadd.f32 %v362, %v867
      %v1036 = vadd.f32 %v363, %v872
      %v1037 = vadd.f32 %v364, %v875
      %v1038 = vadd.f32 %v365, %v880
      %v1039 = vadd.f32 %v366, %v883
      %v1040 = vadd.f32 %v367, %v888
      %v1041 = vadd.f32 %v368, %v891
      %v1042 = vadd.f32 %v369, %v896
      %v1043 = vadd.f32 %v370, %v899
      %v1044 = vadd.f32 %v371, %v904
      %v1045 = vadd.f32 %v372, %v907
      %v1046 = vadd.f32 %v373, %v912
      %v1047 = vadd.f32 %v374, %v915
      %v1048 = vadd.f32 %v375, %v920
      %v1049 = vadd.f32 %v376, %v923
      %v1050 = vadd.f32 %v377, %v928
      %v1051 = vadd.f32 %v378, %v931
      %v1052 = vadd.f32 %v379, %v936
      %v1053 = vadd.f32 %v380, %v939
      %v1054 = vadd.f32 %v381, %v944
      %v1055 = vadd.f32 %v382, %v947
      %v1056 = vadd.f32 %v383, %v952
      %v1057 = vadd.f32 %v384, %v955
      %v1058 = vadd.f32 %v385, %v960
      %v1059 = vadd.f32 %v386, %v963
      %v1060 = vadd.f32 %v387, %v968
      %v1061 = vadd.f32 %v388, %v971
      %v1062 = vadd.f32 %v389, %v976
      %v1063 = vadd.f32 %v390, %v979
      %v1064 = vadd.f32 %v391, %v984
      %v1065 = vadd.f32 %v392, %v987
      %v1066 = vadd.f32 %v393, %v992
      %v1067 = vadd.f32 %v394, %v995
      %v1068 = vadd.f32 %v395, %v1000
      %v1069 = vadd.f32 %v396, %v1003
      %1070 = vst [vmem:[#allocation2] sm:$0xff] %v1006
      %1071 = vst [vmem:[#allocation2 + $0x8] sm:$0xff] %v1007
      %1072 = vst [vmem:[#allocation2 + $0x10] sm:$0xff] %v1008
      %1073 = vst [vmem:[#allocation2 + $0x18] sm:$0xff] %v1009
      %1074 = vst [vmem:[#allocation2 + $0x20] sm:$0xff] %v1010
      %1075 = vst [vmem:[#allocation2 + $0x28] sm:$0xff] %v1011
      %1076 = vst [vmem:[#allocation2 + $0x30] sm:$0xff] %v1012
      %1077 = vst [vmem:[#allocation2 + $0x38] sm:$0xff] %v1013
      %1078 = vst [vmem:[#allocation2 + $0x40] sm:$0xff] %v1014
      %1079 = vst [vmem:[#allocation2 + $0x48] sm:$0xff] %v1015
      %1080 = vst [vmem:[#allocation2 + $0x50] sm:$0xff] %v1016
      %1081 = vst [vmem:[#allocation2 + $0x58] sm:$0xff] %v1017
      %1082 = vst [vmem:[#allocation2 + $0x60] sm:$0xff] %v1018
      %1083 = vst [vmem:[#allocation2 + $0x68] sm:$0xff] %v1019
      %1084 = vst [vmem:[#allocation2 + $0x70] sm:$0xff] %v1020
      %1085 = vst [vmem:[#allocation2 + $0x78] sm:$0xff] %v1021
      %1086 = vst [vmem:[#allocation2 + $0x80] sm:$0xff] %v1022
      %1087 = vst [vmem:[#allocation2 + $0x88] sm:$0xff] %v1023
      %1088 = vst [vmem:[#allocation2 + $0x90] sm:$0xff] %v1024
      %1089 = vst [vmem:[#allocation2 + $0x98] sm:$0xff] %v1025
      %1090 = vst [vmem:[#allocation2 + $0xa0] sm:$0xff] %v1026
      %1091 = vst [vmem:[#allocation2 + $0xa8] sm:$0xff] %v1027
      %1092 = vst [vmem:[#allocation2 + $0xb0] sm:$0xff] %v1028
      %1093 = vst [vmem:[#allocation2 + $0xb8] sm:$0xff] %v1029
      %1094 = vst [vmem:[#allocation2 + $0xc0] sm:$0xff] %v1030
      %1095 = vst [vmem:[#allocation2 + $0xc8] sm:$0xff] %v1031
      %1096 = vst [vmem:[#allocation2 + $0xd0] sm:$0xff] %v1032
      %1097 = vst [vmem:[#allocation2 + $0xd8] sm:$0xff] %v1033
      %1098 = vst [vmem:[#allocation2 + $0xe0] sm:$0xff] %v1034
      %1099 = vst [vmem:[#allocation2 + $0xe8] sm:$0xff] %v1035
      %1100 = vst [vmem:[#allocation2 + $0xf0] sm:$0xff] %v1036
      %1101 = vst [vmem:[#allocation2 + $0xf8] sm:$0xff] %v1037
      %1102 = vst [vmem:[#allocation2 + $0x100] sm:$0xff] %v1038
      %1103 = vst [vmem:[#allocation2 + $0x108] sm:$0xff] %v1039
      %1104 = vst [vmem:[#allocation2 + $0x110] sm:$0xff] %v1040
      %1105 = vst [vmem:[#allocation2 + $0x118] sm:$0xff] %v1041
      %1106 = vst [vmem:[#allocation2 + $0x120] sm:$0xff] %v1042
      %1107 = vst [vmem:[#allocation2 + $0x128] sm:$0xff] %v1043
      %1108 = vst [vmem:[#allocation2 + $0x130] sm:$0xff] %v1044
      %1109 = vst [vmem:[#allocation2 + $0x138] sm:$0xff] %v1045
      %1110 = vst [vmem:[#allocation2 + $0x140] sm:$0xff] %v1046
      %1111 = vst [vmem:[#allocation2 + $0x148] sm:$0xff] %v1047
      %1112 = vst [vmem:[#allocation2 + $0x150] sm:$0xff] %v1048
      %1113 = vst [vmem:[#allocation2 + $0x158] sm:$0xff] %v1049
      %1114 = vst [vmem:[#allocation2 + $0x160] sm:$0xff] %v1050
      %1115 = vst [vmem:[#allocation2 + $0x168] sm:$0xff] %v1051
      %1116 = vst [vmem:[#allocation2 + $0x170] sm:$0xff] %v1052
      %1117 = vst [vmem:[#allocation2 + $0x178] sm:$0xff] %v1053
      %1118 = vst [vmem:[#allocation2 + $0x180] sm:$0xff] %v1054
      %1119 = vst [vmem:[#allocation2 + $0x188] sm:$0xff] %v1055
      %1120 = vst [vmem:[#allocation2 + $0x190] sm:$0xff] %v1056
      %1121 = vst [vmem:[#allocation2 + $0x198] sm:$0xff] %v1057
      %1122 = vst [vmem:[#allocation2 + $0x1a0] sm:$0xff] %v1058
      %1123 = vst [vmem:[#allocation2 + $0x1a8] sm:$0xff] %v1059
      %1124 = vst [vmem:[#allocation2 + $0x1b0] sm:$0xff] %v1060
      %1125 = vst [vmem:[#allocation2 + $0x1b8] sm:$0xff] %v1061
      %1126 = vst [vmem:[#allocation2 + $0x1c0] sm:$0xff] %v1062
      %1127 = vst [vmem:[#allocation2 + $0x1c8] sm:$0xff] %v1063
      %1128 = vst [vmem:[#allocation2 + $0x1d0] sm:$0xff] %v1064
      %1129 = vst [vmem:[#allocation2 + $0x1d8] sm:$0xff] %v1065
      %1130 = vst [vmem:[#allocation2 + $0x1e0] sm:$0xff] %v1066
      %1131 = vst [vmem:[#allocation2 + $0x1e8] sm:$0xff] %v1067
      %1132 = vst [vmem:[#allocation2 + $0x1f0] sm:$0xff] %v1068
      %1133 = vst [vmem:[#allocation2 + $0x1f8] sm:$0xff] %v1069
      // Predicated region
      $region33: #{conv_bn_mish_nhwc.2} parent=27 // pred_check
        %p1134 = pneg %p265
      $region34: #{conv_bn_mish_nhwc.2} parent=27 // pred_check_branch
        %1136 = sbr.rel (%p1134) target = $region36
      $region35: #{conv_bn_mish_nhwc.2} parent=27 // pred_region
        %v1137 = vld [vmem:[#allocation2] sm:$0xff]
        %v1138 = vld [vmem:[#allocation2 + $0x8] sm:$0xff]
        %v1139 = vld [vmem:[#allocation2 + $0x10] sm:$0xff]
        %v1140 = vld [vmem:[#allocation2 + $0x18] sm:$0xff]
        %v1141 = vld [vmem:[#allocation2 + $0x20] sm:$0xff]
        %v1142 = vld [vmem:[#allocation2 + $0x28] sm:$0xff]
        %v1143 = vld [vmem:[#allocation2 + $0x30] sm:$0xff]
        %v1144 = vld [vmem:[#allocation2 + $0x38] sm:$0xff]
        %v1145 = vld [vmem:[#allocation2 + $0x40] sm:$0xff]
        %v1146 = vld [vmem:[#allocation2 + $0x48] sm:$0xff]
        %v1147 = vld [vmem:[#allocation2 + $0x50] sm:$0xff]
        %v1148 = vld [vmem:[#allocation2 + $0x58] sm:$0xff]
        %v1149 = vld [vmem:[#allocation2 + $0x60] sm:$0xff]
        %v1150 = vld [vmem:[#allocation2 + $0x68] sm:$0xff]
        %v1151 = vld [vmem:[#allocation2 + $0x70] sm:$0xff]
        %v1152 = vld [vmem:[#allocation2 + $0x78] sm:$0xff]
        %v1153 = vld [vmem:[#allocation2 + $0x80] sm:$0xff]
        %v1154 = vld [vmem:[#allocation2 + $0x88] sm:$0xff]
        %v1155 = vld [vmem:[#allocation2 + $0x90] sm:$0xff]
        %v1156 = vld [vmem:[#allocation2 + $0x98] sm:$0xff]
        %v1157 = vld [vmem:[#allocation2 + $0xa0] sm:$0xff]
        %v1158 = vld [vmem:[#allocation2 + $0xa8] sm:$0xff]
        %v1159 = vld [vmem:[#allocation2 + $0xb0] sm:$0xff]
        %v1160 = vld [vmem:[#allocation2 + $0xb8] sm:$0xff]
        %v1161 = vld [vmem:[#allocation2 + $0xc0] sm:$0xff]
        %v1162 = vld [vmem:[#allocation2 + $0xc8] sm:$0xff]
        %v1163 = vld [vmem:[#allocation2 + $0xd0] sm:$0xff]
        %v1164 = vld [vmem:[#allocation2 + $0xd8] sm:$0xff]
        %v1165 = vld [vmem:[#allocation2 + $0xe0] sm:$0xff]
        %v1166 = vld [vmem:[#allocation2 + $0xe8] sm:$0xff]
        %v1167 = vld [vmem:[#allocation2 + $0xf0] sm:$0xff]
        %v1168 = vld [vmem:[#allocation2 + $0xf8] sm:$0xff]
        %v1169 = vld [vmem:[#allocation2 + $0x100] sm:$0xff]
        %v1170 = vld [vmem:[#allocation2 + $0x108] sm:$0xff]
        %v1171 = vld [vmem:[#allocation2 + $0x110] sm:$0xff]
        %v1172 = vld [vmem:[#allocation2 + $0x118] sm:$0xff]
        %v1173 = vld [vmem:[#allocation2 + $0x120] sm:$0xff]
        %v1174 = vld [vmem:[#allocation2 + $0x128] sm:$0xff]
        %v1175 = vld [vmem:[#allocation2 + $0x130] sm:$0xff]
        %v1176 = vld [vmem:[#allocation2 + $0x138] sm:$0xff]
        %v1177 = vld [vmem:[#allocation2 + $0x140] sm:$0xff]
        %v1178 = vld [vmem:[#allocation2 + $0x148] sm:$0xff]
        %v1179 = vld [vmem:[#allocation2 + $0x150] sm:$0xff]
        %v1180 = vld [vmem:[#allocation2 + $0x158] sm:$0xff]
        %v1181 = vld [vmem:[#allocation2 + $0x160] sm:$0xff]
        %v1182 = vld [vmem:[#allocation2 + $0x168] sm:$0xff]
        %v1183 = vld [vmem:[#allocation2 + $0x170] sm:$0xff]
        %v1184 = vld [vmem:[#allocation2 + $0x178] sm:$0xff]
        %v1185 = vld [vmem:[#allocation2 + $0x180] sm:$0xff]
        %v1186 = vld [vmem:[#allocation2 + $0x188] sm:$0xff]
        %v1187 = vld [vmem:[#allocation2 + $0x190] sm:$0xff]
        %v1188 = vld [vmem:[#allocation2 + $0x198] sm:$0xff]
        %v1189 = vld [vmem:[#allocation2 + $0x1a0] sm:$0xff]
        %v1190 = vld [vmem:[#allocation2 + $0x1a8] sm:$0xff]
        %v1191 = vld [vmem:[#allocation2 + $0x1b0] sm:$0xff]
        %v1192 = vld [vmem:[#allocation2 + $0x1b8] sm:$0xff]
        %v1193 = vld [vmem:[#allocation2 + $0x1c0] sm:$0xff]
        %v1194 = vld [vmem:[#allocation2 + $0x1c8] sm:$0xff]
        %v1195 = vld [vmem:[#allocation2 + $0x1d0] sm:$0xff]
        %v1196 = vld [vmem:[#allocation2 + $0x1d8] sm:$0xff]
        %v1197 = vld [vmem:[#allocation2 + $0x1e0] sm:$0xff]
        %v1198 = vld [vmem:[#allocation2 + $0x1e8] sm:$0xff]
        %v1199 = vld [vmem:[#allocation2 + $0x1f0] sm:$0xff]
        %v1200 = vld [vmem:[#allocation2 + $0x1f8] sm:$0xff]
        %v1201 = vpack.c.bf16 %v1138, %v1137
        %v1202 = vpack.c.bf16 %v1140, %v1139
        %v1203 = vpack.c.bf16 %v1142, %v1141
        %v1204 = vpack.c.bf16 %v1144, %v1143
        %v1205 = vpack.c.bf16 %v1146, %v1145
        %v1206 = vpack.c.bf16 %v1148, %v1147
        %v1207 = vpack.c.bf16 %v1150, %v1149
        %v1208 = vpack.c.bf16 %v1152, %v1151
        %v1209 = vpack.c.bf16 %v1154, %v1153
        %v1210 = vpack.c.bf16 %v1156, %v1155
        %v1211 = vpack.c.bf16 %v1158, %v1157
        %v1212 = vpack.c.bf16 %v1160, %v1159
        %v1213 = vpack.c.bf16 %v1162, %v1161
        %v1214 = vpack.c.bf16 %v1164, %v1163
        %v1215 = vpack.c.bf16 %v1166, %v1165
        %v1216 = vpack.c.bf16 %v1168, %v1167
        %v1217 = vpack.c.bf16 %v1170, %v1169
        %v1218 = vpack.c.bf16 %v1172, %v1171
        %v1219 = vpack.c.bf16 %v1174, %v1173
        %v1220 = vpack.c.bf16 %v1176, %v1175
        %v1221 = vpack.c.bf16 %v1178, %v1177
        %v1222 = vpack.c.bf16 %v1180, %v1179
        %v1223 = vpack.c.bf16 %v1182, %v1181
        %v1224 = vpack.c.bf16 %v1184, %v1183
        %v1225 = vpack.c.bf16 %v1186, %v1185
        %v1226 = vpack.c.bf16 %v1188, %v1187
        %v1227 = vpack.c.bf16 %v1190, %v1189
        %v1228 = vpack.c.bf16 %v1192, %v1191
        %v1229 = vpack.c.bf16 %v1194, %v1193
        %v1230 = vpack.c.bf16 %v1196, %v1195
        %v1231 = vpack.c.bf16 %v1198, %v1197
        %v1232 = vpack.c.bf16 %v1200, %v1199
        %v1265 = vunpack.c.l.b16 %v1201
        %v1266 = vunpack.c.h.b16 %v1201
        %v1267 = vunpack.c.l.b16 %v1202
        %v1268 = vunpack.c.h.b16 %v1202
        %v1269 = vunpack.c.l.b16 %v1203
        %v1270 = vunpack.c.h.b16 %v1203
        %v1271 = vunpack.c.l.b16 %v1204
        %v1272 = vunpack.c.h.b16 %v1204
        %v1273 = vunpack.c.l.b16 %v1205
        %v1274 = vunpack.c.h.b16 %v1205
        %v1275 = vunpack.c.l.b16 %v1206
        %v1276 = vunpack.c.h.b16 %v1206
        %v1277 = vunpack.c.l.b16 %v1207
        %v1278 = vunpack.c.h.b16 %v1207
        %v1279 = vunpack.c.l.b16 %v1208
        %v1280 = vunpack.c.h.b16 %v1208
        %v1281 = vunpack.c.l.b16 %v1209
        %v1282 = vunpack.c.h.b16 %v1209
        %v1283 = vunpack.c.l.b16 %v1210
        %v1284 = vunpack.c.h.b16 %v1210
        %v1285 = vunpack.c.l.b16 %v1211
        %v1286 = vunpack.c.h.b16 %v1211
        %v1287 = vunpack.c.l.b16 %v1212
        %v1288 = vunpack.c.h.b16 %v1212
        %v1289 = vunpack.c.l.b16 %v1213
        %v1290 = vunpack.c.h.b16 %v1213
        %v1291 = vunpack.c.l.b16 %v1214
        %v1292 = vunpack.c.h.b16 %v1214
        %v1293 = vunpack.c.l.b16 %v1215
        %v1294 = vunpack.c.h.b16 %v1215
        %v1295 = vunpack.c.l.b16 %v1216
        %v1296 = vunpack.c.h.b16 %v1216
        %v1297 = vunpack.c.l.b16 %v1217
        %v1298 = vunpack.c.h.b16 %v1217
        %v1299 = vunpack.c.l.b16 %v1218
        %v1300 = vunpack.c.h.b16 %v1218
        %v1301 = vunpack.c.l.b16 %v1219
        %v1302 = vunpack.c.h.b16 %v1219
        %v1303 = vunpack.c.l.b16 %v1220
        %v1304 = vunpack.c.h.b16 %v1220
        %v1305 = vunpack.c.l.b16 %v1221
        %v1306 = vunpack.c.h.b16 %v1221
        %v1307 = vunpack.c.l.b16 %v1222
        %v1308 = vunpack.c.h.b16 %v1222
        %v1309 = vunpack.c.l.b16 %v1223
        %v1310 = vunpack.c.h.b16 %v1223
        %v1311 = vunpack.c.l.b16 %v1224
        %v1312 = vunpack.c.h.b16 %v1224
        %v1313 = vunpack.c.l.b16 %v1225
        %v1314 = vunpack.c.h.b16 %v1225
        %v1315 = vunpack.c.l.b16 %v1226
        %v1316 = vunpack.c.h.b16 %v1226
        %v1317 = vunpack.c.l.b16 %v1227
        %v1318 = vunpack.c.h.b16 %v1227
        %v1319 = vunpack.c.l.b16 %v1228
        %v1320 = vunpack.c.h.b16 %v1228
        %v1321 = vunpack.c.l.b16 %v1229
        %v1322 = vunpack.c.h.b16 %v1229
        %v1323 = vunpack.c.l.b16 %v1230
        %v1324 = vunpack.c.h.b16 %v1230
        %v1325 = vunpack.c.l.b16 %v1231
        %v1326 = vunpack.c.h.b16 %v1231
        %v1327 = vunpack.c.l.b16 %v1232
        %v1328 = vunpack.c.h.b16 %v1232
        %v1329 = vpack.c.b16 %v1265, %v1265
        %v1330 = vpack.c.b16 %v1266, %v1266
        %v1331 = vpack.c.b16 %v1267, %v1267
        %v1332 = vpack.c.b16 %v1268, %v1268
        %v1333 = vpack.c.b16 %v1269, %v1269
        %v1334 = vpack.c.b16 %v1270, %v1270
        %v1335 = vpack.c.b16 %v1271, %v1271
        %v1336 = vpack.c.b16 %v1272, %v1272
        %v1337 = vpack.c.b16 %v1273, %v1273
        %v1338 = vpack.c.b16 %v1274, %v1274
        %v1339 = vpack.c.b16 %v1275, %v1275
        %v1340 = vpack.c.b16 %v1276, %v1276
        %v1341 = vpack.c.b16 %v1277, %v1277
        %v1342 = vpack.c.b16 %v1278, %v1278
        %v1343 = vpack.c.b16 %v1279, %v1279
        %v1344 = vpack.c.b16 %v1280, %v1280
        %v1345 = vpack.c.b16 %v1281, %v1281
        %v1346 = vpack.c.b16 %v1282, %v1282
        %v1347 = vpack.c.b16 %v1283, %v1283
        %v1348 = vpack.c.b16 %v1284, %v1284
        %v1349 = vpack.c.b16 %v1285, %v1285
        %v1350 = vpack.c.b16 %v1286, %v1286
        %v1351 = vpack.c.b16 %v1287, %v1287
        %v1352 = vpack.c.b16 %v1288, %v1288
        %v1353 = vpack.c.b16 %v1289, %v1289
        %v1354 = vpack.c.b16 %v1290, %v1290
        %v1355 = vpack.c.b16 %v1291, %v1291
        %v1356 = vpack.c.b16 %v1292, %v1292
        %v1357 = vpack.c.b16 %v1293, %v1293
        %v1358 = vpack.c.b16 %v1294, %v1294
        %v1359 = vpack.c.b16 %v1295, %v1295
        %v1360 = vpack.c.b16 %v1296, %v1296
        %v1361 = vpack.c.b16 %v1297, %v1297
        %v1362 = vpack.c.b16 %v1298, %v1298
        %v1363 = vpack.c.b16 %v1299, %v1299
        %v1364 = vpack.c.b16 %v1300, %v1300
        %v1365 = vpack.c.b16 %v1301, %v1301
        %v1366 = vpack.c.b16 %v1302, %v1302
        %v1367 = vpack.c.b16 %v1303, %v1303
        %v1368 = vpack.c.b16 %v1304, %v1304
        %v1369 = vpack.c.b16 %v1305, %v1305
        %v1370 = vpack.c.b16 %v1306, %v1306
        %v1371 = vpack.c.b16 %v1307, %v1307
        %v1372 = vpack.c.b16 %v1308, %v1308
        %v1373 = vpack.c.b16 %v1309, %v1309
        %v1374 = vpack.c.b16 %v1310, %v1310
        %v1375 = vpack.c.b16 %v1311, %v1311
        %v1376 = vpack.c.b16 %v1312, %v1312
        %v1377 = vpack.c.b16 %v1313, %v1313
        %v1378 = vpack.c.b16 %v1314, %v1314
        %v1379 = vpack.c.b16 %v1315, %v1315
        %v1380 = vpack.c.b16 %v1316, %v1316
        %v1381 = vpack.c.b16 %v1317, %v1317
        %v1382 = vpack.c.b16 %v1318, %v1318
        %v1383 = vpack.c.b16 %v1319, %v1319
        %v1384 = vpack.c.b16 %v1320, %v1320
        %v1385 = vpack.c.b16 %v1321, %v1321
        %v1386 = vpack.c.b16 %v1322, %v1322
        %v1387 = vpack.c.b16 %v1323, %v1323
        %v1388 = vpack.c.b16 %v1324, %v1324
        %v1389 = vpack.c.b16 %v1325, %v1325
        %v1390 = vpack.c.b16 %v1326, %v1326
        %v1391 = vpack.c.b16 %v1327, %v1327
        %v1392 = vpack.c.b16 %v1328, %v1328
        %1457 = vst [vmem:[%s255] sm:$0xf] %v1329
        %1458 = vst [vmem:[%s255 + $0x4] sm:$0xf] %v1330
        %1459 = vst [vmem:[%s255 + $0x8] sm:$0xf] %v1331
        %1460 = vst [vmem:[%s255 + $0xc] sm:$0xf] %v1332
        %1461 = vst [vmem:[%s255 + $0x10] sm:$0xf] %v1333
        %1462 = vst [vmem:[%s255 + $0x14] sm:$0xf] %v1334
        %1463 = vst [vmem:[%s255 + $0x18] sm:$0xf] %v1335
        %1464 = vst [vmem:[%s255 + $0x1c] sm:$0xf] %v1336
        %1465 = vst [vmem:[%s255 + $0x20] sm:$0xf] %v1337
        %1466 = vst [vmem:[%s255 + $0x24] sm:$0xf] %v1338
        %1467 = vst [vmem:[%s255 + $0x28] sm:$0xf] %v1339
        %1468 = vst [vmem:[%s255 + $0x2c] sm:$0xf] %v1340
        %1469 = vst [vmem:[%s255 + $0x30] sm:$0xf] %v1341
        %1470 = vst [vmem:[%s255 + $0x34] sm:$0xf] %v1342
        %1471 = vst [vmem:[%s255 + $0x38] sm:$0xf] %v1343
        %1472 = vst [vmem:[%s255 + $0x3c] sm:$0xf] %v1344
        %1473 = vst [vmem:[%s255 + $0x40] sm:$0xf] %v1345
        %1474 = vst [vmem:[%s255 + $0x44] sm:$0xf] %v1346
        %1475 = vst [vmem:[%s255 + $0x48] sm:$0xf] %v1347
        %1476 = vst [vmem:[%s255 + $0x4c] sm:$0xf] %v1348
        %1477 = vst [vmem:[%s255 + $0x50] sm:$0xf] %v1349
        %1478 = vst [vmem:[%s255 + $0x54] sm:$0xf] %v1350
        %1479 = vst [vmem:[%s255 + $0x58] sm:$0xf] %v1351
        %1480 = vst [vmem:[%s255 + $0x5c] sm:$0xf] %v1352
        %1481 = vst [vmem:[%s255 + $0x60] sm:$0xf] %v1353
        %1482 = vst [vmem:[%s255 + $0x64] sm:$0xf] %v1354
        %1483 = vst [vmem:[%s255 + $0x68] sm:$0xf] %v1355
        %1484 = vst [vmem:[%s255 + $0x6c] sm:$0xf] %v1356
        %1485 = vst [vmem:[%s255 + $0x70] sm:$0xf] %v1357
        %1486 = vst [vmem:[%s255 + $0x74] sm:$0xf] %v1358
        %1487 = vst [vmem:[%s255 + $0x78] sm:$0xf] %v1359
        %1488 = vst [vmem:[%s255 + $0x7c] sm:$0xf] %v1360
        %1489 = vst [vmem:[%s255 + $0x80] sm:$0xf] %v1361
        %1490 = vst [vmem:[%s255 + $0x84] sm:$0xf] %v1362
        %1491 = vst [vmem:[%s255 + $0x88] sm:$0xf] %v1363
        %1492 = vst [vmem:[%s255 + $0x8c] sm:$0xf] %v1364
        %1493 = vst [vmem:[%s255 + $0x90] sm:$0xf] %v1365
        %1494 = vst [vmem:[%s255 + $0x94] sm:$0xf] %v1366
        %1495 = vst [vmem:[%s255 + $0x98] sm:$0xf] %v1367
        %1496 = vst [vmem:[%s255 + $0x9c] sm:$0xf] %v1368
        %1497 = vst [vmem:[%s255 + $0xa0] sm:$0xf] %v1369
        %1498 = vst [vmem:[%s255 + $0xa4] sm:$0xf] %v1370
        %1499 = vst [vmem:[%s255 + $0xa8] sm:$0xf] %v1371
        %1500 = vst [vmem:[%s255 + $0xac] sm:$0xf] %v1372
        %1501 = vst [vmem:[%s255 + $0xb0] sm:$0xf] %v1373
        %1502 = vst [vmem:[%s255 + $0xb4] sm:$0xf] %v1374
        %1503 = vst [vmem:[%s255 + $0xb8] sm:$0xf] %v1375
        %1504 = vst [vmem:[%s255 + $0xbc] sm:$0xf] %v1376
        %1505 = vst [vmem:[%s255 + $0xc0] sm:$0xf] %v1377
        %1506 = vst [vmem:[%s255 + $0xc4] sm:$0xf] %v1378
        %1507 = vst [vmem:[%s255 + $0xc8] sm:$0xf] %v1379
        %1508 = vst [vmem:[%s255 + $0xcc] sm:$0xf] %v1380
        %1509 = vst [vmem:[%s255 + $0xd0] sm:$0xf] %v1381
        %1510 = vst [vmem:[%s255 + $0xd4] sm:$0xf] %v1382
        %1511 = vst [vmem:[%s255 + $0xd8] sm:$0xf] %v1383
        %1512 = vst [vmem:[%s255 + $0xdc] sm:$0xf] %v1384
        %1513 = vst [vmem:[%s255 + $0xe0] sm:$0xf] %v1385
        %1514 = vst [vmem:[%s255 + $0xe4] sm:$0xf] %v1386
        %1515 = vst [vmem:[%s255 + $0xe8] sm:$0xf] %v1387
        %1516 = vst [vmem:[%s255 + $0xec] sm:$0xf] %v1388
        %1517 = vst [vmem:[%s255 + $0xf0] sm:$0xf] %v1389
        %1518 = vst [vmem:[%s255 + $0xf4] sm:$0xf] %v1390
        %1519 = vst [vmem:[%s255 + $0xf8] sm:$0xf] %v1391
        %1520 = vst [vmem:[%s255 + $0xfc] sm:$0xf] %v1392
        %v1521 = vadd.f32 %v1137, %v1138
        %v1522 = vadd.f32 %v1521, %v1139
        %v1523 = vadd.f32 %v1522, %v1140
        %v1524 = vadd.f32 %v1523, %v1141
        %v1525 = vadd.f32 %v1524, %v1142
        %v1526 = vadd.f32 %v1525, %v1143
        %v1527 = vadd.f32 %v1526, %v1144
        %v1528 = vadd.f32 %v1527, %v1145
        %v1529 = vadd.f32 %v1528, %v1146
        %v1530 = vadd.f32 %v1529, %v1147
        %v1531 = vadd.f32 %v1530, %v1148
        %v1532 = vadd.f32 %v1531, %v1149
        %v1533 = vadd.f32 %v1532, %v1150
        %v1534 = vadd.f32 %v1533, %v1151
        %v1535 = vadd.f32 %v1534, %v1152
        %v1536 = vadd.f32 %v1535, %v1153
        %v1537 = vadd.f32 %v1536, %v1154
        %v1538 = vadd.f32 %v1537, %v1155
        %v1539 = vadd.f32 %v1538, %v1156
        %v1540 = vadd.f32 %v1539, %v1157
        %v1541 = vadd.f32 %v1540, %v1158
        %v1542 = vadd.f32 %v1541, %v1159
        %v1543 = vadd.f32 %v1542, %v1160
        %v1544 = vadd.f32 %v1543, %v1161
        %v1545 = vadd.f32 %v1544, %v1162
        %v1546 = vadd.f32 %v1545, %v1163
        %v1547 = vadd.f32 %v1546, %v1164
        %v1548 = vadd.f32 %v1547, %v1165
        %v1549 = vadd.f32 %v1548, %v1166
        %v1550 = vadd.f32 %v1549, %v1167
        %v1551 = vadd.f32 %v1550, %v1168
        %v1552 = vadd.f32 %v1551, %v1169
        %v1553 = vadd.f32 %v1552, %v1170
        %v1554 = vadd.f32 %v1553, %v1171
        %v1555 = vadd.f32 %v1554, %v1172
        %v1556 = vadd.f32 %v1555, %v1173
        %v1557 = vadd.f32 %v1556, %v1174
        %v1558 = vadd.f32 %v1557, %v1175
        %v1559 = vadd.f32 %v1558, %v1176
        %v1560 = vadd.f32 %v1559, %v1177
        %v1561 = vadd.f32 %v1560, %v1178
        %v1562 = vadd.f32 %v1561, %v1179
        %v1563 = vadd.f32 %v1562, %v1180
        %v1564 = vadd.f32 %v1563, %v1181
        %v1565 = vadd.f32 %v1564, %v1182
        %v1566 = vadd.f32 %v1565, %v1183
        %v1567 = vadd.f32 %v1566, %v1184
        %v1568 = vadd.f32 %v1567, %v1185
        %v1569 = vadd.f32 %v1568, %v1186
        %v1570 = vadd.f32 %v1569, %v1187
        %v1571 = vadd.f32 %v1570, %v1188
        %v1572 = vadd.f32 %v1571, %v1189
        %v1573 = vadd.f32 %v1572, %v1190
        %v1574 = vadd.f32 %v1573, %v1191
        %v1575 = vadd.f32 %v1574, %v1192
        %v1576 = vadd.f32 %v1575, %v1193
        %v1577 = vadd.f32 %v1576, %v1194
        %v1578 = vadd.f32 %v1577, %v1195
        %v1579 = vadd.f32 %v1578, %v1196
        %v1580 = vadd.f32 %v1579, %v1197
        %v1581 = vadd.f32 %v1580, %v1198
        %v1582 = vadd.f32 %v1581, %v1199
        %v1583 = vadd.f32 %v1582, %v1200
        %v1584 = vrot.slane %v1583, 4
        %v1585 = vadd.f32 %v1583, %v1584
        %v1586 = vrot.slane %v1585, 2
        %v1587 = vadd.f32 %v1585, %v1586
        %v1588 = vrot.slane %v1587, 1
        %v1589 = vadd.f32 %v1587, %v1588
        %1590 = vst [vmem:[%s263] sm:$0x1] %v1589
        %v1591 = vmul.f32 %v1137, %v1137
        %v1592 = vmul.f32 %v1138, %v1138
        %v1593 = vmul.f32 %v1139, %v1139
        %v1594 = vmul.f32 %v1140, %v1140
        %v1595 = vmul.f32 %v1141, %v1141
        %v1596 = vmul.f32 %v1142, %v1142
        %v1597 = vmul.f32 %v1143, %v1143
        %v1598 = vmul.f32 %v1144, %v1144
        %v1599 = vmul.f32 %v1145, %v1145
        %v1600 = vmul.f32 %v1146, %v1146
        %v1601 = vmul.f32 %v1147, %v1147
        %v1602 = vmul.f32 %v1148, %v1148
        %v1603 = vmul.f32 %v1149, %v1149
        %v1604 = vmul.f32 %v1150, %v1150
        %v1605 = vmul.f32 %v1151, %v1151
        %v1606 = vmul.f32 %v1152, %v1152
        %v1607 = vmul.f32 %v1153, %v1153
        %v1608 = vmul.f32 %v1154, %v1154
        %v1609 = vmul.f32 %v1155, %v1155
        %v1610 = vmul.f32 %v1156, %v1156
        %v1611 = vmul.f32 %v1157, %v1157
        %v1612 = vmul.f32 %v1158, %v1158
        %v1613 = vmul.f32 %v1159, %v1159
        %v1614 = vmul.f32 %v1160, %v1160
        %v1615 = vmul.f32 %v1161, %v1161
        %v1616 = vmul.f32 %v1162, %v1162
        %v1617 = vmul.f32 %v1163, %v1163
        %v1618 = vmul.f32 %v1164, %v1164
        %v1619 = vmul.f32 %v1165, %v1165
        %v1620 = vmul.f32 %v1166, %v1166
        %v1621 = vmul.f32 %v1167, %v1167
        %v1622 = vmul.f32 %v1168, %v1168
        %v1623 = vmul.f32 %v1169, %v1169
        %v1624 = vmul.f32 %v1170, %v1170
        %v1625 = vmul.f32 %v1171, %v1171
        %v1626 = vmul.f32 %v1172, %v1172
        %v1627 = vmul.f32 %v1173, %v1173
        %v1628 = vmul.f32 %v1174, %v1174
        %v1629 = vmul.f32 %v1175, %v1175
        %v1630 = vmul.f32 %v1176, %v1176
        %v1631 = vmul.f32 %v1177, %v1177
        %v1632 = vmul.f32 %v1178, %v1178
        %v1633 = vmul.f32 %v1179, %v1179
        %v1634 = vmul.f32 %v1180, %v1180
        %v1635 = vmul.f32 %v1181, %v1181
        %v1636 = vmul.f32 %v1182, %v1182
        %v1637 = vmul.f32 %v1183, %v1183
        %v1638 = vmul.f32 %v1184, %v1184
        %v1639 = vmul.f32 %v1185, %v1185
        %v1640 = vmul.f32 %v1186, %v1186
        %v1641 = vmul.f32 %v1187, %v1187
        %v1642 = vmul.f32 %v1188, %v1188
        %v1643 = vmul.f32 %v1189, %v1189
        %v1644 = vmul.f32 %v1190, %v1190
        %v1645 = vmul.f32 %v1191, %v1191
        %v1646 = vmul.f32 %v1192, %v1192
        %v1647 = vmul.f32 %v1193, %v1193
        %v1648 = vmul.f32 %v1194, %v1194
        %v1649 = vmul.f32 %v1195, %v1195
        %v1650 = vmul.f32 %v1196, %v1196
        %v1651 = vmul.f32 %v1197, %v1197
        %v1652 = vmul.f32 %v1198, %v1198
        %v1653 = vmul.f32 %v1199, %v1199
        %v1654 = vmul.f32 %v1200, %v1200
        %v1655 = vadd.f32 %v1591, %v1592
        %v1656 = vadd.f32 %v1655, %v1593
        %v1657 = vadd.f32 %v1656, %v1594
        %v1658 = vadd.f32 %v1657, %v1595
        %v1659 = vadd.f32 %v1658, %v1596
        %v1660 = vadd.f32 %v1659, %v1597
        %v1661 = vadd.f32 %v1660, %v1598
        %v1662 = vadd.f32 %v1661, %v1599
        %v1663 = vadd.f32 %v1662, %v1600
        %v1664 = vadd.f32 %v1663, %v1601
        %v1665 = vadd.f32 %v1664, %v1602
        %v1666 = vadd.f32 %v1665, %v1603
        %v1667 = vadd.f32 %v1666, %v1604
        %v1668 = vadd.f32 %v1667, %v1605
        %v1669 = vadd.f32 %v1668, %v1606
        %v1670 = vadd.f32 %v1669, %v1607
        %v1671 = vadd.f32 %v1670, %v1608
        %v1672 = vadd.f32 %v1671, %v1609
        %v1673 = vadd.f32 %v1672, %v1610
        %v1674 = vadd.f32 %v1673, %v1611
        %v1675 = vadd.f32 %v1674, %v1612
        %v1676 = vadd.f32 %v1675, %v1613
        %v1677 = vadd.f32 %v1676, %v1614
        %v1678 = vadd.f32 %v1677, %v1615
        %v1679 = vadd.f32 %v1678, %v1616
        %v1680 = vadd.f32 %v1679, %v1617
        %v1681 = vadd.f32 %v1680, %v1618
        %v1682 = vadd.f32 %v1681, %v1619
        %v1683 = vadd.f32 %v1682, %v1620
        %v1684 = vadd.f32 %v1683, %v1621
        %v1685 = vadd.f32 %v1684, %v1622
        %v1686 = vadd.f32 %v1685, %v1623
        %v1687 = vadd.f32 %v1686, %v1624
        %v1688 = vadd.f32 %v1687, %v1625
        %v1689 = vadd.f32 %v1688, %v1626
        %v1690 = vadd.f32 %v1689, %v1627
        %v1691 = vadd.f32 %v1690, %v1628
        %v1692 = vadd.f32 %v1691, %v1629
        %v1693 = vadd.f32 %v1692, %v1630
        %v1694 = vadd.f32 %v1693, %v1631
        %v1695 = vadd.f32 %v1694, %v1632
        %v1696 = vadd.f32 %v1695, %v1633
        %v1697 = vadd.f32 %v1696, %v1634
        %v1698 = vadd.f32 %v1697, %v1635
        %v1699 = vadd.f32 %v1698, %v1636
        %v1700 = vadd.f32 %v1699, %v1637
        %v1701 = vadd.f32 %v1700, %v1638
        %v1702 = vadd.f32 %v1701, %v1639
        %v1703 = vadd.f32 %v1702, %v1640
        %v1704 = vadd.f32 %v1703, %v1641
        %v1705 = vadd.f32 %v1704, %v1642
        %v1706 = vadd.f32 %v1705, %v1643
        %v1707 = vadd.f32 %v1706, %v1644
        %v1708 = vadd.f32 %v1707, %v1645
        %v1709 = vadd.f32 %v1708, %v1646
        %v1710 = vadd.f32 %v1709, %v1647
        %v1711 = vadd.f32 %v1710, %v1648
        %v1712 = vadd.f32 %v1711, %v1649
        %v1713 = vadd.f32 %v1712, %v1650
        %v1714 = vadd.f32 %v1713, %v1651
        %v1715 = vadd.f32 %v1714, %v1652
        %v1716 = vadd.f32 %v1715, %v1653
        %v1717 = vadd.f32 %v1716, %v1654
        %v1718 = vrot.slane %v1717, 4
        %v1719 = vadd.f32 %v1717, %v1718
        %v1720 = vrot.slane %v1719, 2
        %v1721 = vadd.f32 %v1719, %v1720
        %v1722 = vrot.slane %v1721, 1
        %v1723 = vadd.f32 %v1721, %v1722
        %1724 = vst [vmem:[%s263 + $0x1] sm:$0x1] %v1723
      $region36: #{conv_bn_mish_nhwc.2} parent=27 // pred_fallthru
        _
      %s1725 = smul.u32 64, %s20
      %p1726 = scmp.lt.s32.totalorder %s1725, 255
      %s1727 = scalar_select %p1726, %s1725, 255
      %p1728 = scmp.lt.s32.totalorder %s21, 0
      %s1729 = scalar_select %p1728, %s21, 0
      %s1730 = sadd.s32 %s1729, %s1727
      %s1731 = smul.addr %s1730, 4
      %s1732 = scalar_lea.vmem %s2, %s1731
      %p1733 = scmp.lt.s32.totalorder %s20, 3
      %s1734 = scalar_select %p1733, %s20, 3
      %p1735 = scmp.lt.s32.totalorder %s21, 0
      %s1736 = scalar_select %p1735, %s21, 0
      %s1737 = sadd.s32 %s1736, %s1734
      %s1738 = smul.addr %s1737, 8
      %s1739 = scalar_lea.vmem %s3, %s1738
      // Predicated region
      $region37: #{conv_bn_mish_nhwc.2} parent=27 // pred_check
        %p1740 = pneg %p110
      $region38: #{conv_bn_mish_nhwc.2} parent=27 // pred_check_branch
        %1742 = sbr.rel (%p1740) target = $region40
      $region39: #{conv_bn_mish_nhwc.2} parent=27 // pred_region
        %s1743 = smul.u32 64, %s20
      $region40: #{conv_bn_mish_nhwc.2} parent=27 // pred_fallthru
        _
      // Predicated region
      $region41: #{conv_bn_mish_nhwc.2} parent=27 // pred_check
        %p1744 = pneg %p138
      $region42: #{conv_bn_mish_nhwc.2} parent=27 // pred_check_branch
        %1746 = sbr.rel (%p1744) target = $region44
      $region43: #{conv_bn_mish_nhwc.2} parent=27 // pred_region
        _
      $region44: #{conv_bn_mish_nhwc.2} parent=27 // pred_fallthru
        _
    $region28: #{conv_bn_mish_nhwc.2} parent=5 // pred_fallthru
      _
    %p1747 = scmp.le.s32.totalorder 2, %s10
    // Predicated region
    $region45: #{conv_bn_mish_nhwc.2} parent=5 // pred_check
      %p1748 = pneg %p1747
    $region46: #{conv_bn_mish_nhwc.2} parent=5 // pred_check_branch
      %1750 = sbr.rel (%p1748) target = $region48
    $region47: #{conv_bn_mish_nhwc.2} parent=5 // pred_region
      %s1751 = ssub.s32 %s10, 2
      // Predicated region
      $region49: #{conv_bn_mish_nhwc.2} parent=47 // pred_check
        %p1752 = pneg %p116
      $region50: #{conv_bn_mish_nhwc.2} parent=47 // pred_check_branch
        %1754 = sbr.rel (%p1752) target = $region52
      $region51: #{conv_bn_mish_nhwc.2} parent=47 // pred_region
        %s1755 = smul.u32 64, %s23
        %p1756 = scmp.lt.s32.totalorder %s1755, 255
        %s1757 = scalar_select %p1756, %s1755, 255
        %p1758 = scmp.lt.s32.totalorder %s24, 0
        %s1759 = scalar_select %p1758, %s24, 0
        %s1760 = sadd.s32 %s1759, %s1757
        %s1761 = smul.addr %s1760, 4
        %s1762 = scalar_lea.vmem %s2, %s1761
      $region52: #{conv_bn_mish_nhwc.2} parent=47 // pred_fallthru
        _
      // Predicated region
      $region53: #{conv_bn_mish_nhwc.2} parent=47 // pred_check
        %p1763 = pneg %p144
      $region54: #{conv_bn_mish_nhwc.2} parent=47 // pred_check_branch
        %1765 = sbr.rel (%p1763) target = $region56
      $region55: #{conv_bn_mish_nhwc.2} parent=47 // pred_region
        %p1766 = scmp.lt.s32.totalorder %s23, 3
        %s1767 = scalar_select %p1766, %s23, 3
        %p1768 = scmp.lt.s32.totalorder %s24, 0
        %s1769 = scalar_select %p1768, %s24, 0
        %s1770 = sadd.s32 %s1769, %s1767
        %s1771 = smul.addr %s1770, 8
        %s1772 = scalar_lea.vmem %s3, %s1771
      $region56: #{conv_bn_mish_nhwc.2} parent=47 // pred_fallthru
        _
    $region48: #{conv_bn_mish_nhwc.2} parent=5 // pred_fallthru
      _
  $region6: #{conv_bn_mish_nhwc.2} parent=0 // loop_footer
    %s14 = sadd.s32 1, %s10
  $region7: #{conv_bn_mish_nhwc.2} parent=0 // loop_footer_branch
    %9 = sbr.rel target = $region3
  $region8: #{conv_bn_mish_nhwc.2} parent=0 // loop_exit
    _

// kernel: conv_bn_mish_nhwc.3
$region0: #{conv_bn_mish_nhwc.3}
  #allocation0 [shape = 'u32[]', space=smem, size = 0x4, offset = 0x4, fixed_abs, tag = 'smem constant byte address 0x4 - core index']
  #allocation1 [shape = 'u32[144,128]{1,0:T(1,128)}', space=vmem, size = 0x12000, scoped, tag = 'internal scratch']
  %s0 = inlined_call_operand.vmem [shape: bf16[2048,128], index: 0, kind: input, shape index: {}]
  %s1 = inlined_call_operand.vmem [shape: f32[8,128], index: 1, kind: input, shape index: {}]
  %s2 = inlined_call_operand.vmem [shape: f32[8,128], index: 2, kind: input, shape index: {}]
  %s3 = inlined_call_operand.hbm [shape: bf16[2048,128], index: 3, kind: output, shape index: {}]
  %s4 = sld [smem:[#allocation0]]
  $region22: #{conv_bn_mish_nhwc.3} parent=0
    _
  %s6 = ssub.s32 1, %s4
  %s7 = scalar_select 0, %s6, %s4
  $region1: #{conv_bn_mish_nhwc.3} parent=0
    #allocation2 [shape = 'u8[524288]{0}', space=vmem, size = 0x80000, scoped, tag = 'output window, operand 0, single buffered']
    #allocation3 [shape = 's32[1]{0}', space=sflag, size = 0x4, scoped, tag = 'scoped memory for conv_bn_mish_nhwc.3']
    %8 = vsyncpa [#allocation3], 0
    // Predicated region
    $region2: #{conv_bn_mish_nhwc.3} parent=1 // pred_check
      _
    $region3: #{conv_bn_mish_nhwc.3} parent=1 // pred_check_branch
      %10 = sbr.rel (0) target = $region5
    $region4: #{conv_bn_mish_nhwc.3} parent=1 // pred_region
      _
    $region5: #{conv_bn_mish_nhwc.3} parent=1 // pred_fallthru
      _
    // Predicated region
    $region6: #{conv_bn_mish_nhwc.3} parent=1 // pred_check
      _
    $region7: #{conv_bn_mish_nhwc.3} parent=1 // pred_check_branch
      %12 = sbr.rel (0) target = $region9
    $region8: #{conv_bn_mish_nhwc.3} parent=1 // pred_region
      _
    $region9: #{conv_bn_mish_nhwc.3} parent=1 // pred_fallthru
      _
    // Predicated region
    $region10: #{conv_bn_mish_nhwc.3} parent=1 // pred_check
      _
    $region11: #{conv_bn_mish_nhwc.3} parent=1 // pred_check_branch
      %14 = sbr.rel (0) target = $region13
    $region12: #{conv_bn_mish_nhwc.3} parent=1 // pred_region
      _
    $region13: #{conv_bn_mish_nhwc.3} parent=1 // pred_fallthru
      _
    %v15 = vld [vmem:[%s0] sm:$0xf]
    %v16 = vld [vmem:[%s0 + $0x4] sm:$0xf]
    %v17 = vld [vmem:[%s0 + $0x8] sm:$0xf]
    %v18 = vld [vmem:[%s0 + $0xc] sm:$0xf]
    %v19 = vld [vmem:[%s0 + $0x10] sm:$0xf]
    %v20 = vld [vmem:[%s0 + $0x14] sm:$0xf]
    %v21 = vld [vmem:[%s0 + $0x18] sm:$0xf]
    %v22 = vld [vmem:[%s0 + $0x1c] sm:$0xf]
    %v23 = vld [vmem:[%s0 + $0x20] sm:$0xf]
    %v24 = vld [vmem:[%s0 + $0x24] sm:$0xf]
    %v25 = vld [vmem:[%s0 + $0x28] sm:$0xf]
    %v26 = vld [vmem:[%s0 + $0x2c] sm:$0xf]
    %v27 = vld [vmem:[%s0 + $0x30] sm:$0xf]
    %v28 = vld [vmem:[%s0 + $0x34] sm:$0xf]
    %v29 = vld [vmem:[%s0 + $0x38] sm:$0xf]
    %v30 = vld [vmem:[%s0 + $0x3c] sm:$0xf]
    %v31 = vld [vmem:[%s0 + $0x40] sm:$0xf]
    %v32 = vld [vmem:[%s0 + $0x44] sm:$0xf]
    %v33 = vld [vmem:[%s0 + $0x48] sm:$0xf]
    %v34 = vld [vmem:[%s0 + $0x4c] sm:$0xf]
    %v35 = vld [vmem:[%s0 + $0x50] sm:$0xf]
    %v36 = vld [vmem:[%s0 + $0x54] sm:$0xf]
    %v37 = vld [vmem:[%s0 + $0x58] sm:$0xf]
    %v38 = vld [vmem:[%s0 + $0x5c] sm:$0xf]
    %v39 = vld [vmem:[%s0 + $0x60] sm:$0xf]
    %v40 = vld [vmem:[%s0 + $0x64] sm:$0xf]
    %v41 = vld [vmem:[%s0 + $0x68] sm:$0xf]
    %v42 = vld [vmem:[%s0 + $0x6c] sm:$0xf]
    %v43 = vld [vmem:[%s0 + $0x70] sm:$0xf]
    %v44 = vld [vmem:[%s0 + $0x74] sm:$0xf]
    %v45 = vld [vmem:[%s0 + $0x78] sm:$0xf]
    %v46 = vld [vmem:[%s0 + $0x7c] sm:$0xf]
    %v47 = vld [vmem:[%s0 + $0x80] sm:$0xf]
    %v48 = vld [vmem:[%s0 + $0x84] sm:$0xf]
    %v49 = vld [vmem:[%s0 + $0x88] sm:$0xf]
    %v50 = vld [vmem:[%s0 + $0x8c] sm:$0xf]
    %v51 = vld [vmem:[%s0 + $0x90] sm:$0xf]
    %v52 = vld [vmem:[%s0 + $0x94] sm:$0xf]
    %v53 = vld [vmem:[%s0 + $0x98] sm:$0xf]
    %v54 = vld [vmem:[%s0 + $0x9c] sm:$0xf]
    %v55 = vld [vmem:[%s0 + $0xa0] sm:$0xf]
    %v56 = vld [vmem:[%s0 + $0xa4] sm:$0xf]
    %v57 = vld [vmem:[%s0 + $0xa8] sm:$0xf]
    %v58 = vld [vmem:[%s0 + $0xac] sm:$0xf]
    %v59 = vld [vmem:[%s0 + $0xb0] sm:$0xf]
    %v60 = vld [vmem:[%s0 + $0xb4] sm:$0xf]
    %v61 = vld [vmem:[%s0 + $0xb8] sm:$0xf]
    %v62 = vld [vmem:[%s0 + $0xbc] sm:$0xf]
    %v63 = vld [vmem:[%s0 + $0xc0] sm:$0xf]
    %v64 = vld [vmem:[%s0 + $0xc4] sm:$0xf]
    %v65 = vld [vmem:[%s0 + $0xc8] sm:$0xf]
    %v66 = vld [vmem:[%s0 + $0xcc] sm:$0xf]
    %v67 = vld [vmem:[%s0 + $0xd0] sm:$0xf]
    %v68 = vld [vmem:[%s0 + $0xd4] sm:$0xf]
    %v69 = vld [vmem:[%s0 + $0xd8] sm:$0xf]
    %v70 = vld [vmem:[%s0 + $0xdc] sm:$0xf]
    %v71 = vld [vmem:[%s0 + $0xe0] sm:$0xf]
    %v72 = vld [vmem:[%s0 + $0xe4] sm:$0xf]
    %v73 = vld [vmem:[%s0 + $0xe8] sm:$0xf]
    %v74 = vld [vmem:[%s0 + $0xec] sm:$0xf]
    %v75 = vld [vmem:[%s0 + $0xf0] sm:$0xf]
    %v76 = vld [vmem:[%s0 + $0xf4] sm:$0xf]
    %v77 = vld [vmem:[%s0 + $0xf8] sm:$0xf]
    %v78 = vld [vmem:[%s0 + $0xfc] sm:$0xf]
    %v79 = vld [vmem:[%s0 + $0x100] sm:$0xf]
    %v80 = vld [vmem:[%s0 + $0x104] sm:$0xf]
    %v81 = vld [vmem:[%s0 + $0x108] sm:$0xf]
    %v82 = vld [vmem:[%s0 + $0x10c] sm:$0xf]
    %v83 = vld [vmem:[%s0 + $0x110] sm:$0xf]
    %v84 = vld [vmem:[%s0 + $0x114] sm:$0xf]
    %v85 = vld [vmem:[%s0 + $0x118] sm:$0xf]
    %v86 = vld [vmem:[%s0 + $0x11c] sm:$0xf]
    %v87 = vld [vmem:[%s0 + $0x120] sm:$0xf]
    %v88 = vld [vmem:[%s0 + $0x124] sm:$0xf]
    %v89 = vld [vmem:[%s0 + $0x128] sm:$0xf]
    %v90 = vld [vmem:[%s0 + $0x12c] sm:$0xf]
    %v91 = vld [vmem:[%s0 + $0x130] sm:$0xf]
    %v92 = vld [vmem:[%s0 + $0x134] sm:$0xf]
    %v93 = vld [vmem:[%s0 + $0x138] sm:$0xf]
    %v94 = vld [vmem:[%s0 + $0x13c] sm:$0xf]
    %v95 = vld [vmem:[%s0 + $0x140] sm:$0xf]
    %v96 = vld [vmem:[%s0 + $0x144] sm:$0xf]
    %v97 = vld [vmem:[%s0 + $0x148] sm:$0xf]
    %v98 = vld [vmem:[%s0 + $0x14c] sm:$0xf]
    %v99 = vld [vmem:[%s0 + $0x150] sm:$0xf]
    %v100 = vld [vmem:[%s0 + $0x154] sm:$0xf]
    %v101 = vld [vmem:[%s0 + $0x158] sm:$0xf]
    %v102 = vld [vmem:[%s0 + $0x15c] sm:$0xf]
    %v103 = vld [vmem:[%s0 + $0x160] sm:$0xf]
    %v104 = vld [vmem:[%s0 + $0x164] sm:$0xf]
    %v105 = vld [vmem:[%s0 + $0x168] sm:$0xf]
    %v106 = vld [vmem:[%s0 + $0x16c] sm:$0xf]
    %v107 = vld [vmem:[%s0 + $0x170] sm:$0xf]
    %v108 = vld [vmem:[%s0 + $0x174] sm:$0xf]
    %v109 = vld [vmem:[%s0 + $0x178] sm:$0xf]
    %v110 = vld [vmem:[%s0 + $0x17c] sm:$0xf]
    %v111 = vld [vmem:[%s0 + $0x180] sm:$0xf]
    %v112 = vld [vmem:[%s0 + $0x184] sm:$0xf]
    %v113 = vld [vmem:[%s0 + $0x188] sm:$0xf]
    %v114 = vld [vmem:[%s0 + $0x18c] sm:$0xf]
    %v115 = vld [vmem:[%s0 + $0x190] sm:$0xf]
    %v116 = vld [vmem:[%s0 + $0x194] sm:$0xf]
    %v117 = vld [vmem:[%s0 + $0x198] sm:$0xf]
    %v118 = vld [vmem:[%s0 + $0x19c] sm:$0xf]
    %v119 = vld [vmem:[%s0 + $0x1a0] sm:$0xf]
    %v120 = vld [vmem:[%s0 + $0x1a4] sm:$0xf]
    %v121 = vld [vmem:[%s0 + $0x1a8] sm:$0xf]
    %v122 = vld [vmem:[%s0 + $0x1ac] sm:$0xf]
    %v123 = vld [vmem:[%s0 + $0x1b0] sm:$0xf]
    %v124 = vld [vmem:[%s0 + $0x1b4] sm:$0xf]
    %v125 = vld [vmem:[%s0 + $0x1b8] sm:$0xf]
    %v126 = vld [vmem:[%s0 + $0x1bc] sm:$0xf]
    %v127 = vld [vmem:[%s0 + $0x1c0] sm:$0xf]
    %v128 = vld [vmem:[%s0 + $0x1c4] sm:$0xf]
    %v129 = vld [vmem:[%s0 + $0x1c8] sm:$0xf]
    %v130 = vld [vmem:[%s0 + $0x1cc] sm:$0xf]
    %v131 = vld [vmem:[%s0 + $0x1d0] sm:$0xf]
    %v132 = vld [vmem:[%s0 + $0x1d4] sm:$0xf]
    %v133 = vld [vmem:[%s0 + $0x1d8] sm:$0xf]
    %v134 = vld [vmem:[%s0 + $0x1dc] sm:$0xf]
    %v135 = vld [vmem:[%s0 + $0x1e0] sm:$0xf]
    %v136 = vld [vmem:[%s0 + $0x1e4] sm:$0xf]
    %v137 = vld [vmem:[%s0 + $0x1e8] sm:$0xf]
    %v138 = vld [vmem:[%s0 + $0x1ec] sm:$0xf]
    %v139 = vld [vmem:[%s0 + $0x1f0] sm:$0xf]
    %v140 = vld [vmem:[%s0 + $0x1f4] sm:$0xf]
    %v141 = vld [vmem:[%s0 + $0x1f8] sm:$0xf]
    %v142 = vld [vmem:[%s0 + $0x1fc] sm:$0xf]
    %v143 = vld [vmem:[%s0 + $0x200] sm:$0xf]
    %v144 = vld [vmem:[%s0 + $0x204] sm:$0xf]
    %v145 = vld [vmem:[%s0 + $0x208] sm:$0xf]
    %v146 = vld [vmem:[%s0 + $0x20c] sm:$0xf]
    %v147 = vld [vmem:[%s0 + $0x210] sm:$0xf]
    %v148 = vld [vmem:[%s0 + $0x214] sm:$0xf]
    %v149 = vld [vmem:[%s0 + $0x218] sm:$0xf]
    %v150 = vld [vmem:[%s0 + $0x21c] sm:$0xf]
    %v151 = vld [vmem:[%s0 + $0x220] sm:$0xf]
    %v152 = vld [vmem:[%s0 + $0x224] sm:$0xf]
    %v153 = vld [vmem:[%s0 + $0x228] sm:$0xf]
    %v154 = vld [vmem:[%s0 + $0x22c] sm:$0xf]
    %v155 = vld [vmem:[%s0 + $0x230] sm:$0xf]
    %v156 = vld [vmem:[%s0 + $0x234] sm:$0xf]
    %v157 = vld [vmem:[%s0 + $0x238] sm:$0xf]
    %v158 = vld [vmem:[%s0 + $0x23c] sm:$0xf]
    %v159 = vld [vmem:[%s0 + $0x240] sm:$0xf]
    %v160 = vld [vmem:[%s0 + $0x244] sm:$0xf]
    %v161 = vld [vmem:[%s0 + $0x248] sm:$0xf]
    %v162 = vld [vmem:[%s0 + $0x24c] sm:$0xf]
    %v163 = vld [vmem:[%s0 + $0x250] sm:$0xf]
    %v164 = vld [vmem:[%s0 + $0x254] sm:$0xf]
    %v165 = vld [vmem:[%s0 + $0x258] sm:$0xf]
    %v166 = vld [vmem:[%s0 + $0x25c] sm:$0xf]
    %v167 = vld [vmem:[%s0 + $0x260] sm:$0xf]
    %v168 = vld [vmem:[%s0 + $0x264] sm:$0xf]
    %v169 = vld [vmem:[%s0 + $0x268] sm:$0xf]
    %v170 = vld [vmem:[%s0 + $0x26c] sm:$0xf]
    %v171 = vld [vmem:[%s0 + $0x270] sm:$0xf]
    %v172 = vld [vmem:[%s0 + $0x274] sm:$0xf]
    %v173 = vld [vmem:[%s0 + $0x278] sm:$0xf]
    %v174 = vld [vmem:[%s0 + $0x27c] sm:$0xf]
    %v175 = vld [vmem:[%s0 + $0x280] sm:$0xf]
    %v176 = vld [vmem:[%s0 + $0x284] sm:$0xf]
    %v177 = vld [vmem:[%s0 + $0x288] sm:$0xf]
    %v178 = vld [vmem:[%s0 + $0x28c] sm:$0xf]
    %v179 = vld [vmem:[%s0 + $0x290] sm:$0xf]
    %v180 = vld [vmem:[%s0 + $0x294] sm:$0xf]
    %v181 = vld [vmem:[%s0 + $0x298] sm:$0xf]
    %v182 = vld [vmem:[%s0 + $0x29c] sm:$0xf]
    %v183 = vld [vmem:[%s0 + $0x2a0] sm:$0xf]
    %v184 = vld [vmem:[%s0 + $0x2a4] sm:$0xf]
    %v185 = vld [vmem:[%s0 + $0x2a8] sm:$0xf]
    %v186 = vld [vmem:[%s0 + $0x2ac] sm:$0xf]
    %v187 = vld [vmem:[%s0 + $0x2b0] sm:$0xf]
    %v188 = vld [vmem:[%s0 + $0x2b4] sm:$0xf]
    %v189 = vld [vmem:[%s0 + $0x2b8] sm:$0xf]
    %v190 = vld [vmem:[%s0 + $0x2bc] sm:$0xf]
    %v191 = vld [vmem:[%s0 + $0x2c0] sm:$0xf]
    %v192 = vld [vmem:[%s0 + $0x2c4] sm:$0xf]
    %v193 = vld [vmem:[%s0 + $0x2c8] sm:$0xf]
    %v194 = vld [vmem:[%s0 + $0x2cc] sm:$0xf]
    %v195 = vld [vmem:[%s0 + $0x2d0] sm:$0xf]
    %v196 = vld [vmem:[%s0 + $0x2d4] sm:$0xf]
    %v197 = vld [vmem:[%s0 + $0x2d8] sm:$0xf]
    %v198 = vld [vmem:[%s0 + $0x2dc] sm:$0xf]
    %v199 = vld [vmem:[%s0 + $0x2e0] sm:$0xf]
    %v200 = vld [vmem:[%s0 + $0x2e4] sm:$0xf]
    %v201 = vld [vmem:[%s0 + $0x2e8] sm:$0xf]
    %v202 = vld [vmem:[%s0 + $0x2ec] sm:$0xf]
    %v203 = vld [vmem:[%s0 + $0x2f0] sm:$0xf]
    %v204 = vld [vmem:[%s0 + $0x2f4] sm:$0xf]
    %v205 = vld [vmem:[%s0 + $0x2f8] sm:$0xf]
    %v206 = vld [vmem:[%s0 + $0x2fc] sm:$0xf]
    %v207 = vld [vmem:[%s0 + $0x300] sm:$0xf]
    %v208 = vld [vmem:[%s0 + $0x304] sm:$0xf]
    %v209 = vld [vmem:[%s0 + $0x308] sm:$0xf]
    %v210 = vld [vmem:[%s0 + $0x30c] sm:$0xf]
    %v211 = vld [vmem:[%s0 + $0x310] sm:$0xf]
    %v212 = vld [vmem:[%s0 + $0x314] sm:$0xf]
    %v213 = vld [vmem:[%s0 + $0x318] sm:$0xf]
    %v214 = vld [vmem:[%s0 + $0x31c] sm:$0xf]
    %v215 = vld [vmem:[%s0 + $0x320] sm:$0xf]
    %v216 = vld [vmem:[%s0 + $0x324] sm:$0xf]
    %v217 = vld [vmem:[%s0 + $0x328] sm:$0xf]
    %v218 = vld [vmem:[%s0 + $0x32c] sm:$0xf]
    %v219 = vld [vmem:[%s0 + $0x330] sm:$0xf]
    %v220 = vld [vmem:[%s0 + $0x334] sm:$0xf]
    %v221 = vld [vmem:[%s0 + $0x338] sm:$0xf]
    %v222 = vld [vmem:[%s0 + $0x33c] sm:$0xf]
    %v223 = vld [vmem:[%s0 + $0x340] sm:$0xf]
    %v224 = vld [vmem:[%s0 + $0x344] sm:$0xf]
    %v225 = vld [vmem:[%s0 + $0x348] sm:$0xf]
    %v226 = vld [vmem:[%s0 + $0x34c] sm:$0xf]
    %v227 = vld [vmem:[%s0 + $0x350] sm:$0xf]
    %v228 = vld [vmem:[%s0 + $0x354] sm:$0xf]
    %v229 = vld [vmem:[%s0 + $0x358] sm:$0xf]
    %v230 = vld [vmem:[%s0 + $0x35c] sm:$0xf]
    %v231 = vld [vmem:[%s0 + $0x360] sm:$0xf]
    %v232 = vld [vmem:[%s0 + $0x364] sm:$0xf]
    %v233 = vld [vmem:[%s0 + $0x368] sm:$0xf]
    %v234 = vld [vmem:[%s0 + $0x36c] sm:$0xf]
    %v235 = vld [vmem:[%s0 + $0x370] sm:$0xf]
    %v236 = vld [vmem:[%s0 + $0x374] sm:$0xf]
    %v237 = vld [vmem:[%s0 + $0x378] sm:$0xf]
    %v238 = vld [vmem:[%s0 + $0x37c] sm:$0xf]
    %v239 = vld [vmem:[%s0 + $0x380] sm:$0xf]
    %v240 = vld [vmem:[%s0 + $0x384] sm:$0xf]
    %v241 = vld [vmem:[%s0 + $0x388] sm:$0xf]
    %v242 = vld [vmem:[%s0 + $0x38c] sm:$0xf]
    %v243 = vld [vmem:[%s0 + $0x390] sm:$0xf]
    %v244 = vld [vmem:[%s0 + $0x394] sm:$0xf]
    %v245 = vld [vmem:[%s0 + $0x398] sm:$0xf]
    %v246 = vld [vmem:[%s0 + $0x39c] sm:$0xf]
    %v247 = vld [vmem:[%s0 + $0x3a0] sm:$0xf]
    %v248 = vld [vmem:[%s0 + $0x3a4] sm:$0xf]
    %v249 = vld [vmem:[%s0 + $0x3a8] sm:$0xf]
    %v250 = vld [vmem:[%s0 + $0x3ac] sm:$0xf]
    %v251 = vld [vmem:[%s0 + $0x3b0] sm:$0xf]
    %v252 = vld [vmem:[%s0 + $0x3b4] sm:$0xf]
    %v253 = vld [vmem:[%s0 + $0x3b8] sm:$0xf]
    %v254 = vld [vmem:[%s0 + $0x3bc] sm:$0xf]
    %v255 = vld [vmem:[%s0 + $0x3c0] sm:$0xf]
    %v256 = vld [vmem:[%s0 + $0x3c4] sm:$0xf]
    %v257 = vld [vmem:[%s0 + $0x3c8] sm:$0xf]
    %v258 = vld [vmem:[%s0 + $0x3cc] sm:$0xf]
    %v259 = vld [vmem:[%s0 + $0x3d0] sm:$0xf]
    %v260 = vld [vmem:[%s0 + $0x3d4] sm:$0xf]
    %v261 = vld [vmem:[%s0 + $0x3d8] sm:$0xf]
    %v262 = vld [vmem:[%s0 + $0x3dc] sm:$0xf]
    %v263 = vld [vmem:[%s0 + $0x3e0] sm:$0xf]
    %v264 = vld [vmem:[%s0 + $0x3e4] sm:$0xf]
    %v265 = vld [vmem:[%s0 + $0x3e8] sm:$0xf]
    %v266 = vld [vmem:[%s0 + $0x3ec] sm:$0xf]
    %v267 = vld [vmem:[%s0 + $0x3f0] sm:$0xf]
    %v268 = vld [vmem:[%s0 + $0x3f4] sm:$0xf]
    %v269 = vld [vmem:[%s0 + $0x3f8] sm:$0xf]
    %v270 = vld [vmem:[%s0 + $0x3fc] sm:$0xf]
    %v271 = vunpack.c.l.bf16 %v15
    %v272 = vunpack.c.l.bf16 %v16
    %v273 = vunpack.c.l.bf16 %v17
    %v274 = vunpack.c.l.bf16 %v18
    %v275 = vunpack.c.l.bf16 %v19
    %v276 = vunpack.c.l.bf16 %v20
    %v277 = vunpack.c.l.bf16 %v21
    %v278 = vunpack.c.l.bf16 %v22
    %v279 = vunpack.c.l.bf16 %v23
    %v280 = vunpack.c.l.bf16 %v24
    %v281 = vunpack.c.l.bf16 %v25
    %v282 = vunpack.c.l.bf16 %v26
    %v283 = vunpack.c.l.bf16 %v27
    %v284 = vunpack.c.l.bf16 %v28
    %v285 = vunpack.c.l.bf16 %v29
    %v286 = vunpack.c.l.bf16 %v30
    %v287 = vunpack.c.l.bf16 %v31
    %v288 = vunpack.c.l.bf16 %v32
    %v289 = vunpack.c.l.bf16 %v33
    %v290 = vunpack.c.l.bf16 %v34
    %v291 = vunpack.c.l.bf16 %v35
    %v292 = vunpack.c.l.bf16 %v36
    %v293 = vunpack.c.l.bf16 %v37
    %v294 = vunpack.c.l.bf16 %v38
    %v295 = vunpack.c.l.bf16 %v39
    %v296 = vunpack.c.l.bf16 %v40
    %v297 = vunpack.c.l.bf16 %v41
    %v298 = vunpack.c.l.bf16 %v42
    %v299 = vunpack.c.l.bf16 %v43
    %v300 = vunpack.c.l.bf16 %v44
    %v301 = vunpack.c.l.bf16 %v45
    %v302 = vunpack.c.l.bf16 %v46
    %v303 = vunpack.c.l.bf16 %v47
    %v304 = vunpack.c.l.bf16 %v48
    %v305 = vunpack.c.l.bf16 %v49
    %v306 = vunpack.c.l.bf16 %v50
    %v307 = vunpack.c.l.bf16 %v51
    %v308 = vunpack.c.l.bf16 %v52
    %v309 = vunpack.c.l.bf16 %v53
    %v310 = vunpack.c.l.bf16 %v54
    %v311 = vunpack.c.l.bf16 %v55
    %v312 = vunpack.c.l.bf16 %v56
    %v313 = vunpack.c.l.bf16 %v57
    %v314 = vunpack.c.l.bf16 %v58
    %v315 = vunpack.c.l.bf16 %v59
    %v316 = vunpack.c.l.bf16 %v60
    %v317 = vunpack.c.l.bf16 %v61
    %v318 = vunpack.c.l.bf16 %v62
    %v319 = vunpack.c.l.bf16 %v63
    %v320 = vunpack.c.l.bf16 %v64
    %v321 = vunpack.c.l.bf16 %v65
    %v322 = vunpack.c.l.bf16 %v66
    %v323 = vunpack.c.l.bf16 %v67
    %v324 = vunpack.c.l.bf16 %v68
    %v325 = vunpack.c.l.bf16 %v69
    %v326 = vunpack.c.l.bf16 %v70
    %v327 = vunpack.c.l.bf16 %v71
    %v328 = vunpack.c.l.bf16 %v72
    %v329 = vunpack.c.l.bf16 %v73
    %v330 = vunpack.c.l.bf16 %v74
    %v331 = vunpack.c.l.bf16 %v75
    %v332 = vunpack.c.l.bf16 %v76
    %v333 = vunpack.c.l.bf16 %v77
    %v334 = vunpack.c.l.bf16 %v78
    %v335 = vunpack.c.l.bf16 %v79
    %v336 = vunpack.c.l.bf16 %v80
    %v337 = vunpack.c.l.bf16 %v81
    %v338 = vunpack.c.l.bf16 %v82
    %v339 = vunpack.c.l.bf16 %v83
    %v340 = vunpack.c.l.bf16 %v84
    %v341 = vunpack.c.l.bf16 %v85
    %v342 = vunpack.c.l.bf16 %v86
    %v343 = vunpack.c.l.bf16 %v87
    %v344 = vunpack.c.l.bf16 %v88
    %v345 = vunpack.c.l.bf16 %v89
    %v346 = vunpack.c.l.bf16 %v90
    %v347 = vunpack.c.l.bf16 %v91
    %v348 = vunpack.c.l.bf16 %v92
    %v349 = vunpack.c.l.bf16 %v93
    %v350 = vunpack.c.l.bf16 %v94
    %v351 = vunpack.c.l.bf16 %v95
    %v352 = vunpack.c.l.bf16 %v96
    %v353 = vunpack.c.l.bf16 %v97
    %v354 = vunpack.c.l.bf16 %v98
    %v355 = vunpack.c.l.bf16 %v99
    %v356 = vunpack.c.l.bf16 %v100
    %v357 = vunpack.c.l.bf16 %v101
    %v358 = vunpack.c.l.bf16 %v102
    %v359 = vunpack.c.l.bf16 %v103
    %v360 = vunpack.c.l.bf16 %v104
    %v361 = vunpack.c.l.bf16 %v105
    %v362 = vunpack.c.l.bf16 %v106
    %v363 = vunpack.c.l.bf16 %v107
    %v364 = vunpack.c.l.bf16 %v108
    %v365 = vunpack.c.l.bf16 %v109
    %v366 = vunpack.c.l.bf16 %v110
    %v367 = vunpack.c.l.bf16 %v111
    %v368 = vunpack.c.l.bf16 %v112
    %v369 = vunpack.c.l.bf16 %v113
    %v370 = vunpack.c.l.bf16 %v114
    %v371 = vunpack.c.l.bf16 %v115
    %v372 = vunpack.c.l.bf16 %v116
    %v373 = vunpack.c.l.bf16 %v117
    %v374 = vunpack.c.l.bf16 %v118
    %v375 = vunpack.c.l.bf16 %v119
    %v376 = vunpack.c.l.bf16 %v120
    %v377 = vunpack.c.l.bf16 %v121
    %v378 = vunpack.c.l.bf16 %v122
    %v379 = vunpack.c.l.bf16 %v123
    %v380 = vunpack.c.l.bf16 %v124
    %v381 = vunpack.c.l.bf16 %v125
    %v382 = vunpack.c.l.bf16 %v126
    %v383 = vunpack.c.l.bf16 %v127
    %v384 = vunpack.c.l.bf16 %v128
    %v385 = vunpack.c.l.bf16 %v129
    %v386 = vunpack.c.l.bf16 %v130
    %v387 = vunpack.c.l.bf16 %v131
    %v388 = vunpack.c.l.bf16 %v132
    %v389 = vunpack.c.l.bf16 %v133
    %v390 = vunpack.c.l.bf16 %v134
    %v391 = vunpack.c.l.bf16 %v135
    %v392 = vunpack.c.l.bf16 %v136
    %v393 = vunpack.c.l.bf16 %v137
    %v394 = vunpack.c.l.bf16 %v138
    %v395 = vunpack.c.l.bf16 %v139
    %v396 = vunpack.c.l.bf16 %v140
    %v397 = vunpack.c.l.bf16 %v141
    %v398 = vunpack.c.l.bf16 %v142
    %v399 = vunpack.c.l.bf16 %v143
    %v400 = vunpack.c.l.bf16 %v144
    %v401 = vunpack.c.l.bf16 %v145
    %v402 = vunpack.c.l.bf16 %v146
    %v403 = vunpack.c.l.bf16 %v147
    %v404 = vunpack.c.l.bf16 %v148
    %v405 = vunpack.c.l.bf16 %v149
    %v406 = vunpack.c.l.bf16 %v150
    %v407 = vunpack.c.l.bf16 %v151
    %v408 = vunpack.c.l.bf16 %v152
    %v409 = vunpack.c.l.bf16 %v153
    %v410 = vunpack.c.l.bf16 %v154
    %v411 = vunpack.c.l.bf16 %v155
    %v412 = vunpack.c.l.bf16 %v156
    %v413 = vunpack.c.l.bf16 %v157
    %v414 = vunpack.c.l.bf16 %v158
    %v415 = vunpack.c.l.bf16 %v159
    %v416 = vunpack.c.l.bf16 %v160
    %v417 = vunpack.c.l.bf16 %v161
    %v418 = vunpack.c.l.bf16 %v162
    %v419 = vunpack.c.l.bf16 %v163
    %v420 = vunpack.c.l.bf16 %v164
    %v421 = vunpack.c.l.bf16 %v165
    %v422 = vunpack.c.l.bf16 %v166
    %v423 = vunpack.c.l.bf16 %v167
    %v424 = vunpack.c.l.bf16 %v168
    %v425 = vunpack.c.l.bf16 %v169
    %v426 = vunpack.c.l.bf16 %v170
    %v427 = vunpack.c.l.bf16 %v171
    %v428 = vunpack.c.l.bf16 %v172
    %v429 = vunpack.c.l.bf16 %v173
    %v430 = vunpack.c.l.bf16 %v174
    %v431 = vunpack.c.l.bf16 %v175
    %v432 = vunpack.c.l.bf16 %v176
    %v433 = vunpack.c.l.bf16 %v177
    %v434 = vunpack.c.l.bf16 %v178
    %v435 = vunpack.c.l.bf16 %v179
    %v436 = vunpack.c.l.bf16 %v180
    %v437 = vunpack.c.l.bf16 %v181
    %v438 = vunpack.c.l.bf16 %v182
    %v439 = vunpack.c.l.bf16 %v183
    %v440 = vunpack.c.l.bf16 %v184
    %v441 = vunpack.c.l.bf16 %v185
    %v442 = vunpack.c.l.bf16 %v186
    %v443 = vunpack.c.l.bf16 %v187
    %v444 = vunpack.c.l.bf16 %v188
    %v445 = vunpack.c.l.bf16 %v189
    %v446 = vunpack.c.l.bf16 %v190
    %v447 = vunpack.c.l.bf16 %v191
    %v448 = vunpack.c.l.bf16 %v192
    %v449 = vunpack.c.l.bf16 %v193
    %v450 = vunpack.c.l.bf16 %v194
    %v451 = vunpack.c.l.bf16 %v195
    %v452 = vunpack.c.l.bf16 %v196
    %v453 = vunpack.c.l.bf16 %v197
    %v454 = vunpack.c.l.bf16 %v198
    %v455 = vunpack.c.l.bf16 %v199
    %v456 = vunpack.c.l.bf16 %v200
    %v457 = vunpack.c.l.bf16 %v201
    %v458 = vunpack.c.l.bf16 %v202
    %v459 = vunpack.c.l.bf16 %v203
    %v460 = vunpack.c.l.bf16 %v204
    %v461 = vunpack.c.l.bf16 %v205
    %v462 = vunpack.c.l.bf16 %v206
    %v463 = vunpack.c.l.bf16 %v207
    %v464 = vunpack.c.l.bf16 %v208
    %v465 = vunpack.c.l.bf16 %v209
    %v466 = vunpack.c.l.bf16 %v210
    %v467 = vunpack.c.l.bf16 %v211
    %v468 = vunpack.c.l.bf16 %v212
    %v469 = vunpack.c.l.bf16 %v213
    %v470 = vunpack.c.l.bf16 %v214
    %v471 = vunpack.c.l.bf16 %v215
    %v472 = vunpack.c.l.bf16 %v216
    %v473 = vunpack.c.l.bf16 %v217
    %v474 = vunpack.c.l.bf16 %v218
    %v475 = vunpack.c.l.bf16 %v219
    %v476 = vunpack.c.l.bf16 %v220
    %v477 = vunpack.c.l.bf16 %v221
    %v478 = vunpack.c.l.bf16 %v222
    %v479 = vunpack.c.l.bf16 %v223
    %v480 = vunpack.c.l.bf16 %v224
    %v481 = vunpack.c.l.bf16 %v225
    %v482 = vunpack.c.l.bf16 %v226
    %v483 = vunpack.c.l.bf16 %v227
    %v484 = vunpack.c.l.bf16 %v228
    %v485 = vunpack.c.l.bf16 %v229
    %v486 = vunpack.c.l.bf16 %v230
    %v487 = vunpack.c.l.bf16 %v231
    %v488 = vunpack.c.l.bf16 %v232
    %v489 = vunpack.c.l.bf16 %v233
    %v490 = vunpack.c.l.bf16 %v234
    %v491 = vunpack.c.l.bf16 %v235
    %v492 = vunpack.c.l.bf16 %v236
    %v493 = vunpack.c.l.bf16 %v237
    %v494 = vunpack.c.l.bf16 %v238
    %v495 = vunpack.c.l.bf16 %v239
    %v496 = vunpack.c.l.bf16 %v240
    %v497 = vunpack.c.l.bf16 %v241
    %v498 = vunpack.c.l.bf16 %v242
    %v499 = vunpack.c.l.bf16 %v243
    %v500 = vunpack.c.l.bf16 %v244
    %v501 = vunpack.c.l.bf16 %v245
    %v502 = vunpack.c.l.bf16 %v246
    %v503 = vunpack.c.l.bf16 %v247
    %v504 = vunpack.c.l.bf16 %v248
    %v505 = vunpack.c.l.bf16 %v249
    %v506 = vunpack.c.l.bf16 %v250
    %v507 = vunpack.c.l.bf16 %v251
    %v508 = vunpack.c.l.bf16 %v252
    %v509 = vunpack.c.l.bf16 %v253
    %v510 = vunpack.c.l.bf16 %v254
    %v511 = vunpack.c.l.bf16 %v255
    %v512 = vunpack.c.l.bf16 %v256
    %v513 = vunpack.c.l.bf16 %v257
    %v514 = vunpack.c.l.bf16 %v258
    %v515 = vunpack.c.l.bf16 %v259
    %v516 = vunpack.c.l.bf16 %v260
    %v517 = vunpack.c.l.bf16 %v261
    %v518 = vunpack.c.l.bf16 %v262
    %v519 = vunpack.c.l.bf16 %v263
    %v520 = vunpack.c.l.bf16 %v264
    %v521 = vunpack.c.l.bf16 %v265
    %v522 = vunpack.c.l.bf16 %v266
    %v523 = vunpack.c.l.bf16 %v267
    %v524 = vunpack.c.l.bf16 %v268
    %v525 = vunpack.c.l.bf16 %v269
    %v526 = vunpack.c.l.bf16 %v270
    %v527 = vld [vmem:[%s1] sm:$0x1]
    %v528 = vlaneseq
    %v529 = vshrl.u32 %v528, 7
    %v530 = vsub.s32 0, %v529
    %v531 = vrot.slane %v527, %v530
    %v532 = vmul.f32 %v271, %v531
    %v533 = vmul.f32 %v272, %v531
    %v534 = vmul.f32 %v273, %v531
    %v535 = vmul.f32 %v274, %v531
    %v536 = vmul.f32 %v275, %v531
    %v537 = vmul.f32 %v276, %v531
    %v538 = vmul.f32 %v277, %v531
    %v539 = vmul.f32 %v278, %v531
    %v540 = vmul.f32 %v279, %v531
    %v541 = vmul.f32 %v280, %v531
    %v542 = vmul.f32 %v281, %v531
    %v543 = vmul.f32 %v282, %v531
    %v544 = vmul.f32 %v283, %v531
    %v545 = vmul.f32 %v284, %v531
    %v546 = vmul.f32 %v285, %v531
    %v547 = vmul.f32 %v286, %v531
    %v548 = vmul.f32 %v287, %v531
    %v549 = vmul.f32 %v288, %v531
    %v550 = vmul.f32 %v289, %v531
    %v551 = vmul.f32 %v290, %v531
    %v552 = vmul.f32 %v291, %v531
    %v553 = vmul.f32 %v292, %v531
    %v554 = vmul.f32 %v293, %v531
    %v555 = vmul.f32 %v294, %v531
    %v556 = vmul.f32 %v295, %v531
    %v557 = vmul.f32 %v296, %v531
    %v558 = vmul.f32 %v297, %v531
    %v559 = vmul.f32 %v298, %v531
    %v560 = vmul.f32 %v299, %v531
    %v561 = vmul.f32 %v300, %v531
    %v562 = vmul.f32 %v301, %v531
    %v563 = vmul.f32 %v302, %v531
    %v564 = vmul.f32 %v303, %v531
    %v565 = vmul.f32 %v304, %v531
    %v566 = vmul.f32 %v305, %v531
    %v567 = vmul.f32 %v306, %v531
    %v568 = vmul.f32 %v307, %v531
    %v569 = vmul.f32 %v308, %v531
    %v570 = vmul.f32 %v309, %v531
    %v571 = vmul.f32 %v310, %v531
    %v572 = vmul.f32 %v311, %v531
    %v573 = vmul.f32 %v312, %v531
    %v574 = vmul.f32 %v313, %v531
    %v575 = vmul.f32 %v314, %v531
    %v576 = vmul.f32 %v315, %v531
    %v577 = vmul.f32 %v316, %v531
    %v578 = vmul.f32 %v317, %v531
    %v579 = vmul.f32 %v318, %v531
    %v580 = vmul.f32 %v319, %v531
    %v581 = vmul.f32 %v320, %v531
    %v582 = vmul.f32 %v321, %v531
    %v583 = vmul.f32 %v322, %v531
    %v584 = vmul.f32 %v323, %v531
    %v585 = vmul.f32 %v324, %v531
    %v586 = vmul.f32 %v325, %v531
    %v587 = vmul.f32 %v326, %v531
    %v588 = vmul.f32 %v327, %v531
    %v589 = vmul.f32 %v328, %v531
    %v590 = vmul.f32 %v329, %v531
    %v591 = vmul.f32 %v330, %v531
    %v592 = vmul.f32 %v331, %v531
    %v593 = vmul.f32 %v332, %v531
    %v594 = vmul.f32 %v333, %v531
    %v595 = vmul.f32 %v334, %v531
    %v596 = vmul.f32 %v335, %v531
    %v597 = vmul.f32 %v336, %v531
    %v598 = vmul.f32 %v337, %v531
    %v599 = vmul.f32 %v338, %v531
    %v600 = vmul.f32 %v339, %v531
    %v601 = vmul.f32 %v340, %v531
    %v602 = vmul.f32 %v341, %v531
    %v603 = vmul.f32 %v342, %v531
    %v604 = vmul.f32 %v343, %v531
    %v605 = vmul.f32 %v344, %v531
    %v606 = vmul.f32 %v345, %v531
    %v607 = vmul.f32 %v346, %v531
    %v608 = vmul.f32 %v347, %v531
    %v609 = vmul.f32 %v348, %v531
    %v610 = vmul.f32 %v349, %v531
    %v611 = vmul.f32 %v350, %v531
    %v612 = vmul.f32 %v351, %v531
    %v613 = vmul.f32 %v352, %v531
    %v614 = vmul.f32 %v353, %v531
    %v615 = vmul.f32 %v354, %v531
    %v616 = vmul.f32 %v355, %v531
    %v617 = vmul.f32 %v356, %v531
    %v618 = vmul.f32 %v357, %v531
    %v619 = vmul.f32 %v358, %v531
    %v620 = vmul.f32 %v359, %v531
    %v621 = vmul.f32 %v360, %v531
    %v622 = vmul.f32 %v361, %v531
    %v623 = vmul.f32 %v362, %v531
    %v624 = vmul.f32 %v363, %v531
    %v625 = vmul.f32 %v364, %v531
    %v626 = vmul.f32 %v365, %v531
    %v627 = vmul.f32 %v366, %v531
    %v628 = vmul.f32 %v367, %v531
    %v629 = vmul.f32 %v368, %v531
    %v630 = vmul.f32 %v369, %v531
    %v631 = vmul.f32 %v370, %v531
    %v632 = vmul.f32 %v371, %v531
    %v633 = vmul.f32 %v372, %v531
    %v634 = vmul.f32 %v373, %v531
    %v635 = vmul.f32 %v374, %v531
    %v636 = vmul.f32 %v375, %v531
    %v637 = vmul.f32 %v376, %v531
    %v638 = vmul.f32 %v377, %v531
    %v639 = vmul.f32 %v378, %v531
    %v640 = vmul.f32 %v379, %v531
    %v641 = vmul.f32 %v380, %v531
    %v642 = vmul.f32 %v381, %v531
    %v643 = vmul.f32 %v382, %v531
    %v644 = vmul.f32 %v383, %v531
    %v645 = vmul.f32 %v384, %v531
    %v646 = vmul.f32 %v385, %v531
    %v647 = vmul.f32 %v386, %v531
    %v648 = vmul.f32 %v387, %v531
    %v649 = vmul.f32 %v388, %v531
    %v650 = vmul.f32 %v389, %v531
    %v651 = vmul.f32 %v390, %v531
    %v652 = vmul.f32 %v391, %v531
    %v653 = vmul.f32 %v392, %v531
    %v654 = vmul.f32 %v393, %v531
    %v655 = vmul.f32 %v394, %v531
    %v656 = vmul.f32 %v395, %v531
    %v657 = vmul.f32 %v396, %v531
    %v658 = vmul.f32 %v397, %v531
    %v659 = vmul.f32 %v398, %v531
    %v660 = vmul.f32 %v399, %v531
    %v661 = vmul.f32 %v400, %v531
    %v662 = vmul.f32 %v401, %v531
    %v663 = vmul.f32 %v402, %v531
    %v664 = vmul.f32 %v403, %v531
    %v665 = vmul.f32 %v404, %v531
    %v666 = vmul.f32 %v405, %v531
    %v667 = vmul.f32 %v406, %v531
    %v668 = vmul.f32 %v407, %v531
    %v669 = vmul.f32 %v408, %v531
    %v670 = vmul.f32 %v409, %v531
    %v671 = vmul.f32 %v410, %v531
    %v672 = vmul.f32 %v411, %v531
    %v673 = vmul.f32 %v412, %v531
    %v674 = vmul.f32 %v413, %v531
    %v675 = vmul.f32 %v414, %v531
    %v676 = vmul.f32 %v415, %v531
    %v677 = vmul.f32 %v416, %v531
    %v678 = vmul.f32 %v417, %v531
    %v679 = vmul.f32 %v418, %v531
    %v680 = vmul.f32 %v419, %v531
    %v681 = vmul.f32 %v420, %v531
    %v682 = vmul.f32 %v421, %v531
    %v683 = vmul.f32 %v422, %v531
    %v684 = vmul.f32 %v423, %v531
    %v685 = vmul.f32 %v424, %v531
    %v686 = vmul.f32 %v425, %v531
    %v687 = vmul.f32 %v426, %v531
    %v688 = vmul.f32 %v427, %v531
    %v689 = vmul.f32 %v428, %v531
    %v690 = vmul.f32 %v429, %v531
    %v691 = vmul.f32 %v430, %v531
    %v692 = vmul.f32 %v431, %v531
    %v693 = vmul.f32 %v432, %v531
    %v694 = vmul.f32 %v433, %v531
    %v695 = vmul.f32 %v434, %v531
    %v696 = vmul.f32 %v435, %v531
    %v697 = vmul.f32 %v436, %v531
    %v698 = vmul.f32 %v437, %v531
    %v699 = vmul.f32 %v438, %v531
    %v700 = vmul.f32 %v439, %v531
    %v701 = vmul.f32 %v440, %v531
    %v702 = vmul.f32 %v441, %v531
    %v703 = vmul.f32 %v442, %v531
    %v704 = vmul.f32 %v443, %v531
    %v705 = vmul.f32 %v444, %v531
    %v706 = vmul.f32 %v445, %v531
    %v707 = vmul.f32 %v446, %v531
    %v708 = vmul.f32 %v447, %v531
    %v709 = vmul.f32 %v448, %v531
    %v710 = vmul.f32 %v449, %v531
    %v711 = vmul.f32 %v450, %v531
    %v712 = vmul.f32 %v451, %v531
    %v713 = vmul.f32 %v452, %v531
    %v714 = vmul.f32 %v453, %v531
    %v715 = vmul.f32 %v454, %v531
    %v716 = vmul.f32 %v455, %v531
    %v717 = vmul.f32 %v456, %v531
    %v718 = vmul.f32 %v457, %v531
    %v719 = vmul.f32 %v458, %v531
    %v720 = vmul.f32 %v459, %v531
    %v721 = vmul.f32 %v460, %v531
    %v722 = vmul.f32 %v461, %v531
    %v723 = vmul.f32 %v462, %v531
    %v724 = vmul.f32 %v463, %v531
    %v725 = vmul.f32 %v464, %v531
    %v726 = vmul.f32 %v465, %v531
    %v727 = vmul.f32 %v466, %v531
    %v728 = vmul.f32 %v467, %v531
    %v729 = vmul.f32 %v468, %v531
    %v730 = vmul.f32 %v469, %v531
    %v731 = vmul.f32 %v470, %v531
    %v732 = vmul.f32 %v471, %v531
    %v733 = vmul.f32 %v472, %v531
    %v734 = vmul.f32 %v473, %v531
    %v735 = vmul.f32 %v474, %v531
    %v736 = vmul.f32 %v475, %v531
    %v737 = vmul.f32 %v476, %v531
    %v738 = vmul.f32 %v477, %v531
    %v739 = vmul.f32 %v478, %v531
    %v740 = vmul.f32 %v479, %v531
    %v741 = vmul.f32 %v480, %v531
    %v742 = vmul.f32 %v481, %v531
    %v743 = vmul.f32 %v482, %v531
    %v744 = vmul.f32 %v483, %v531
    %v745 = vmul.f32 %v484, %v531
    %v746 = vmul.f32 %v485, %v531
    %v747 = vmul.f32 %v486, %v531
    %v748 = vmul.f32 %v487, %v531
    %v749 = vmul.f32 %v488, %v531
    %v750 = vmul.f32 %v489, %v531
    %v751 = vmul.f32 %v490, %v531
    %v752 = vmul.f32 %v491, %v531
    %v753 = vmul.f32 %v492, %v531
    %v754 = vmul.f32 %v493, %v531
    %v755 = vmul.f32 %v494, %v531
    %v756 = vmul.f32 %v495, %v531
    %v757 = vmul.f32 %v496, %v531
    %v758 = vmul.f32 %v497, %v531
    %v759 = vmul.f32 %v498, %v531
    %v760 = vmul.f32 %v499, %v531
    %v761 = vmul.f32 %v500, %v531
    %v762 = vmul.f32 %v501, %v531
    %v763 = vmul.f32 %v502, %v531
    %v764 = vmul.f32 %v503, %v531
    %v765 = vmul.f32 %v504, %v531
    %v766 = vmul.f32 %v505, %v531
    %v767 = vmul.f32 %v506, %v531
    %v768 = vmul.f32 %v507, %v531
    %v769 = vmul.f32 %v508, %v531
    %v770 = vmul.f32 %v509, %v531
    %v771 = vmul.f32 %v510, %v531
    %v772 = vmul.f32 %v511, %v531
    %v773 = vmul.f32 %v512, %v531
    %v774 = vmul.f32 %v513, %v531
    %v775 = vmul.f32 %v514, %v531
    %v776 = vmul.f32 %v515, %v531
    %v777 = vmul.f32 %v516, %v531
    %v778 = vmul.f32 %v517, %v531
    %v779 = vmul.f32 %v518, %v531
    %v780 = vmul.f32 %v519, %v531
    %v781 = vmul.f32 %v520, %v531
    %v782 = vmul.f32 %v521, %v531
    %v783 = vmul.f32 %v522, %v531
    %v784 = vmul.f32 %v523, %v531
    %v785 = vmul.f32 %v524, %v531
    %v786 = vmul.f32 %v525, %v531
    %v787 = vmul.f32 %v526, %v531
    %v788 = vld [vmem:[%s2] sm:$0x1]
    %v789 = vlaneseq
    %v790 = vshrl.u32 %v789, 7
    %v791 = vsub.s32 0, %v790
    %v792 = vrot.slane %v788, %v791
    %v793 = vadd.f32 %v532, %v792
    %v794 = vadd.f32 %v533, %v792
    %v795 = vadd.f32 %v534, %v792
    %v796 = vadd.f32 %v535, %v792
    %v797 = vadd.f32 %v536, %v792
    %v798 = vadd.f32 %v537, %v792
    %v799 = vadd.f32 %v538, %v792
    %v800 = vadd.f32 %v539, %v792
    %v801 = vadd.f32 %v540, %v792
    %v802 = vadd.f32 %v541, %v792
    %v803 = vadd.f32 %v542, %v792
    %v804 = vadd.f32 %v543, %v792
    %v805 = vadd.f32 %v544, %v792
    %v806 = vadd.f32 %v545, %v792
    %v807 = vadd.f32 %v546, %v792
    %v808 = vadd.f32 %v547, %v792
    %v809 = vadd.f32 %v548, %v792
    %v810 = vadd.f32 %v549, %v792
    %v811 = vadd.f32 %v550, %v792
    %v812 = vadd.f32 %v551, %v792
    %v813 = vadd.f32 %v552, %v792
    %v814 = vadd.f32 %v553, %v792
    %v815 = vadd.f32 %v554, %v792
    %v816 = vadd.f32 %v555, %v792
    %v817 = vadd.f32 %v556, %v792
    %v818 = vadd.f32 %v557, %v792
    %v819 = vadd.f32 %v558, %v792
    %v820 = vadd.f32 %v559, %v792
    %v821 = vadd.f32 %v560, %v792
    %v822 = vadd.f32 %v561, %v792
    %v823 = vadd.f32 %v562, %v792
    %v824 = vadd.f32 %v563, %v792
    %v825 = vadd.f32 %v564, %v792
    %v826 = vadd.f32 %v565, %v792
    %v827 = vadd.f32 %v566, %v792
    %v828 = vadd.f32 %v567, %v792
    %v829 = vadd.f32 %v568, %v792
    %v830 = vadd.f32 %v569, %v792
    %v831 = vadd.f32 %v570, %v792
    %v832 = vadd.f32 %v571, %v792
    %v833 = vadd.f32 %v572, %v792
    %v834 = vadd.f32 %v573, %v792
    %v835 = vadd.f32 %v574, %v792
    %v836 = vadd.f32 %v575, %v792
    %v837 = vadd.f32 %v576, %v792
    %v838 = vadd.f32 %v577, %v792
    %v839 = vadd.f32 %v578, %v792
    %v840 = vadd.f32 %v579, %v792
    %v841 = vadd.f32 %v580, %v792
    %v842 = vadd.f32 %v581, %v792
    %v843 = vadd.f32 %v582, %v792
    %v844 = vadd.f32 %v583, %v792
    %v845 = vadd.f32 %v584, %v792
    %v846 = vadd.f32 %v585, %v792
    %v847 = vadd.f32 %v586, %v792
    %v848 = vadd.f32 %v587, %v792
    %v849 = vadd.f32 %v588, %v792
    %v850 = vadd.f32 %v589, %v792
    %v851 = vadd.f32 %v590, %v792
    %v852 = vadd.f32 %v591, %v792
    %v853 = vadd.f32 %v592, %v792
    %v854 = vadd.f32 %v593, %v792
    %v855 = vadd.f32 %v594, %v792
    %v856 = vadd.f32 %v595, %v792
    %v857 = vadd.f32 %v596, %v792
    %v858 = vadd.f32 %v597, %v792
    %v859 = vadd.f32 %v598, %v792
    %v860 = vadd.f32 %v599, %v792
    %v861 = vadd.f32 %v600, %v792
    %v862 = vadd.f32 %v601, %v792
    %v863 = vadd.f32 %v602, %v792
    %v864 = vadd.f32 %v603, %v792
    %v865 = vadd.f32 %v604, %v792
    %v866 = vadd.f32 %v605, %v792
    %v867 = vadd.f32 %v606, %v792
    %v868 = vadd.f32 %v607, %v792
    %v869 = vadd.f32 %v608, %v792
    %v870 = vadd.f32 %v609, %v792
    %v871 = vadd.f32 %v610, %v792
    %v872 = vadd.f32 %v611, %v792
    %v873 = vadd.f32 %v612, %v792
    %v874 = vadd.f32 %v613, %v792
    %v875 = vadd.f32 %v614, %v792
    %v876 = vadd.f32 %v615, %v792
    %v877 = vadd.f32 %v616, %v792
    %v878 = vadd.f32 %v617, %v792
    %v879 = vadd.f32 %v618, %v792
    %v880 = vadd.f32 %v619, %v792
    %v881 = vadd.f32 %v620, %v792
    %v882 = vadd.f32 %v621, %v792
    %v883 = vadd.f32 %v622, %v792
    %v884 = vadd.f32 %v623, %v792
    %v885 = vadd.f32 %v624, %v792
    %v886 = vadd.f32 %v625, %v792
    %v887 = vadd.f32 %v626, %v792
    %v888 = vadd.f32 %v627, %v792
    %v889 = vadd.f32 %v628, %v792
    %v890 = vadd.f32 %v629, %v792
    %v891 = vadd.f32 %v630, %v792
    %v892 = vadd.f32 %v631, %v792
    %v893 = vadd.f32 %v632, %v792
    %v894 = vadd.f32 %v633, %v792
    %v895 = vadd.f32 %v634, %v792
    %v896 = vadd.f32 %v635, %v792
    %v897 = vadd.f32 %v636, %v792
    %v898 = vadd.f32 %v637, %v792
    %v899 = vadd.f32 %v638, %v792
    %v900 = vadd.f32 %v639, %v792
    %v901 = vadd.f32 %v640, %v792
    %v902 = vadd.f32 %v641, %v792
    %v903 = vadd.f32 %v642, %v792
    %v904 = vadd.f32 %v643, %v792
    %v905 = vadd.f32 %v644, %v792
    %v906 = vadd.f32 %v645, %v792
    %v907 = vadd.f32 %v646, %v792
    %v908 = vadd.f32 %v647, %v792
    %v909 = vadd.f32 %v648, %v792
    %v910 = vadd.f32 %v649, %v792
    %v911 = vadd.f32 %v650, %v792
    %v912 = vadd.f32 %v651, %v792
    %v913 = vadd.f32 %v652, %v792
    %v914 = vadd.f32 %v653, %v792
    %v915 = vadd.f32 %v654, %v792
    %v916 = vadd.f32 %v655, %v792
    %v917 = vadd.f32 %v656, %v792
    %v918 = vadd.f32 %v657, %v792
    %v919 = vadd.f32 %v658, %v792
    %v920 = vadd.f32 %v659, %v792
    %v921 = vadd.f32 %v660, %v792
    %v922 = vadd.f32 %v661, %v792
    %v923 = vadd.f32 %v662, %v792
    %v924 = vadd.f32 %v663, %v792
    %v925 = vadd.f32 %v664, %v792
    %v926 = vadd.f32 %v665, %v792
    %v927 = vadd.f32 %v666, %v792
    %v928 = vadd.f32 %v667, %v792
    %v929 = vadd.f32 %v668, %v792
    %v930 = vadd.f32 %v669, %v792
    %v931 = vadd.f32 %v670, %v792
    %v932 = vadd.f32 %v671, %v792
    %v933 = vadd.f32 %v672, %v792
    %v934 = vadd.f32 %v673, %v792
    %v935 = vadd.f32 %v674, %v792
    %v936 = vadd.f32 %v675, %v792
    %v937 = vadd.f32 %v676, %v792
    %v938 = vadd.f32 %v677, %v792
    %v939 = vadd.f32 %v678, %v792
    %v940 = vadd.f32 %v679, %v792
    %v941 = vadd.f32 %v680, %v792
    %v942 = vadd.f32 %v681, %v792
    %v943 = vadd.f32 %v682, %v792
    %v944 = vadd.f32 %v683, %v792
    %v945 = vadd.f32 %v684, %v792
    %v946 = vadd.f32 %v685, %v792
    %v947 = vadd.f32 %v686, %v792
    %v948 = vadd.f32 %v687, %v792
    %v949 = vadd.f32 %v688, %v792
    %v950 = vadd.f32 %v689, %v792
    %v951 = vadd.f32 %v690, %v792
    %v952 = vadd.f32 %v691, %v792
    %v953 = vadd.f32 %v692, %v792
    %v954 = vadd.f32 %v693, %v792
    %v955 = vadd.f32 %v694, %v792
    %v956 = vadd.f32 %v695, %v792
    %v957 = vadd.f32 %v696, %v792
    %v958 = vadd.f32 %v697, %v792
    %v959 = vadd.f32 %v698, %v792
    %v960 = vadd.f32 %v699, %v792
    %v961 = vadd.f32 %v700, %v792
    %v962 = vadd.f32 %v701, %v792
    %v963 = vadd.f32 %v702, %v792
    %v964 = vadd.f32 %v703, %v792
    %v965 = vadd.f32 %v704, %v792
    %v966 = vadd.f32 %v705, %v792
    %v967 = vadd.f32 %v706, %v792
    %v968 = vadd.f32 %v707, %v792
    %v969 = vadd.f32 %v708, %v792
    %v970 = vadd.f32 %v709, %v792
    %v971 = vadd.f32 %v710, %v792
    %v972 = vadd.f32 %v711, %v792
    %v973 = vadd.f32 %v712, %v792
    %v974 = vadd.f32 %v713, %v792
    %v975 = vadd.f32 %v714, %v792
    %v976 = vadd.f32 %v715, %v792
    %v977 = vadd.f32 %v716, %v792
    %v978 = vadd.f32 %v717, %v792
    %v979 = vadd.f32 %v718, %v792
    %v980 = vadd.f32 %v719, %v792
    %v981 = vadd.f32 %v720, %v792
    %v982 = vadd.f32 %v721, %v792
    %v983 = vadd.f32 %v722, %v792
    %v984 = vadd.f32 %v723, %v792
    %v985 = vadd.f32 %v724, %v792
    %v986 = vadd.f32 %v725, %v792
    %v987 = vadd.f32 %v726, %v792
    %v988 = vadd.f32 %v727, %v792
    %v989 = vadd.f32 %v728, %v792
    %v990 = vadd.f32 %v729, %v792
    %v991 = vadd.f32 %v730, %v792
    %v992 = vadd.f32 %v731, %v792
    %v993 = vadd.f32 %v732, %v792
    %v994 = vadd.f32 %v733, %v792
    %v995 = vadd.f32 %v734, %v792
    %v996 = vadd.f32 %v735, %v792
    %v997 = vadd.f32 %v736, %v792
    %v998 = vadd.f32 %v737, %v792
    %v999 = vadd.f32 %v738, %v792
    %v1000 = vadd.f32 %v739, %v792
    %v1001 = vadd.f32 %v740, %v792
    %v1002 = vadd.f32 %v741, %v792
    %v1003 = vadd.f32 %v742, %v792
    %v1004 = vadd.f32 %v743, %v792
    %v1005 = vadd.f32 %v744, %v792
    %v1006 = vadd.f32 %v745, %v792
    %v1007 = vadd.f32 %v746, %v792
    %v1008 = vadd.f32 %v747, %v792
    %v1009 = vadd.f32 %v748, %v792
    %v1010 = vadd.f32 %v749, %v792
    %v1011 = vadd.f32 %v750, %v792
    %v1012 = vadd.f32 %v751, %v792
    %v1013 = vadd.f32 %v752, %v792
    %v1014 = vadd.f32 %v753, %v792
    %v1015 = vadd.f32 %v754, %v792
    %v1016 = vadd.f32 %v755, %v792
    %v1017 = vadd.f32 %v756, %v792
    %v1018 = vadd.f32 %v757, %v792
    %v1019 = vadd.f32 %v758, %v792
    %v1020 = vadd.f32 %v759, %v792
    %v1021 = vadd.f32 %v760, %v792
    %v1022 = vadd.f32 %v761, %v792
    %v1023 = vadd.f32 %v762, %v792
    %v1024 = vadd.f32 %v763, %v792
    %v1025 = vadd.f32 %v764, %v792
    %v1026 = vadd.f32 %v765, %v792
    %v1027 = vadd.f32 %v766, %v792
    %v1028 = vadd.f32 %v767, %v792
    %v1029 = vadd.f32 %v768, %v792
    %v1030 = vadd.f32 %v769, %v792
    %v1031 = vadd.f32 %v770, %v792
    %v1032 = vadd.f32 %v771, %v792
    %v1033 = vadd.f32 %v772, %v792
    %v1034 = vadd.f32 %v773, %v792
    %v1035 = vadd.f32 %v774, %v792
    %v1036 = vadd.f32 %v775, %v792
    %v1037 = vadd.f32 %v776, %v792
    %v1038 = vadd.f32 %v777, %v792
    %v1039 = vadd.f32 %v778, %v792
    %v1040 = vadd.f32 %v779, %v792
    %v1041 = vadd.f32 %v780, %v792
    %v1042 = vadd.f32 %v781, %v792
    %v1043 = vadd.f32 %v782, %v792
    %v1044 = vadd.f32 %v783, %v792
    %v1045 = vadd.f32 %v784, %v792
    %v1046 = vadd.f32 %v785, %v792
    %v1047 = vadd.f32 %v786, %v792
    %v1048 = vadd.f32 %v787, %v792
    %v1049 = vmin.f32 %v793, 20.0
    %v1050 = vmin.f32 %v794, 20.0
    %v1051 = vmin.f32 %v795, 20.0
    %v1052 = vmin.f32 %v796, 20.0
    %v1053 = vmin.f32 %v797, 20.0
    %v1054 = vmin.f32 %v798, 20.0
    %v1055 = vmin.f32 %v799, 20.0
    %v1056 = vmin.f32 %v800, 20.0
    %v1057 = vmin.f32 %v801, 20.0
    %v1058 = vmin.f32 %v802, 20.0
    %v1059 = vmin.f32 %v803, 20.0
    %v1060 = vmin.f32 %v804, 20.0
    %v1061 = vmin.f32 %v805, 20.0
    %v1062 = vmin.f32 %v806, 20.0
    %v1063 = vmin.f32 %v807, 20.0
    %v1064 = vmin.f32 %v808, 20.0
    %v1065 = vmin.f32 %v809, 20.0
    %v1066 = vmin.f32 %v810, 20.0
    %v1067 = vmin.f32 %v811, 20.0
    %v1068 = vmin.f32 %v812, 20.0
    %v1069 = vmin.f32 %v813, 20.0
    %v1070 = vmin.f32 %v814, 20.0
    %v1071 = vmin.f32 %v815, 20.0
    %v1072 = vmin.f32 %v816, 20.0
    %v1073 = vmin.f32 %v817, 20.0
    %v1074 = vmin.f32 %v818, 20.0
    %v1075 = vmin.f32 %v819, 20.0
    %v1076 = vmin.f32 %v820, 20.0
    %v1077 = vmin.f32 %v821, 20.0
    %v1078 = vmin.f32 %v822, 20.0
    %v1079 = vmin.f32 %v823, 20.0
    %v1080 = vmin.f32 %v824, 20.0
    %v1081 = vmin.f32 %v825, 20.0
    %v1082 = vmin.f32 %v826, 20.0
    %v1083 = vmin.f32 %v827, 20.0
    %v1084 = vmin.f32 %v828, 20.0
    %v1085 = vmin.f32 %v829, 20.0
    %v1086 = vmin.f32 %v830, 20.0
    %v1087 = vmin.f32 %v831, 20.0
    %v1088 = vmin.f32 %v832, 20.0
    %v1089 = vmin.f32 %v833, 20.0
    %v1090 = vmin.f32 %v834, 20.0
    %v1091 = vmin.f32 %v835, 20.0
    %v1092 = vmin.f32 %v836, 20.0
    %v1093 = vmin.f32 %v837, 20.0
    %v1094 = vmin.f32 %v838, 20.0
    %v1095 = vmin.f32 %v839, 20.0
    %v1096 = vmin.f32 %v840, 20.0
    %v1097 = vmin.f32 %v841, 20.0
    %v1098 = vmin.f32 %v842, 20.0
    %v1099 = vmin.f32 %v843, 20.0
    %v1100 = vmin.f32 %v844, 20.0
    %v1101 = vmin.f32 %v845, 20.0
    %v1102 = vmin.f32 %v846, 20.0
    %v1103 = vmin.f32 %v847, 20.0
    %v1104 = vmin.f32 %v848, 20.0
    %v1105 = vmin.f32 %v849, 20.0
    %v1106 = vmin.f32 %v850, 20.0
    %v1107 = vmin.f32 %v851, 20.0
    %v1108 = vmin.f32 %v852, 20.0
    %v1109 = vmin.f32 %v853, 20.0
    %v1110 = vmin.f32 %v854, 20.0
    %v1111 = vmin.f32 %v855, 20.0
    %v1112 = vmin.f32 %v856, 20.0
    %v1113 = vmin.f32 %v857, 20.0
    %v1114 = vmin.f32 %v858, 20.0
    %v1115 = vmin.f32 %v859, 20.0
    %v1116 = vmin.f32 %v860, 20.0
    %v1117 = vmin.f32 %v861, 20.0
    %v1118 = vmin.f32 %v862, 20.0
    %v1119 = vmin.f32 %v863, 20.0
    %v1120 = vmin.f32 %v864, 20.0
    %v1121 = vmin.f32 %v865, 20.0
    %v1122 = vmin.f32 %v866, 20.0
    %v1123 = vmin.f32 %v867, 20.0
    %v1124 = vmin.f32 %v868, 20.0
    %v1125 = vmin.f32 %v869, 20.0
    %v1126 = vmin.f32 %v870, 20.0
    %v1127 = vmin.f32 %v871, 20.0
    %v1128 = vmin.f32 %v872, 20.0
    %v1129 = vmin.f32 %v873, 20.0
    %v1130 = vmin.f32 %v874, 20.0
    %v1131 = vmin.f32 %v875, 20.0
    %v1132 = vmin.f32 %v876, 20.0
    %v1133 = vmin.f32 %v877, 20.0
    %v1134 = vmin.f32 %v878, 20.0
    %v1135 = vmin.f32 %v879, 20.0
    %v1136 = vmin.f32 %v880, 20.0
    %v1137 = vmin.f32 %v881, 20.0
    %v1138 = vmin.f32 %v882, 20.0
    %v1139 = vmin.f32 %v883, 20.0
    %v1140 = vmin.f32 %v884, 20.0
    %v1141 = vmin.f32 %v885, 20.0
    %v1142 = vmin.f32 %v886, 20.0
    %v1143 = vmin.f32 %v887, 20.0
    %v1144 = vmin.f32 %v888, 20.0
    %v1145 = vmin.f32 %v889, 20.0
    %v1146 = vmin.f32 %v890, 20.0
    %v1147 = vmin.f32 %v891, 20.0
    %v1148 = vmin.f32 %v892, 20.0
    %v1149 = vmin.f32 %v893, 20.0
    %v1150 = vmin.f32 %v894, 20.0
    %v1151 = vmin.f32 %v895, 20.0
    %v1152 = vmin.f32 %v896, 20.0
    %v1153 = vmin.f32 %v897, 20.0
    %v1154 = vmin.f32 %v898, 20.0
    %v1155 = vmin.f32 %v899, 20.0
    %v1156 = vmin.f32 %v900, 20.0
    %v1157 = vmin.f32 %v901, 20.0
    %v1158 = vmin.f32 %v902, 20.0
    %v1159 = vmin.f32 %v903, 20.0
    %v1160 = vmin.f32 %v904, 20.0
    %v1161 = vmin.f32 %v905, 20.0
    %v1162 = vmin.f32 %v906, 20.0
    %v1163 = vmin.f32 %v907, 20.0
    %v1164 = vmin.f32 %v908, 20.0
    %v1165 = vmin.f32 %v909, 20.0
    %v1166 = vmin.f32 %v910, 20.0
    %v1167 = vmin.f32 %v911, 20.0
    %v1168 = vmin.f32 %v912, 20.0
    %v1169 = vmin.f32 %v913, 20.0
    %v1170 = vmin.f32 %v914, 20.0
    %v1171 = vmin.f32 %v915, 20.0
    %v1172 = vmin.f32 %v916, 20.0
    %v1173 = vmin.f32 %v917, 20.0
    %v1174 = vmin.f32 %v918, 20.0
    %v1175 = vmin.f32 %v919, 20.0
    %v1176 = vmin.f32 %v920, 20.0
    %v1177 = vmin.f32 %v921, 20.0
    %v1178 = vmin.f32 %v922, 20.0
    %v1179 = vmin.f32 %v923, 20.0
    %v1180 = vmin.f32 %v924, 20.0
    %v1181 = vmin.f32 %v925, 20.0
    %v1182 = vmin.f32 %v926, 20.0
    %v1183 = vmin.f32 %v927, 20.0
    %v1184 = vmin.f32 %v928, 20.0
    %v1185 = vmin.f32 %v929, 20.0
    %v1186 = vmin.f32 %v930, 20.0
    %v1187 = vmin.f32 %v931, 20.0
    %v1188 = vmin.f32 %v932, 20.0
    %v1189 = vmin.f32 %v933, 20.0
    %v1190 = vmin.f32 %v934, 20.0
    %v1191 = vmin.f32 %v935, 20.0
    %v1192 = vmin.f32 %v936, 20.0
    %v1193 = vmin.f32 %v937, 20.0
    %v1194 = vmin.f32 %v938, 20.0
    %v1195 = vmin.f32 %v939, 20.0
    %v1196 = vmin.f32 %v940, 20.0
    %v1197 = vmin.f32 %v941, 20.0
    %v1198 = vmin.f32 %v942, 20.0
    %v1199 = vmin.f32 %v943, 20.0
    %v1200 = vmin.f32 %v944, 20.0
    %v1201 = vmin.f32 %v945, 20.0
    %v1202 = vmin.f32 %v946, 20.0
    %v1203 = vmin.f32 %v947, 20.0
    %v1204 = vmin.f32 %v948, 20.0
    %v1205 = vmin.f32 %v949, 20.0
    %v1206 = vmin.f32 %v950, 20.0
    %v1207 = vmin.f32 %v951, 20.0
    %v1208 = vmin.f32 %v952, 20.0
    %v1209 = vmin.f32 %v953, 20.0
    %v1210 = vmin.f32 %v954, 20.0
    %v1211 = vmin.f32 %v955, 20.0
    %v1212 = vmin.f32 %v956, 20.0
    %v1213 = vmin.f32 %v957, 20.0
    %v1214 = vmin.f32 %v958, 20.0
    %v1215 = vmin.f32 %v959, 20.0
    %v1216 = vmin.f32 %v960, 20.0
    %v1217 = vmin.f32 %v961, 20.0
    %v1218 = vmin.f32 %v962, 20.0
    %v1219 = vmin.f32 %v963, 20.0
    %v1220 = vmin.f32 %v964, 20.0
    %v1221 = vmin.f32 %v965, 20.0
    %v1222 = vmin.f32 %v966, 20.0
    %v1223 = vmin.f32 %v967, 20.0
    %v1224 = vmin.f32 %v968, 20.0
    %v1225 = vmin.f32 %v969, 20.0
    %v1226 = vmin.f32 %v970, 20.0
    %v1227 = vmin.f32 %v971, 20.0
    %v1228 = vmin.f32 %v972, 20.0
    %v1229 = vmin.f32 %v973, 20.0
    %v1230 = vmin.f32 %v974, 20.0
    %v1231 = vmin.f32 %v975, 20.0
    %v1232 = vmin.f32 %v976, 20.0
    %v1233 = vmin.f32 %v977, 20.0
    %v1234 = vmin.f32 %v978, 20.0
    %v1235 = vmin.f32 %v979, 20.0
    %v1236 = vmin.f32 %v980, 20.0
    %v1237 = vmin.f32 %v981, 20.0
    %v1238 = vmin.f32 %v982, 20.0
    %v1239 = vmin.f32 %v983, 20.0
    %v1240 = vmin.f32 %v984, 20.0
    %v1241 = vmin.f32 %v985, 20.0
    %v1242 = vmin.f32 %v986, 20.0
    %v1243 = vmin.f32 %v987, 20.0
    %v1244 = vmin.f32 %v988, 20.0
    %v1245 = vmin.f32 %v989, 20.0
    %v1246 = vmin.f32 %v990, 20.0
    %v1247 = vmin.f32 %v991, 20.0
    %v1248 = vmin.f32 %v992, 20.0
    %v1249 = vmin.f32 %v993, 20.0
    %v1250 = vmin.f32 %v994, 20.0
    %v1251 = vmin.f32 %v995, 20.0
    %v1252 = vmin.f32 %v996, 20.0
    %v1253 = vmin.f32 %v997, 20.0
    %v1254 = vmin.f32 %v998, 20.0
    %v1255 = vmin.f32 %v999, 20.0
    %v1256 = vmin.f32 %v1000, 20.0
    %v1257 = vmin.f32 %v1001, 20.0
    %v1258 = vmin.f32 %v1002, 20.0
    %v1259 = vmin.f32 %v1003, 20.0
    %v1260 = vmin.f32 %v1004, 20.0
    %v1261 = vmin.f32 %v1005, 20.0
    %v1262 = vmin.f32 %v1006, 20.0
    %v1263 = vmin.f32 %v1007, 20.0
    %v1264 = vmin.f32 %v1008, 20.0
    %v1265 = vmin.f32 %v1009, 20.0
    %v1266 = vmin.f32 %v1010, 20.0
    %v1267 = vmin.f32 %v1011, 20.0
    %v1268 = vmin.f32 %v1012, 20.0
    %v1269 = vmin.f32 %v1013, 20.0
    %v1270 = vmin.f32 %v1014, 20.0
    %v1271 = vmin.f32 %v1015, 20.0
    %v1272 = vmin.f32 %v1016, 20.0
    %v1273 = vmin.f32 %v1017, 20.0
    %v1274 = vmin.f32 %v1018, 20.0
    %v1275 = vmin.f32 %v1019, 20.0
    %v1276 = vmin.f32 %v1020, 20.0
    %v1277 = vmin.f32 %v1021, 20.0
    %v1278 = vmin.f32 %v1022, 20.0
    %v1279 = vmin.f32 %v1023, 20.0
    %v1280 = vmin.f32 %v1024, 20.0
    %v1281 = vmin.f32 %v1025, 20.0
    %v1282 = vmin.f32 %v1026, 20.0
    %v1283 = vmin.f32 %v1027, 20.0
    %v1284 = vmin.f32 %v1028, 20.0
    %v1285 = vmin.f32 %v1029, 20.0
    %v1286 = vmin.f32 %v1030, 20.0
    %v1287 = vmin.f32 %v1031, 20.0
    %v1288 = vmin.f32 %v1032, 20.0
    %v1289 = vmin.f32 %v1033, 20.0
    %v1290 = vmin.f32 %v1034, 20.0
    %v1291 = vmin.f32 %v1035, 20.0
    %v1292 = vmin.f32 %v1036, 20.0
    %v1293 = vmin.f32 %v1037, 20.0
    %v1294 = vmin.f32 %v1038, 20.0
    %v1295 = vmin.f32 %v1039, 20.0
    %v1296 = vmin.f32 %v1040, 20.0
    %v1297 = vmin.f32 %v1041, 20.0
    %v1298 = vmin.f32 %v1042, 20.0
    %v1299 = vmin.f32 %v1043, 20.0
    %v1300 = vmin.f32 %v1044, 20.0
    %v1301 = vmin.f32 %v1045, 20.0
    %v1302 = vmin.f32 %v1046, 20.0
    %v1303 = vmin.f32 %v1047, 20.0
    %v1304 = vmin.f32 %v1048, 20.0
    %v1305 = vmul.f32 %v1049, 1.442695
    %v1306 = vpow.pop %v1305
    %v1307 = vmul.f32 %v1050, 1.442695
    %v1308 = vpow.pop %v1307
    %v1309 = vmul.f32 %v1051, 1.442695
    %v1310 = vpow.pop %v1309
    %v1311 = vmul.f32 %v1052, 1.442695
    %v1312 = vpow.pop %v1311
    %v1313 = vmul.f32 %v1053, 1.442695
    %v1314 = vpow.pop %v1313
    %v1315 = vmul.f32 %v1054, 1.442695
    %v1316 = vpow.pop %v1315
    %v1317 = vmul.f32 %v1055, 1.442695
    %v1318 = vpow.pop %v1317
    %v1319 = vmul.f32 %v1056, 1.442695
    %v1320 = vpow.pop %v1319
    %v1321 = vmul.f32 %v1057, 1.442695
    %v1322 = vpow.pop %v1321
    %v1323 = vmul.f32 %v1058, 1.442695
    %v1324 = vpow.pop %v1323
    %v1325 = vmul.f32 %v1059, 1.442695
    %v1326 = vpow.pop %v1325
    %v1327 = vmul.f32 %v1060, 1.442695
    %v1328 = vpow.pop %v1327
    %v1329 = vmul.f32 %v1061, 1.442695
    %v1330 = vpow.pop %v1329
    %v1331 = vmul.f32 %v1062, 1.442695
    %v1332 = vpow.pop %v1331
    %v1333 = vmul.f32 %v1063, 1.442695
    %v1334 = vpow.pop %v1333
    %v1335 = vmul.f32 %v1064, 1.442695
    %v1336 = vpow.pop %v1335
    %v1337 = vmul.f32 %v1065, 1.442695
    %v1338 = vpow.pop %v1337
    %v1339 = vmul.f32 %v1066, 1.442695
    %v1340 = vpow.pop %v1339
    %v1341 = vmul.f32 %v1067, 1.442695
    %v1342 = vpow.pop %v1341
    %v1343 = vmul.f32 %v1068, 1.442695
    %v1344 = vpow.pop %v1343
    %v1345 = vmul.f32 %v1069, 1.442695
    %v1346 = vpow.pop %v1345
    %v1347 = vmul.f32 %v1070, 1.442695
    %v1348 = vpow.pop %v1347
    %v1349 = vmul.f32 %v1071, 1.442695
    %v1350 = vpow.pop %v1349
    %v1351 = vmul.f32 %v1072, 1.442695
    %v1352 = vpow.pop %v1351
    %v1353 = vmul.f32 %v1073, 1.442695
    %v1354 = vpow.pop %v1353
    %v1355 = vmul.f32 %v1074, 1.442695
    %v1356 = vpow.pop %v1355
    %v1357 = vmul.f32 %v1075, 1.442695
    %v1358 = vpow.pop %v1357
    %v1359 = vmul.f32 %v1076, 1.442695
    %v1360 = vpow.pop %v1359
    %v1361 = vmul.f32 %v1077, 1.442695
    %v1362 = vpow.pop %v1361
    %v1363 = vmul.f32 %v1078, 1.442695
    %v1364 = vpow.pop %v1363
    %v1365 = vmul.f32 %v1079, 1.442695
    %v1366 = vpow.pop %v1365
    %v1367 = vmul.f32 %v1080, 1.442695
    %v1368 = vpow.pop %v1367
    %v1369 = vmul.f32 %v1081, 1.442695
    %v1370 = vpow.pop %v1369
    %v1371 = vmul.f32 %v1082, 1.442695
    %v1372 = vpow.pop %v1371
    %v1373 = vmul.f32 %v1083, 1.442695
    %v1374 = vpow.pop %v1373
    %v1375 = vmul.f32 %v1084, 1.442695
    %v1376 = vpow.pop %v1375
    %v1377 = vmul.f32 %v1085, 1.442695
    %v1378 = vpow.pop %v1377
    %v1379 = vmul.f32 %v1086, 1.442695
    %v1380 = vpow.pop %v1379
    %v1381 = vmul.f32 %v1087, 1.442695
    %v1382 = vpow.pop %v1381
    %v1383 = vmul.f32 %v1088, 1.442695
    %v1384 = vpow.pop %v1383
    %v1385 = vmul.f32 %v1089, 1.442695
    %v1386 = vpow.pop %v1385
    %v1387 = vmul.f32 %v1090, 1.442695
    %v1388 = vpow.pop %v1387
    %v1389 = vmul.f32 %v1091, 1.442695
    %v1390 = vpow.pop %v1389
    %v1391 = vmul.f32 %v1092, 1.442695
    %v1392 = vpow.pop %v1391
    %v1393 = vmul.f32 %v1093, 1.442695
    %v1394 = vpow.pop %v1393
    %v1395 = vmul.f32 %v1094, 1.442695
    %v1396 = vpow.pop %v1395
    %v1397 = vmul.f32 %v1095, 1.442695
    %v1398 = vpow.pop %v1397
    %v1399 = vmul.f32 %v1096, 1.442695
    %v1400 = vpow.pop %v1399
    %v1401 = vmul.f32 %v1097, 1.442695
    %v1402 = vpow.pop %v1401
    %v1403 = vmul.f32 %v1098, 1.442695
    %v1404 = vpow.pop %v1403
    %v1405 = vmul.f32 %v1099, 1.442695
    %v1406 = vpow.pop %v1405
    %v1407 = vmul.f32 %v1100, 1.442695
    %v1408 = vpow.pop %v1407
    %v1409 = vmul.f32 %v1101, 1.442695
    %v1410 = vpow.pop %v1409
    %v1411 = vmul.f32 %v1102, 1.442695
    %v1412 = vpow.pop %v1411
    %v1413 = vmul.f32 %v1103, 1.442695
    %v1414 = vpow.pop %v1413
    %v1415 = vmul.f32 %v1104, 1.442695
    %v1416 = vpow.pop %v1415
    %v1417 = vmul.f32 %v1105, 1.442695
    %v1418 = vpow.pop %v1417
    %v1419 = vmul.f32 %v1106, 1.442695
    %v1420 = vpow.pop %v1419
    %v1421 = vmul.f32 %v1107, 1.442695
    %v1422 = vpow.pop %v1421
    %v1423 = vmul.f32 %v1108, 1.442695
    %v1424 = vpow.pop %v1423
    %v1425 = vmul.f32 %v1109, 1.442695
    %v1426 = vpow.pop %v1425
    %v1427 = vmul.f32 %v1110, 1.442695
    %v1428 = vpow.pop %v1427
    %v1429 = vmul.f32 %v1111, 1.442695
    %v1430 = vpow.pop %v1429
    %v1431 = vmul.f32 %v1112, 1.442695
    %v1432 = vpow.pop %v1431
    %v1433 = vmul.f32 %v1113, 1.442695
    %v1434 = vpow.pop %v1433
    %v1435 = vmul.f32 %v1114, 1.442695
    %v1436 = vpow.pop %v1435
    %v1437 = vmul.f32 %v1115, 1.442695
    %v1438 = vpow.pop %v1437
    %v1439 = vmul.f32 %v1116, 1.442695
    %v1440 = vpow.pop %v1439
    %v1441 = vmul.f32 %v1117, 1.442695
    %v1442 = vpow.pop %v1441
    %v1443 = vmul.f32 %v1118, 1.442695
    %v1444 = vpow.pop %v1443
    %v1445 = vmul.f32 %v1119, 1.442695
    %v1446 = vpow.pop %v1445
    %v1447 = vmul.f32 %v1120, 1.442695
    %v1448 = vpow.pop %v1447
    %v1449 = vmul.f32 %v1121, 1.442695
    %v1450 = vpow.pop %v1449
    %v1451 = vmul.f32 %v1122, 1.442695
    %v1452 = vpow.pop %v1451
    %v1453 = vmul.f32 %v1123, 1.442695
    %v1454 = vpow.pop %v1453
    %v1455 = vmul.f32 %v1124, 1.442695
    %v1456 = vpow.pop %v1455
    %v1457 = vmul.f32 %v1125, 1.442695
    %v1458 = vpow.pop %v1457
    %v1459 = vmul.f32 %v1126, 1.442695
    %v1460 = vpow.pop %v1459
    %v1461 = vmul.f32 %v1127, 1.442695
    %v1462 = vpow.pop %v1461
    %v1463 = vmul.f32 %v1128, 1.442695
    %v1464 = vpow.pop %v1463
    %v1465 = vmul.f32 %v1129, 1.442695
    %v1466 = vpow.pop %v1465
    %v1467 = vmul.f32 %v1130, 1.442695
    %v1468 = vpow.pop %v1467
    %v1469 = vmul.f32 %v1131, 1.442695
    %v1470 = vpow.pop %v1469
    %v1471 = vmul.f32 %v1132, 1.442695
    %v1472 = vpow.pop %v1471
    %v1473 = vmul.f32 %v1133, 1.442695
    %v1474 = vpow.pop %v1473
    %v1475 = vmul.f32 %v1134, 1.442695
    %v1476 = vpow.pop %v1475
    %v1477 = vmul.f32 %v1135, 1.442695
    %v1478 = vpow.pop %v1477
    %v1479 = vmul.f32 %v1136, 1.442695
    %v1480 = vpow.pop %v1479
    %v1481 = vmul.f32 %v1137, 1.442695
    %v1482 = vpow.pop %v1481
    %v1483 = vmul.f32 %v1138, 1.442695
    %v1484 = vpow.pop %v1483
    %v1485 = vmul.f32 %v1139, 1.442695
    %v1486 = vpow.pop %v1485
    %v1487 = vmul.f32 %v1140, 1.442695
    %v1488 = vpow.pop %v1487
    %v1489 = vmul.f32 %v1141, 1.442695
    %v1490 = vpow.pop %v1489
    %v1491 = vmul.f32 %v1142, 1.442695
    %v1492 = vpow.pop %v1491
    %v1493 = vmul.f32 %v1143, 1.442695
    %v1494 = vpow.pop %v1493
    %v1495 = vmul.f32 %v1144, 1.442695
    %v1496 = vpow.pop %v1495
    %v1497 = vmul.f32 %v1145, 1.442695
    %v1498 = vpow.pop %v1497
    %v1499 = vmul.f32 %v1146, 1.442695
    %v1500 = vpow.pop %v1499
    %v1501 = vmul.f32 %v1147, 1.442695
    %v1502 = vpow.pop %v1501
    %v1503 = vmul.f32 %v1148, 1.442695
    %v1504 = vpow.pop %v1503
    %v1505 = vmul.f32 %v1149, 1.442695
    %v1506 = vpow.pop %v1505
    %v1507 = vmul.f32 %v1150, 1.442695
    %v1508 = vpow.pop %v1507
    %v1509 = vmul.f32 %v1151, 1.442695
    %v1510 = vpow.pop %v1509
    %v1511 = vmul.f32 %v1152, 1.442695
    %v1512 = vpow.pop %v1511
    %v1513 = vmul.f32 %v1153, 1.442695
    %v1514 = vpow.pop %v1513
    %v1515 = vmul.f32 %v1154, 1.442695
    %v1516 = vpow.pop %v1515
    %v1517 = vmul.f32 %v1155, 1.442695
    %v1518 = vpow.pop %v1517
    %v1519 = vmul.f32 %v1156, 1.442695
    %v1520 = vpow.pop %v1519
    %v1521 = vmul.f32 %v1157, 1.442695
    %v1522 = vpow.pop %v1521
    %v1523 = vmul.f32 %v1158, 1.442695
    %v1524 = vpow.pop %v1523
    %v1525 = vmul.f32 %v1159, 1.442695
    %v1526 = vpow.pop %v1525
    %v1527 = vmul.f32 %v1160, 1.442695
    %v1528 = vpow.pop %v1527
    %v1529 = vmul.f32 %v1161, 1.442695
    %v1530 = vpow.pop %v1529
    %v1531 = vmul.f32 %v1162, 1.442695
    %v1532 = vpow.pop %v1531
    %v1533 = vmul.f32 %v1163, 1.442695
    %v1534 = vpow.pop %v1533
    %v1535 = vmul.f32 %v1164, 1.442695
    %v1536 = vpow.pop %v1535
    %v1537 = vmul.f32 %v1165, 1.442695
    %v1538 = vpow.pop %v1537
    %v1539 = vmul.f32 %v1166, 1.442695
    %v1540 = vpow.pop %v1539
    %v1541 = vmul.f32 %v1167, 1.442695
    %v1542 = vpow.pop %v1541
    %v1543 = vmul.f32 %v1168, 1.442695
    %v1544 = vpow.pop %v1543
    %v1545 = vmul.f32 %v1169, 1.442695
    %v1546 = vpow.pop %v1545
    %v1547 = vmul.f32 %v1170, 1.442695
    %v1548 = vpow.pop %v1547
    %v1549 = vmul.f32 %v1171, 1.442695
    %v1550 = vpow.pop %v1549
    %v1551 = vmul.f32 %v1172, 1.442695
    %v1552 = vpow.pop %v1551
    %v1553 = vmul.f32 %v1173, 1.442695
    %v1554 = vpow.pop %v1553
    %v1555 = vmul.f32 %v1174, 1.442695
    %v1556 = vpow.pop %v1555
    %v1557 = vmul.f32 %v1175, 1.442695
    %v1558 = vpow.pop %v1557
    %v1559 = vmul.f32 %v1176, 1.442695
    %v1560 = vpow.pop %v1559
    %v1561 = vmul.f32 %v1177, 1.442695
    %v1562 = vpow.pop %v1561
    %v1563 = vmul.f32 %v1178, 1.442695
    %v1564 = vpow.pop %v1563
    %v1565 = vmul.f32 %v1179, 1.442695
    %v1566 = vpow.pop %v1565
    %v1567 = vmul.f32 %v1180, 1.442695
    %v1568 = vpow.pop %v1567
    %v1569 = vmul.f32 %v1181, 1.442695
    %v1570 = vpow.pop %v1569
    %v1571 = vmul.f32 %v1182, 1.442695
    %v1572 = vpow.pop %v1571
    %v1573 = vmul.f32 %v1183, 1.442695
    %v1574 = vpow.pop %v1573
    %v1575 = vmul.f32 %v1184, 1.442695
    %v1576 = vpow.pop %v1575
    %v1577 = vmul.f32 %v1185, 1.442695
    %v1578 = vpow.pop %v1577
    %v1579 = vmul.f32 %v1186, 1.442695
    %v1580 = vpow.pop %v1579
    %v1581 = vmul.f32 %v1187, 1.442695
    %v1582 = vpow.pop %v1581
    %v1583 = vmul.f32 %v1188, 1.442695
    %v1584 = vpow.pop %v1583
    %v1585 = vmul.f32 %v1189, 1.442695
    %v1586 = vpow.pop %v1585
    %v1587 = vmul.f32 %v1190, 1.442695
    %v1588 = vpow.pop %v1587
    %v1589 = vmul.f32 %v1191, 1.442695
    %v1590 = vpow.pop %v1589
    %v1591 = vmul.f32 %v1192, 1.442695
    %v1592 = vpow.pop %v1591
    %v1593 = vmul.f32 %v1193, 1.442695
    %v1594 = vpow.pop %v1593
    %v1595 = vmul.f32 %v1194, 1.442695
    %v1596 = vpow.pop %v1595
    %v1597 = vmul.f32 %v1195, 1.442695
    %v1598 = vpow.pop %v1597
    %v1599 = vmul.f32 %v1196, 1.442695
    %v1600 = vpow.pop %v1599
    %v1601 = vmul.f32 %v1197, 1.442695
    %v1602 = vpow.pop %v1601
    %v1603 = vmul.f32 %v1198, 1.442695
    %v1604 = vpow.pop %v1603
    %v1605 = vmul.f32 %v1199, 1.442695
    %v1606 = vpow.pop %v1605
    %v1607 = vmul.f32 %v1200, 1.442695
    %v1608 = vpow.pop %v1607
    %v1609 = vmul.f32 %v1201, 1.442695
    %v1610 = vpow.pop %v1609
    %v1611 = vmul.f32 %v1202, 1.442695
    %v1612 = vpow.pop %v1611
    %v1613 = vmul.f32 %v1203, 1.442695
    %v1614 = vpow.pop %v1613
    %v1615 = vmul.f32 %v1204, 1.442695
    %v1616 = vpow.pop %v1615
    %v1617 = vmul.f32 %v1205, 1.442695
    %v1618 = vpow.pop %v1617
    %v1619 = vmul.f32 %v1206, 1.442695
    %v1620 = vpow.pop %v1619
    %v1621 = vmul.f32 %v1207, 1.442695
    %v1622 = vpow.pop %v1621
    %v1623 = vmul.f32 %v1208, 1.442695
    %v1624 = vpow.pop %v1623
    %v1625 = vmul.f32 %v1209, 1.442695
    %v1626 = vpow.pop %v1625
    %v1627 = vmul.f32 %v1210, 1.442695
    %v1628 = vpow.pop %v1627
    %v1629 = vmul.f32 %v1211, 1.442695
    %v1630 = vpow.pop %v1629
    %v1631 = vmul.f32 %v1212, 1.442695
    %v1632 = vpow.pop %v1631
    %v1633 = vmul.f32 %v1213, 1.442695
    %v1634 = vpow.pop %v1633
    %v1635 = vmul.f32 %v1214, 1.442695
    %v1636 = vpow.pop %v1635
    %v1637 = vmul.f32 %v1215, 1.442695
    %v1638 = vpow.pop %v1637
    %v1639 = vmul.f32 %v1216, 1.442695
    %v1640 = vpow.pop %v1639
    %v1641 = vmul.f32 %v1217, 1.442695
    %v1642 = vpow.pop %v1641
    %v1643 = vmul.f32 %v1218, 1.442695
    %v1644 = vpow.pop %v1643
    %v1645 = vmul.f32 %v1219, 1.442695
    %v1646 = vpow.pop %v1645
    %v1647 = vmul.f32 %v1220, 1.442695
    %v1648 = vpow.pop %v1647
    %v1649 = vmul.f32 %v1221, 1.442695
    %v1650 = vpow.pop %v1649
    %v1651 = vmul.f32 %v1222, 1.442695
    %v1652 = vpow.pop %v1651
    %v1653 = vmul.f32 %v1223, 1.442695
    %v1654 = vpow.pop %v1653
    %v1655 = vmul.f32 %v1224, 1.442695
    %v1656 = vpow.pop %v1655
    %v1657 = vmul.f32 %v1225, 1.442695
    %v1658 = vpow.pop %v1657
    %v1659 = vmul.f32 %v1226, 1.442695
    %v1660 = vpow.pop %v1659
    %v1661 = vmul.f32 %v1227, 1.442695
    %v1662 = vpow.pop %v1661
    %v1663 = vmul.f32 %v1228, 1.442695
    %v1664 = vpow.pop %v1663
    %v1665 = vmul.f32 %v1229, 1.442695
    %v1666 = vpow.pop %v1665
    %v1667 = vmul.f32 %v1230, 1.442695
    %v1668 = vpow.pop %v1667
    %v1669 = vmul.f32 %v1231, 1.442695
    %v1670 = vpow.pop %v1669
    %v1671 = vmul.f32 %v1232, 1.442695
    %v1672 = vpow.pop %v1671
    %v1673 = vmul.f32 %v1233, 1.442695
    %v1674 = vpow.pop %v1673
    %v1675 = vmul.f32 %v1234, 1.442695
    %v1676 = vpow.pop %v1675
    %v1677 = vmul.f32 %v1235, 1.442695
    %v1678 = vpow.pop %v1677
    %v1679 = vmul.f32 %v1236, 1.442695
    %v1680 = vpow.pop %v1679
    %v1681 = vmul.f32 %v1237, 1.442695
    %v1682 = vpow.pop %v1681
    %v1683 = vmul.f32 %v1238, 1.442695
    %v1684 = vpow.pop %v1683
    %v1685 = vmul.f32 %v1239, 1.442695
    %v1686 = vpow.pop %v1685
    %v1687 = vmul.f32 %v1240, 1.442695
    %v1688 = vpow.pop %v1687
    %v1689 = vmul.f32 %v1241, 1.442695
    %v1690 = vpow.pop %v1689
    %v1691 = vmul.f32 %v1242, 1.442695
    %v1692 = vpow.pop %v1691
    %v1693 = vmul.f32 %v1243, 1.442695
    %v1694 = vpow.pop %v1693
    %v1695 = vmul.f32 %v1244, 1.442695
    %v1696 = vpow.pop %v1695
    %v1697 = vmul.f32 %v1245, 1.442695
    %v1698 = vpow.pop %v1697
    %v1699 = vmul.f32 %v1246, 1.442695
    %v1700 = vpow.pop %v1699
    %v1701 = vmul.f32 %v1247, 1.442695
    %v1702 = vpow.pop %v1701
    %v1703 = vmul.f32 %v1248, 1.442695
    %v1704 = vpow.pop %v1703
    %v1705 = vmul.f32 %v1249, 1.442695
    %v1706 = vpow.pop %v1705
    %v1707 = vmul.f32 %v1250, 1.442695
    %v1708 = vpow.pop %v1707
    %v1709 = vmul.f32 %v1251, 1.442695
    %v1710 = vpow.pop %v1709
    %v1711 = vmul.f32 %v1252, 1.442695
    %v1712 = vpow.pop %v1711
    %v1713 = vmul.f32 %v1253, 1.442695
    %v1714 = vpow.pop %v1713
    %v1715 = vmul.f32 %v1254, 1.442695
    %v1716 = vpow.pop %v1715
    %v1717 = vmul.f32 %v1255, 1.442695
    %v1718 = vpow.pop %v1717
    %v1719 = vmul.f32 %v1256, 1.442695
    %v1720 = vpow.pop %v1719
    %v1721 = vmul.f32 %v1257, 1.442695
    %v1722 = vpow.pop %v1721
    %v1723 = vmul.f32 %v1258, 1.442695
    %v1724 = vpow.pop %v1723
    %v1725 = vmul.f32 %v1259, 1.442695
    %v1726 = vpow.pop %v1725
    %v1727 = vmul.f32 %v1260, 1.442695
    %v1728 = vpow.pop %v1727
    %v1729 = vmul.f32 %v1261, 1.442695
    %v1730 = vpow.pop %v1729
    %v1731 = vmul.f32 %v1262, 1.442695
    %v1732 = vpow.pop %v1731
    %v1733 = vmul.f32 %v1263, 1.442695
    %v1734 = vpow.pop %v1733
    %v1735 = vmul.f32 %v1264, 1.442695
    %v1736 = vpow.pop %v1735
    %v1737 = vmul.f32 %v1265, 1.442695
    %v1738 = vpow.pop %v1737
    %v1739 = vmul.f32 %v1266, 1.442695
    %v1740 = vpow.pop %v1739
    %v1741 = vmul.f32 %v1267, 1.442695
    %v1742 = vpow.pop %v1741
    %v1743 = vmul.f32 %v1268, 1.442695
    %v1744 = vpow.pop %v1743
    %v1745 = vmul.f32 %v1269, 1.442695
    %v1746 = vpow.pop %v1745
    %v1747 = vmul.f32 %v1270, 1.442695
    %v1748 = vpow.pop %v1747
    %v1749 = vmul.f32 %v1271, 1.442695
    %v1750 = vpow.pop %v1749
    %v1751 = vmul.f32 %v1272, 1.442695
    %v1752 = vpow.pop %v1751
    %v1753 = vmul.f32 %v1273, 1.442695
    %v1754 = vpow.pop %v1753
    %v1755 = vmul.f32 %v1274, 1.442695
    %v1756 = vpow.pop %v1755
    %v1757 = vmul.f32 %v1275, 1.442695
    %v1758 = vpow.pop %v1757
    %v1759 = vmul.f32 %v1276, 1.442695
    %v1760 = vpow.pop %v1759
    %v1761 = vmul.f32 %v1277, 1.442695
    %v1762 = vpow.pop %v1761
    %v1763 = vmul.f32 %v1278, 1.442695
    %v1764 = vpow.pop %v1763
    %v1765 = vmul.f32 %v1279, 1.442695
    %v1766 = vpow.pop %v1765
    %v1767 = vmul.f32 %v1280, 1.442695
    %v1768 = vpow.pop %v1767
    %v1769 = vmul.f32 %v1281, 1.442695
    %v1770 = vpow.pop %v1769
    %v1771 = vmul.f32 %v1282, 1.442695
    %v1772 = vpow.pop %v1771
    %v1773 = vmul.f32 %v1283, 1.442695
    %v1774 = vpow.pop %v1773
    %v1775 = vmul.f32 %v1284, 1.442695
    %v1776 = vpow.pop %v1775
    %v1777 = vmul.f32 %v1285, 1.442695
    %v1778 = vpow.pop %v1777
    %v1779 = vmul.f32 %v1286, 1.442695
    %v1780 = vpow.pop %v1779
    %v1781 = vmul.f32 %v1287, 1.442695
    %v1782 = vpow.pop %v1781
    %v1783 = vmul.f32 %v1288, 1.442695
    %v1784 = vpow.pop %v1783
    %v1785 = vmul.f32 %v1289, 1.442695
    %v1786 = vpow.pop %v1785
    %v1787 = vmul.f32 %v1290, 1.442695
    %v1788 = vpow.pop %v1787
    %v1789 = vmul.f32 %v1291, 1.442695
    %v1790 = vpow.pop %v1789
    %v1791 = vmul.f32 %v1292, 1.442695
    %v1792 = vpow.pop %v1791
    %v1793 = vmul.f32 %v1293, 1.442695
    %v1794 = vpow.pop %v1793
    %v1795 = vmul.f32 %v1294, 1.442695
    %v1796 = vpow.pop %v1795
    %v1797 = vmul.f32 %v1295, 1.442695
    %v1798 = vpow.pop %v1797
    %v1799 = vmul.f32 %v1296, 1.442695
    %v1800 = vpow.pop %v1799
    %v1801 = vmul.f32 %v1297, 1.442695
    %v1802 = vpow.pop %v1801
    %v1803 = vmul.f32 %v1298, 1.442695
    %v1804 = vpow.pop %v1803
    %v1805 = vmul.f32 %v1299, 1.442695
    %v1806 = vpow.pop %v1805
    %v1807 = vmul.f32 %v1300, 1.442695
    %v1808 = vpow.pop %v1807
    %v1809 = vmul.f32 %v1301, 1.442695
    %v1810 = vpow.pop %v1809
    %v1811 = vmul.f32 %v1302, 1.442695
    %v1812 = vpow.pop %v1811
    %v1813 = vmul.f32 %v1303, 1.442695
    %v1814 = vpow.pop %v1813
    %v1815 = vmul.f32 %v1304, 1.442695
    %v1816 = vpow.pop %v1815
    %v1817 = vadd.f32 %v1306, 1.0
    %v1818 = vadd.f32 %v1308, 1.0
    %v1819 = vadd.f32 %v1310, 1.0
    %v1820 = vadd.f32 %v1312, 1.0
    %v1821 = vadd.f32 %v1314, 1.0
    %v1822 = vadd.f32 %v1316, 1.0
    %v1823 = vadd.f32 %v1318, 1.0
    %v1824 = vadd.f32 %v1320, 1.0
    %v1825 = vadd.f32 %v1322, 1.0
    %v1826 = vadd.f32 %v1324, 1.0
    %v1827 = vadd.f32 %v1326, 1.0
    %v1828 = vadd.f32 %v1328, 1.0
    %v1829 = vadd.f32 %v1330, 1.0
    %v1830 = vadd.f32 %v1332, 1.0
    %v1831 = vadd.f32 %v1334, 1.0
    %v1832 = vadd.f32 %v1336, 1.0
    %v1833 = vadd.f32 %v1338, 1.0
    %v1834 = vadd.f32 %v1340, 1.0
    %v1835 = vadd.f32 %v1342, 1.0
    %v1836 = vadd.f32 %v1344, 1.0
    %v1837 = vadd.f32 %v1346, 1.0
    %v1838 = vadd.f32 %v1348, 1.0
    %v1839 = vadd.f32 %v1350, 1.0
    %v1840 = vadd.f32 %v1352, 1.0
    %v1841 = vadd.f32 %v1354, 1.0
    %v1842 = vadd.f32 %v1356, 1.0
    %v1843 = vadd.f32 %v1358, 1.0
    %v1844 = vadd.f32 %v1360, 1.0
    %v1845 = vadd.f32 %v1362, 1.0
    %v1846 = vadd.f32 %v1364, 1.0
    %v1847 = vadd.f32 %v1366, 1.0
    %v1848 = vadd.f32 %v1368, 1.0
    %v1849 = vadd.f32 %v1370, 1.0
    %v1850 = vadd.f32 %v1372, 1.0
    %v1851 = vadd.f32 %v1374, 1.0
    %v1852 = vadd.f32 %v1376, 1.0
    %v1853 = vadd.f32 %v1378, 1.0
    %v1854 = vadd.f32 %v1380, 1.0
    %v1855 = vadd.f32 %v1382, 1.0
    %v1856 = vadd.f32 %v1384, 1.0
    %v1857 = vadd.f32 %v1386, 1.0
    %v1858 = vadd.f32 %v1388, 1.0
    %v1859 = vadd.f32 %v1390, 1.0
    %v1860 = vadd.f32 %v1392, 1.0
    %v1861 = vadd.f32 %v1394, 1.0
    %v1862 = vadd.f32 %v1396, 1.0
    %v1863 = vadd.f32 %v1398, 1.0
    %v1864 = vadd.f32 %v1400, 1.0
    %v1865 = vadd.f32 %v1402, 1.0
    %v1866 = vadd.f32 %v1404, 1.0
    %v1867 = vadd.f32 %v1406, 1.0
    %v1868 = vadd.f32 %v1408, 1.0
    %v1869 = vadd.f32 %v1410, 1.0
    %v1870 = vadd.f32 %v1412, 1.0
    %v1871 = vadd.f32 %v1414, 1.0
    %v1872 = vadd.f32 %v1416, 1.0
    %v1873 = vadd.f32 %v1418, 1.0
    %v1874 = vadd.f32 %v1420, 1.0
    %v1875 = vadd.f32 %v1422, 1.0
    %v1876 = vadd.f32 %v1424, 1.0
    %v1877 = vadd.f32 %v1426, 1.0
    %v1878 = vadd.f32 %v1428, 1.0
    %v1879 = vadd.f32 %v1430, 1.0
    %v1880 = vadd.f32 %v1432, 1.0
    %v1881 = vadd.f32 %v1434, 1.0
    %v1882 = vadd.f32 %v1436, 1.0
    %v1883 = vadd.f32 %v1438, 1.0
    %v1884 = vadd.f32 %v1440, 1.0
    %v1885 = vadd.f32 %v1442, 1.0
    %v1886 = vadd.f32 %v1444, 1.0
    %v1887 = vadd.f32 %v1446, 1.0
    %v1888 = vadd.f32 %v1448, 1.0
    %v1889 = vadd.f32 %v1450, 1.0
    %v1890 = vadd.f32 %v1452, 1.0
    %v1891 = vadd.f32 %v1454, 1.0
    %v1892 = vadd.f32 %v1456, 1.0
    %v1893 = vadd.f32 %v1458, 1.0
    %v1894 = vadd.f32 %v1460, 1.0
    %v1895 = vadd.f32 %v1462, 1.0
    %v1896 = vadd.f32 %v1464, 1.0
    %v1897 = vadd.f32 %v1466, 1.0
    %v1898 = vadd.f32 %v1468, 1.0
    %v1899 = vadd.f32 %v1470, 1.0
    %v1900 = vadd.f32 %v1472, 1.0
    %v1901 = vadd.f32 %v1474, 1.0
    %v1902 = vadd.f32 %v1476, 1.0
    %v1903 = vadd.f32 %v1478, 1.0
    %v1904 = vadd.f32 %v1480, 1.0
    %v1905 = vadd.f32 %v1482, 1.0
    %v1906 = vadd.f32 %v1484, 1.0
    %v1907 = vadd.f32 %v1486, 1.0
    %v1908 = vadd.f32 %v1488, 1.0
    %v1909 = vadd.f32 %v1490, 1.0
    %v1910 = vadd.f32 %v1492, 1.0
    %v1911 = vadd.f32 %v1494, 1.0
    %v1912 = vadd.f32 %v1496, 1.0
    %v1913 = vadd.f32 %v1498, 1.0
    %v1914 = vadd.f32 %v1500, 1.0
    %v1915 = vadd.f32 %v1502, 1.0
    %v1916 = vadd.f32 %v1504, 1.0
    %v1917 = vadd.f32 %v1506, 1.0
    %v1918 = vadd.f32 %v1508, 1.0
    %v1919 = vadd.f32 %v1510, 1.0
    %v1920 = vadd.f32 %v1512, 1.0
    %v1921 = vadd.f32 %v1514, 1.0
    %v1922 = vadd.f32 %v1516, 1.0
    %v1923 = vadd.f32 %v1518, 1.0
    %v1924 = vadd.f32 %v1520, 1.0
    %v1925 = vadd.f32 %v1522, 1.0
    %v1926 = vadd.f32 %v1524, 1.0
    %v1927 = vadd.f32 %v1526, 1.0
    %v1928 = vadd.f32 %v1528, 1.0
    %v1929 = vadd.f32 %v1530, 1.0
    %v1930 = vadd.f32 %v1532, 1.0
    %v1931 = vadd.f32 %v1534, 1.0
    %v1932 = vadd.f32 %v1536, 1.0
    %v1933 = vadd.f32 %v1538, 1.0
    %v1934 = vadd.f32 %v1540, 1.0
    %v1935 = vadd.f32 %v1542, 1.0
    %v1936 = vadd.f32 %v1544, 1.0
    %v1937 = vadd.f32 %v1546, 1.0
    %v1938 = vadd.f32 %v1548, 1.0
    %v1939 = vadd.f32 %v1550, 1.0
    %v1940 = vadd.f32 %v1552, 1.0
    %v1941 = vadd.f32 %v1554, 1.0
    %v1942 = vadd.f32 %v1556, 1.0
    %v1943 = vadd.f32 %v1558, 1.0
    %v1944 = vadd.f32 %v1560, 1.0
    %v1945 = vadd.f32 %v1562, 1.0
    %v1946 = vadd.f32 %v1564, 1.0
    %v1947 = vadd.f32 %v1566, 1.0
    %v1948 = vadd.f32 %v1568, 1.0
    %v1949 = vadd.f32 %v1570, 1.0
    %v1950 = vadd.f32 %v1572, 1.0
    %v1951 = vadd.f32 %v1574, 1.0
    %v1952 = vadd.f32 %v1576, 1.0
    %v1953 = vadd.f32 %v1578, 1.0
    %v1954 = vadd.f32 %v1580, 1.0
    %v1955 = vadd.f32 %v1582, 1.0
    %v1956 = vadd.f32 %v1584, 1.0
    %v1957 = vadd.f32 %v1586, 1.0
    %v1958 = vadd.f32 %v1588, 1.0
    %v1959 = vadd.f32 %v1590, 1.0
    %v1960 = vadd.f32 %v1592, 1.0
    %v1961 = vadd.f32 %v1594, 1.0
    %v1962 = vadd.f32 %v1596, 1.0
    %v1963 = vadd.f32 %v1598, 1.0
    %v1964 = vadd.f32 %v1600, 1.0
    %v1965 = vadd.f32 %v1602, 1.0
    %v1966 = vadd.f32 %v1604, 1.0
    %v1967 = vadd.f32 %v1606, 1.0
    %v1968 = vadd.f32 %v1608, 1.0
    %v1969 = vadd.f32 %v1610, 1.0
    %v1970 = vadd.f32 %v1612, 1.0
    %v1971 = vadd.f32 %v1614, 1.0
    %v1972 = vadd.f32 %v1616, 1.0
    %v1973 = vadd.f32 %v1618, 1.0
    %v1974 = vadd.f32 %v1620, 1.0
    %v1975 = vadd.f32 %v1622, 1.0
    %v1976 = vadd.f32 %v1624, 1.0
    %v1977 = vadd.f32 %v1626, 1.0
    %v1978 = vadd.f32 %v1628, 1.0
    %v1979 = vadd.f32 %v1630, 1.0
    %v1980 = vadd.f32 %v1632, 1.0
    %v1981 = vadd.f32 %v1634, 1.0
    %v1982 = vadd.f32 %v1636, 1.0
    %v1983 = vadd.f32 %v1638, 1.0
    %v1984 = vadd.f32 %v1640, 1.0
    %v1985 = vadd.f32 %v1642, 1.0
    %v1986 = vadd.f32 %v1644, 1.0
    %v1987 = vadd.f32 %v1646, 1.0
    %v1988 = vadd.f32 %v1648, 1.0
    %v1989 = vadd.f32 %v1650, 1.0
    %v1990 = vadd.f32 %v1652, 1.0
    %v1991 = vadd.f32 %v1654, 1.0
    %v1992 = vadd.f32 %v1656, 1.0
    %v1993 = vadd.f32 %v1658, 1.0
    %v1994 = vadd.f32 %v1660, 1.0
    %v1995 = vadd.f32 %v1662, 1.0
    %v1996 = vadd.f32 %v1664, 1.0
    %v1997 = vadd.f32 %v1666, 1.0
    %v1998 = vadd.f32 %v1668, 1.0
    %v1999 = vadd.f32 %v1670, 1.0
    %v2000 = vadd.f32 %v1672, 1.0
    %v2001 = vadd.f32 %v1674, 1.0
    %v2002 = vadd.f32 %v1676, 1.0
    %v2003 = vadd.f32 %v1678, 1.0
    %v2004 = vadd.f32 %v1680, 1.0
    %v2005 = vadd.f32 %v1682, 1.0
    %v2006 = vadd.f32 %v1684, 1.0
    %v2007 = vadd.f32 %v1686, 1.0
    %v2008 = vadd.f32 %v1688, 1.0
    %v2009 = vadd.f32 %v1690, 1.0
    %v2010 = vadd.f32 %v1692, 1.0
    %v2011 = vadd.f32 %v1694, 1.0
    %v2012 = vadd.f32 %v1696, 1.0
    %v2013 = vadd.f32 %v1698, 1.0
    %v2014 = vadd.f32 %v1700, 1.0
    %v2015 = vadd.f32 %v1702, 1.0
    %v2016 = vadd.f32 %v1704, 1.0
    %v2017 = vadd.f32 %v1706, 1.0
    %v2018 = vadd.f32 %v1708, 1.0
    %v2019 = vadd.f32 %v1710, 1.0
    %v2020 = vadd.f32 %v1712, 1.0
    %v2021 = vadd.f32 %v1714, 1.0
    %v2022 = vadd.f32 %v1716, 1.0
    %v2023 = vadd.f32 %v1718, 1.0
    %v2024 = vadd.f32 %v1720, 1.0
    %v2025 = vadd.f32 %v1722, 1.0
    %v2026 = vadd.f32 %v1724, 1.0
    %v2027 = vadd.f32 %v1726, 1.0
    %v2028 = vadd.f32 %v1728, 1.0
    %v2029 = vadd.f32 %v1730, 1.0
    %v2030 = vadd.f32 %v1732, 1.0
    %v2031 = vadd.f32 %v1734, 1.0
    %v2032 = vadd.f32 %v1736, 1.0
    %v2033 = vadd.f32 %v1738, 1.0
    %v2034 = vadd.f32 %v1740, 1.0
    %v2035 = vadd.f32 %v1742, 1.0
    %v2036 = vadd.f32 %v1744, 1.0
    %v2037 = vadd.f32 %v1746, 1.0
    %v2038 = vadd.f32 %v1748, 1.0
    %v2039 = vadd.f32 %v1750, 1.0
    %v2040 = vadd.f32 %v1752, 1.0
    %v2041 = vadd.f32 %v1754, 1.0
    %v2042 = vadd.f32 %v1756, 1.0
    %v2043 = vadd.f32 %v1758, 1.0
    %v2044 = vadd.f32 %v1760, 1.0
    %v2045 = vadd.f32 %v1762, 1.0
    %v2046 = vadd.f32 %v1764, 1.0
    %v2047 = vadd.f32 %v1766, 1.0
    %v2048 = vadd.f32 %v1768, 1.0
    %v2049 = vadd.f32 %v1770, 1.0
    %v2050 = vadd.f32 %v1772, 1.0
    %v2051 = vadd.f32 %v1774, 1.0
    %v2052 = vadd.f32 %v1776, 1.0
    %v2053 = vadd.f32 %v1778, 1.0
    %v2054 = vadd.f32 %v1780, 1.0
    %v2055 = vadd.f32 %v1782, 1.0
    %v2056 = vadd.f32 %v1784, 1.0
    %v2057 = vadd.f32 %v1786, 1.0
    %v2058 = vadd.f32 %v1788, 1.0
    %v2059 = vadd.f32 %v1790, 1.0
    %v2060 = vadd.f32 %v1792, 1.0
    %v2061 = vadd.f32 %v1794, 1.0
    %v2062 = vadd.f32 %v1796, 1.0
    %v2063 = vadd.f32 %v1798, 1.0
    %v2064 = vadd.f32 %v1800, 1.0
    %v2065 = vadd.f32 %v1802, 1.0
    %v2066 = vadd.f32 %v1804, 1.0
    %v2067 = vadd.f32 %v1806, 1.0
    %v2068 = vadd.f32 %v1808, 1.0
    %v2069 = vadd.f32 %v1810, 1.0
    %v2070 = vadd.f32 %v1812, 1.0
    %v2071 = vadd.f32 %v1814, 1.0
    %v2072 = vadd.f32 %v1816, 1.0
    %v2073 = vmul.f32 %v1817, %v1817
    %v2074 = vmul.f32 %v1818, %v1818
    %v2075 = vmul.f32 %v1819, %v1819
    %v2076 = vmul.f32 %v1820, %v1820
    %v2077 = vmul.f32 %v1821, %v1821
    %v2078 = vmul.f32 %v1822, %v1822
    %v2079 = vmul.f32 %v1823, %v1823
    %v2080 = vmul.f32 %v1824, %v1824
    %v2081 = vmul.f32 %v1825, %v1825
    %v2082 = vmul.f32 %v1826, %v1826
    %v2083 = vmul.f32 %v1827, %v1827
    %v2084 = vmul.f32 %v1828, %v1828
    %v2085 = vmul.f32 %v1829, %v1829
    %v2086 = vmul.f32 %v1830, %v1830
    %v2087 = vmul.f32 %v1831, %v1831
    %v2088 = vmul.f32 %v1832, %v1832
    %v2089 = vmul.f32 %v1833, %v1833
    %v2090 = vmul.f32 %v1834, %v1834
    %v2091 = vmul.f32 %v1835, %v1835
    %v2092 = vmul.f32 %v1836, %v1836
    %v2093 = vmul.f32 %v1837, %v1837
    %v2094 = vmul.f32 %v1838, %v1838
    %v2095 = vmul.f32 %v1839, %v1839
    %v2096 = vmul.f32 %v1840, %v1840
    %v2097 = vmul.f32 %v1841, %v1841
    %v2098 = vmul.f32 %v1842, %v1842
    %v2099 = vmul.f32 %v1843, %v1843
    %v2100 = vmul.f32 %v1844, %v1844
    %v2101 = vmul.f32 %v1845, %v1845
    %v2102 = vmul.f32 %v1846, %v1846
    %v2103 = vmul.f32 %v1847, %v1847
    %v2104 = vmul.f32 %v1848, %v1848
    %v2105 = vmul.f32 %v1849, %v1849
    %v2106 = vmul.f32 %v1850, %v1850
    %v2107 = vmul.f32 %v1851, %v1851
    %v2108 = vmul.f32 %v1852, %v1852
    %v2109 = vmul.f32 %v1853, %v1853
    %v2110 = vmul.f32 %v1854, %v1854
    %v2111 = vmul.f32 %v1855, %v1855
    %v2112 = vmul.f32 %v1856, %v1856
    %v2113 = vmul.f32 %v1857, %v1857
    %v2114 = vmul.f32 %v1858, %v1858
    %v2115 = vmul.f32 %v1859, %v1859
    %v2116 = vmul.f32 %v1860, %v1860
    %v2117 = vmul.f32 %v1861, %v1861
    %v2118 = vmul.f32 %v1862, %v1862
    %v2119 = vmul.f32 %v1863, %v1863
    %v2120 = vmul.f32 %v1864, %v1864
    %v2121 = vmul.f32 %v1865, %v1865
    %v2122 = vmul.f32 %v1866, %v1866
    %v2123 = vmul.f32 %v1867, %v1867
    %v2124 = vmul.f32 %v1868, %v1868
    %v2125 = vmul.f32 %v1869, %v1869
    %v2126 = vmul.f32 %v1870, %v1870
    %v2127 = vmul.f32 %v1871, %v1871
    %v2128 = vmul.f32 %v1872, %v1872
    %v2129 = vmul.f32 %v1873, %v1873
    %v2130 = vmul.f32 %v1874, %v1874
    %v2131 = vmul.f32 %v1875, %v1875
    %v2132 = vmul.f32 %v1876, %v1876
    %v2133 = vmul.f32 %v1877, %v1877
    %v2134 = vmul.f32 %v1878, %v1878
    %v2135 = vmul.f32 %v1879, %v1879
    %v2136 = vmul.f32 %v1880, %v1880
    %v2137 = vmul.f32 %v1881, %v1881
    %v2138 = vmul.f32 %v1882, %v1882
    %v2139 = vmul.f32 %v1883, %v1883
    %v2140 = vmul.f32 %v1884, %v1884
    %v2141 = vmul.f32 %v1885, %v1885
    %v2142 = vmul.f32 %v1886, %v1886
    %v2143 = vmul.f32 %v1887, %v1887
    %v2144 = vmul.f32 %v1888, %v1888
    %v2145 = vmul.f32 %v1889, %v1889
    %v2146 = vmul.f32 %v1890, %v1890
    %v2147 = vmul.f32 %v1891, %v1891
    %v2148 = vmul.f32 %v1892, %v1892
    %v2149 = vmul.f32 %v1893, %v1893
    %v2150 = vmul.f32 %v1894, %v1894
    %v2151 = vmul.f32 %v1895, %v1895
    %v2152 = vmul.f32 %v1896, %v1896
    %v2153 = vmul.f32 %v1897, %v1897
    %v2154 = vmul.f32 %v1898, %v1898
    %v2155 = vmul.f32 %v1899, %v1899
    %v2156 = vmul.f32 %v1900, %v1900
    %v2157 = vmul.f32 %v1901, %v1901
    %v2158 = vmul.f32 %v1902, %v1902
    %v2159 = vmul.f32 %v1903, %v1903
    %v2160 = vmul.f32 %v1904, %v1904
    %v2161 = vmul.f32 %v1905, %v1905
    %v2162 = vmul.f32 %v1906, %v1906
    %v2163 = vmul.f32 %v1907, %v1907
    %v2164 = vmul.f32 %v1908, %v1908
    %v2165 = vmul.f32 %v1909, %v1909
    %v2166 = vmul.f32 %v1910, %v1910
    %v2167 = vmul.f32 %v1911, %v1911
    %v2168 = vmul.f32 %v1912, %v1912
    %v2169 = vmul.f32 %v1913, %v1913
    %v2170 = vmul.f32 %v1914, %v1914
    %v2171 = vmul.f32 %v1915, %v1915
    %v2172 = vmul.f32 %v1916, %v1916
    %v2173 = vmul.f32 %v1917, %v1917
    %v2174 = vmul.f32 %v1918, %v1918
    %v2175 = vmul.f32 %v1919, %v1919
    %v2176 = vmul.f32 %v1920, %v1920
    %v2177 = vmul.f32 %v1921, %v1921
    %v2178 = vmul.f32 %v1922, %v1922
    %v2179 = vmul.f32 %v1923, %v1923
    %v2180 = vmul.f32 %v1924, %v1924
    %v2181 = vmul.f32 %v1925, %v1925
    %v2182 = vmul.f32 %v1926, %v1926
    %v2183 = vmul.f32 %v1927, %v1927
    %v2184 = vmul.f32 %v1928, %v1928
    %v2185 = vmul.f32 %v1929, %v1929
    %v2186 = vmul.f32 %v1930, %v1930
    %v2187 = vmul.f32 %v1931, %v1931
    %v2188 = vmul.f32 %v1932, %v1932
    %v2189 = vmul.f32 %v1933, %v1933
    %v2190 = vmul.f32 %v1934, %v1934
    %v2191 = vmul.f32 %v1935, %v1935
    %v2192 = vmul.f32 %v1936, %v1936
    %v2193 = vmul.f32 %v1937, %v1937
    %v2194 = vmul.f32 %v1938, %v1938
    %v2195 = vmul.f32 %v1939, %v1939
    %v2196 = vmul.f32 %v1940, %v1940
    %v2197 = vmul.f32 %v1941, %v1941
    %v2198 = vmul.f32 %v1942, %v1942
    %v2199 = vmul.f32 %v1943, %v1943
    %v2200 = vmul.f32 %v1944, %v1944
    %v2201 = vmul.f32 %v1945, %v1945
    %v2202 = vmul.f32 %v1946, %v1946
    %v2203 = vmul.f32 %v1947, %v1947
    %v2204 = vmul.f32 %v1948, %v1948
    %v2205 = vmul.f32 %v1949, %v1949
    %v2206 = vmul.f32 %v1950, %v1950
    %v2207 = vmul.f32 %v1951, %v1951
    %v2208 = vmul.f32 %v1952, %v1952
    %v2209 = vmul.f32 %v1953, %v1953
    %v2210 = vmul.f32 %v1954, %v1954
    %v2211 = vmul.f32 %v1955, %v1955
    %v2212 = vmul.f32 %v1956, %v1956
    %v2213 = vmul.f32 %v1957, %v1957
    %v2214 = vmul.f32 %v1958, %v1958
    %v2215 = vmul.f32 %v1959, %v1959
    %v2216 = vmul.f32 %v1960, %v1960
    %v2217 = vmul.f32 %v1961, %v1961
    %v2218 = vmul.f32 %v1962, %v1962
    %v2219 = vmul.f32 %v1963, %v1963
    %v2220 = vmul.f32 %v1964, %v1964
    %v2221 = vmul.f32 %v1965, %v1965
    %v2222 = vmul.f32 %v1966, %v1966
    %v2223 = vmul.f32 %v1967, %v1967
    %v2224 = vmul.f32 %v1968, %v1968
    %v2225 = vmul.f32 %v1969, %v1969
    %v2226 = vmul.f32 %v1970, %v1970
    %v2227 = vmul.f32 %v1971, %v1971
    %v2228 = vmul.f32 %v1972, %v1972
    %v2229 = vmul.f32 %v1973, %v1973
    %v2230 = vmul.f32 %v1974, %v1974
    %v2231 = vmul.f32 %v1975, %v1975
    %v2232 = vmul.f32 %v1976, %v1976
    %v2233 = vmul.f32 %v1977, %v1977
    %v2234 = vmul.f32 %v1978, %v1978
    %v2235 = vmul.f32 %v1979, %v1979
    %v2236 = vmul.f32 %v1980, %v1980
    %v2237 = vmul.f32 %v1981, %v1981
    %v2238 = vmul.f32 %v1982, %v1982
    %v2239 = vmul.f32 %v1983, %v1983
    %v2240 = vmul.f32 %v1984, %v1984
    %v2241 = vmul.f32 %v1985, %v1985
    %v2242 = vmul.f32 %v1986, %v1986
    %v2243 = vmul.f32 %v1987, %v1987
    %v2244 = vmul.f32 %v1988, %v1988
    %v2245 = vmul.f32 %v1989, %v1989
    %v2246 = vmul.f32 %v1990, %v1990
    %v2247 = vmul.f32 %v1991, %v1991
    %v2248 = vmul.f32 %v1992, %v1992
    %v2249 = vmul.f32 %v1993, %v1993
    %v2250 = vmul.f32 %v1994, %v1994
    %v2251 = vmul.f32 %v1995, %v1995
    %v2252 = vmul.f32 %v1996, %v1996
    %v2253 = vmul.f32 %v1997, %v1997
    %v2254 = vmul.f32 %v1998, %v1998
    %v2255 = vmul.f32 %v1999, %v1999
    %v2256 = vmul.f32 %v2000, %v2000
    %v2257 = vmul.f32 %v2001, %v2001
    %v2258 = vmul.f32 %v2002, %v2002
    %v2259 = vmul.f32 %v2003, %v2003
    %v2260 = vmul.f32 %v2004, %v2004
    %v2261 = vmul.f32 %v2005, %v2005
    %v2262 = vmul.f32 %v2006, %v2006
    %v2263 = vmul.f32 %v2007, %v2007
    %v2264 = vmul.f32 %v2008, %v2008
    %v2265 = vmul.f32 %v2009, %v2009
    %v2266 = vmul.f32 %v2010, %v2010
    %v2267 = vmul.f32 %v2011, %v2011
    %v2268 = vmul.f32 %v2012, %v2012
    %v2269 = vmul.f32 %v2013, %v2013
    %v2270 = vmul.f32 %v2014, %v2014
    %v2271 = vmul.f32 %v2015, %v2015
    %v2272 = vmul.f32 %v2016, %v2016
    %v2273 = vmul.f32 %v2017, %v2017
    %v2274 = vmul.f32 %v2018, %v2018
    %v2275 = vmul.f32 %v2019, %v2019
    %v2276 = vmul.f32 %v2020, %v2020
    %v2277 = vmul.f32 %v2021, %v2021
    %v2278 = vmul.f32 %v2022, %v2022
    %v2279 = vmul.f32 %v2023, %v2023
    %v2280 = vmul.f32 %v2024, %v2024
    %v2281 = vmul.f32 %v2025, %v2025
    %v2282 = vmul.f32 %v2026, %v2026
    %v2283 = vmul.f32 %v2027, %v2027
    %v2284 = vmul.f32 %v2028, %v2028
    %v2285 = vmul.f32 %v2029, %v2029
    %v2286 = vmul.f32 %v2030, %v2030
    %v2287 = vmul.f32 %v2031, %v2031
    %v2288 = vmul.f32 %v2032, %v2032
    %v2289 = vmul.f32 %v2033, %v2033
    %v2290 = vmul.f32 %v2034, %v2034
    %v2291 = vmul.f32 %v2035, %v2035
    %v2292 = vmul.f32 %v2036, %v2036
    %v2293 = vmul.f32 %v2037, %v2037
    %v2294 = vmul.f32 %v2038, %v2038
    %v2295 = vmul.f32 %v2039, %v2039
    %v2296 = vmul.f32 %v2040, %v2040
    %v2297 = vmul.f32 %v2041, %v2041
    %v2298 = vmul.f32 %v2042, %v2042
    %v2299 = vmul.f32 %v2043, %v2043
    %v2300 = vmul.f32 %v2044, %v2044
    %v2301 = vmul.f32 %v2045, %v2045
    %v2302 = vmul.f32 %v2046, %v2046
    %v2303 = vmul.f32 %v2047, %v2047
    %v2304 = vmul.f32 %v2048, %v2048
    %v2305 = vmul.f32 %v2049, %v2049
    %v2306 = vmul.f32 %v2050, %v2050
    %v2307 = vmul.f32 %v2051, %v2051
    %v2308 = vmul.f32 %v2052, %v2052
    %v2309 = vmul.f32 %v2053, %v2053
    %v2310 = vmul.f32 %v2054, %v2054
    %v2311 = vmul.f32 %v2055, %v2055
    %v2312 = vmul.f32 %v2056, %v2056
    %v2313 = vmul.f32 %v2057, %v2057
    %v2314 = vmul.f32 %v2058, %v2058
    %v2315 = vmul.f32 %v2059, %v2059
    %v2316 = vmul.f32 %v2060, %v2060
    %v2317 = vmul.f32 %v2061, %v2061
    %v2318 = vmul.f32 %v2062, %v2062
    %v2319 = vmul.f32 %v2063, %v2063
    %v2320 = vmul.f32 %v2064, %v2064
    %v2321 = vmul.f32 %v2065, %v2065
    %v2322 = vmul.f32 %v2066, %v2066
    %v2323 = vmul.f32 %v2067, %v2067
    %v2324 = vmul.f32 %v2068, %v2068
    %v2325 = vmul.f32 %v2069, %v2069
    %v2326 = vmul.f32 %v2070, %v2070
    %v2327 = vmul.f32 %v2071, %v2071
    %v2328 = vmul.f32 %v2072, %v2072
    %v2329 = vsub.f32 %v2073, 1.0
    %v2330 = vsub.f32 %v2074, 1.0
    %v2331 = vsub.f32 %v2075, 1.0
    %v2332 = vsub.f32 %v2076, 1.0
    %v2333 = vsub.f32 %v2077, 1.0
    %v2334 = vsub.f32 %v2078, 1.0
    %v2335 = vsub.f32 %v2079, 1.0
    %v2336 = vsub.f32 %v2080, 1.0
    %v2337 = vsub.f32 %v2081, 1.0
    %v2338 = vsub.f32 %v2082, 1.0
    %v2339 = vsub.f32 %v2083, 1.0
    %v2340 = vsub.f32 %v2084, 1.0
    %v2341 = vsub.f32 %v2085, 1.0
    %v2342 = vsub.f32 %v2086, 1.0
    %v2343 = vsub.f32 %v2087, 1.0
    %v2344 = vsub.f32 %v2088, 1.0
    %v2345 = vsub.f32 %v2089, 1.0
    %v2346 = vsub.f32 %v2090, 1.0
    %v2347 = vsub.f32 %v2091, 1.0
    %v2348 = vsub.f32 %v2092, 1.0
    %v2349 = vsub.f32 %v2093, 1.0
    %v2350 = vsub.f32 %v2094, 1.0
    %v2351 = vsub.f32 %v2095, 1.0
    %v2352 = vsub.f32 %v2096, 1.0
    %v2353 = vsub.f32 %v2097, 1.0
    %v2354 = vsub.f32 %v2098, 1.0
    %v2355 = vsub.f32 %v2099, 1.0
    %v2356 = vsub.f32 %v2100, 1.0
    %v2357 = vsub.f32 %v2101, 1.0
    %v2358 = vsub.f32 %v2102, 1.0
    %v2359 = vsub.f32 %v2103, 1.0
    %v2360 = vsub.f32 %v2104, 1.0
    %v2361 = vsub.f32 %v2105, 1.0
    %v2362 = vsub.f32 %v2106, 1.0
    %v2363 = vsub.f32 %v2107, 1.0
    %v2364 = vsub.f32 %v2108, 1.0
    %v2365 = vsub.f32 %v2109, 1.0
    %v2366 = vsub.f32 %v2110, 1.0
    %v2367 = vsub.f32 %v2111, 1.0
    %v2368 = vsub.f32 %v2112, 1.0
    %v2369 = vsub.f32 %v2113, 1.0
    %v2370 = vsub.f32 %v2114, 1.0
    %v2371 = vsub.f32 %v2115, 1.0
    %v2372 = vsub.f32 %v2116, 1.0
    %v2373 = vsub.f32 %v2117, 1.0
    %v2374 = vsub.f32 %v2118, 1.0
    %v2375 = vsub.f32 %v2119, 1.0
    %v2376 = vsub.f32 %v2120, 1.0
    %v2377 = vsub.f32 %v2121, 1.0
    %v2378 = vsub.f32 %v2122, 1.0
    %v2379 = vsub.f32 %v2123, 1.0
    %v2380 = vsub.f32 %v2124, 1.0
    %v2381 = vsub.f32 %v2125, 1.0
    %v2382 = vsub.f32 %v2126, 1.0
    %v2383 = vsub.f32 %v2127, 1.0
    %v2384 = vsub.f32 %v2128, 1.0
    %v2385 = vsub.f32 %v2129, 1.0
    %v2386 = vsub.f32 %v2130, 1.0
    %v2387 = vsub.f32 %v2131, 1.0
    %v2388 = vsub.f32 %v2132, 1.0
    %v2389 = vsub.f32 %v2133, 1.0
    %v2390 = vsub.f32 %v2134, 1.0
    %v2391 = vsub.f32 %v2135, 1.0
    %v2392 = vsub.f32 %v2136, 1.0
    %v2393 = vsub.f32 %v2137, 1.0
    %v2394 = vsub.f32 %v2138, 1.0
    %v2395 = vsub.f32 %v2139, 1.0
    %v2396 = vsub.f32 %v2140, 1.0
    %v2397 = vsub.f32 %v2141, 1.0
    %v2398 = vsub.f32 %v2142, 1.0
    %v2399 = vsub.f32 %v2143, 1.0
    %v2400 = vsub.f32 %v2144, 1.0
    %v2401 = vsub.f32 %v2145, 1.0
    %v2402 = vsub.f32 %v2146, 1.0
    %v2403 = vsub.f32 %v2147, 1.0
    %v2404 = vsub.f32 %v2148, 1.0
    %v2405 = vsub.f32 %v2149, 1.0
    %v2406 = vsub.f32 %v2150, 1.0
    %v2407 = vsub.f32 %v2151, 1.0
    %v2408 = vsub.f32 %v2152, 1.0
    %v2409 = vsub.f32 %v2153, 1.0
    %v2410 = vsub.f32 %v2154, 1.0
    %v2411 = vsub.f32 %v2155, 1.0
    %v2412 = vsub.f32 %v2156, 1.0
    %v2413 = vsub.f32 %v2157, 1.0
    %v2414 = vsub.f32 %v2158, 1.0
    %v2415 = vsub.f32 %v2159, 1.0
    %v2416 = vsub.f32 %v2160, 1.0
    %v2417 = vsub.f32 %v2161, 1.0
    %v2418 = vsub.f32 %v2162, 1.0
    %v2419 = vsub.f32 %v2163, 1.0
    %v2420 = vsub.f32 %v2164, 1.0
    %v2421 = vsub.f32 %v2165, 1.0
    %v2422 = vsub.f32 %v2166, 1.0
    %v2423 = vsub.f32 %v2167, 1.0
    %v2424 = vsub.f32 %v2168, 1.0
    %v2425 = vsub.f32 %v2169, 1.0
    %v2426 = vsub.f32 %v2170, 1.0
    %v2427 = vsub.f32 %v2171, 1.0
    %v2428 = vsub.f32 %v2172, 1.0
    %v2429 = vsub.f32 %v2173, 1.0
    %v2430 = vsub.f32 %v2174, 1.0
    %v2431 = vsub.f32 %v2175, 1.0
    %v2432 = vsub.f32 %v2176, 1.0
    %v2433 = vsub.f32 %v2177, 1.0
    %v2434 = vsub.f32 %v2178, 1.0
    %v2435 = vsub.f32 %v2179, 1.0
    %v2436 = vsub.f32 %v2180, 1.0
    %v2437 = vsub.f32 %v2181, 1.0
    %v2438 = vsub.f32 %v2182, 1.0
    %v2439 = vsub.f32 %v2183, 1.0
    %v2440 = vsub.f32 %v2184, 1.0
    %v2441 = vsub.f32 %v2185, 1.0
    %v2442 = vsub.f32 %v2186, 1.0
    %v2443 = vsub.f32 %v2187, 1.0
    %v2444 = vsub.f32 %v2188, 1.0
    %v2445 = vsub.f32 %v2189, 1.0
    %v2446 = vsub.f32 %v2190, 1.0
    %v2447 = vsub.f32 %v2191, 1.0
    %v2448 = vsub.f32 %v2192, 1.0
    %v2449 = vsub.f32 %v2193, 1.0
    %v2450 = vsub.f32 %v2194, 1.0
    %v2451 = vsub.f32 %v2195, 1.0
    %v2452 = vsub.f32 %v2196, 1.0
    %v2453 = vsub.f32 %v2197, 1.0
    %v2454 = vsub.f32 %v2198, 1.0
    %v2455 = vsub.f32 %v2199, 1.0
    %v2456 = vsub.f32 %v2200, 1.0
    %v2457 = vsub.f32 %v2201, 1.0
    %v2458 = vsub.f32 %v2202, 1.0
    %v2459 = vsub.f32 %v2203, 1.0
    %v2460 = vsub.f32 %v2204, 1.0
    %v2461 = vsub.f32 %v2205, 1.0
    %v2462 = vsub.f32 %v2206, 1.0
    %v2463 = vsub.f32 %v2207, 1.0
    %v2464 = vsub.f32 %v2208, 1.0
    %v2465 = vsub.f32 %v2209, 1.0
    %v2466 = vsub.f32 %v2210, 1.0
    %v2467 = vsub.f32 %v2211, 1.0
    %v2468 = vsub.f32 %v2212, 1.0
    %v2469 = vsub.f32 %v2213, 1.0
    %v2470 = vsub.f32 %v2214, 1.0
    %v2471 = vsub.f32 %v2215, 1.0
    %v2472 = vsub.f32 %v2216, 1.0
    %v2473 = vsub.f32 %v2217, 1.0
    %v2474 = vsub.f32 %v2218, 1.0
    %v2475 = vsub.f32 %v2219, 1.0
    %v2476 = vsub.f32 %v2220, 1.0
    %v2477 = vsub.f32 %v2221, 1.0
    %v2478 = vsub.f32 %v2222, 1.0
    %v2479 = vsub.f32 %v2223, 1.0
    %v2480 = vsub.f32 %v2224, 1.0
    %v2481 = vsub.f32 %v2225, 1.0
    %v2482 = vsub.f32 %v2226, 1.0
    %v2483 = vsub.f32 %v2227, 1.0
    %v2484 = vsub.f32 %v2228, 1.0
    %v2485 = vsub.f32 %v2229, 1.0
    %v2486 = vsub.f32 %v2230, 1.0
    %v2487 = vsub.f32 %v2231, 1.0
    %v2488 = vsub.f32 %v2232, 1.0
    %v2489 = vsub.f32 %v2233, 1.0
    %v2490 = vsub.f32 %v2234, 1.0
    %v2491 = vsub.f32 %v2235, 1.0
    %v2492 = vsub.f32 %v2236, 1.0
    %v2493 = vsub.f32 %v2237, 1.0
    %v2494 = vsub.f32 %v2238, 1.0
    %v2495 = vsub.f32 %v2239, 1.0
    %v2496 = vsub.f32 %v2240, 1.0
    %v2497 = vsub.f32 %v2241, 1.0
    %v2498 = vsub.f32 %v2242, 1.0
    %v2499 = vsub.f32 %v2243, 1.0
    %v2500 = vsub.f32 %v2244, 1.0
    %v2501 = vsub.f32 %v2245, 1.0
    %v2502 = vsub.f32 %v2246, 1.0
    %v2503 = vsub.f32 %v2247, 1.0
    %v2504 = vsub.f32 %v2248, 1.0
    %v2505 = vsub.f32 %v2249, 1.0
    %v2506 = vsub.f32 %v2250, 1.0
    %v2507 = vsub.f32 %v2251, 1.0
    %v2508 = vsub.f32 %v2252, 1.0
    %v2509 = vsub.f32 %v2253, 1.0
    %v2510 = vsub.f32 %v2254, 1.0
    %v2511 = vsub.f32 %v2255, 1.0
    %v2512 = vsub.f32 %v2256, 1.0
    %v2513 = vsub.f32 %v2257, 1.0
    %v2514 = vsub.f32 %v2258, 1.0
    %v2515 = vsub.f32 %v2259, 1.0
    %v2516 = vsub.f32 %v2260, 1.0
    %v2517 = vsub.f32 %v2261, 1.0
    %v2518 = vsub.f32 %v2262, 1.0
    %v2519 = vsub.f32 %v2263, 1.0
    %v2520 = vsub.f32 %v2264, 1.0
    %v2521 = vsub.f32 %v2265, 1.0
    %v2522 = vsub.f32 %v2266, 1.0
    %v2523 = vsub.f32 %v2267, 1.0
    %v2524 = vsub.f32 %v2268, 1.0
    %v2525 = vsub.f32 %v2269, 1.0
    %v2526 = vsub.f32 %v2270, 1.0
    %v2527 = vsub.f32 %v2271, 1.0
    %v2528 = vsub.f32 %v2272, 1.0
    %v2529 = vsub.f32 %v2273, 1.0
    %v2530 = vsub.f32 %v2274, 1.0
    %v2531 = vsub.f32 %v2275, 1.0
    %v2532 = vsub.f32 %v2276, 1.0
    %v2533 = vsub.f32 %v2277, 1.0
    %v2534 = vsub.f32 %v2278, 1.0
    %v2535 = vsub.f32 %v2279, 1.0
    %v2536 = vsub.f32 %v2280, 1.0
    %v2537 = vsub.f32 %v2281, 1.0
    %v2538 = vsub.f32 %v2282, 1.0
    %v2539 = vsub.f32 %v2283, 1.0
    %v2540 = vsub.f32 %v2284, 1.0
    %v2541 = vsub.f32 %v2285, 1.0
    %v2542 = vsub.f32 %v2286, 1.0
    %v2543 = vsub.f32 %v2287, 1.0
    %v2544 = vsub.f32 %v2288, 1.0
    %v2545 = vsub.f32 %v2289, 1.0
    %v2546 = vsub.f32 %v2290, 1.0
    %v2547 = vsub.f32 %v2291, 1.0
    %v2548 = vsub.f32 %v2292, 1.0
    %v2549 = vsub.f32 %v2293, 1.0
    %v2550 = vsub.f32 %v2294, 1.0
    %v2551 = vsub.f32 %v2295, 1.0
    %v2552 = vsub.f32 %v2296, 1.0
    %v2553 = vsub.f32 %v2297, 1.0
    %v2554 = vsub.f32 %v2298, 1.0
    %v2555 = vsub.f32 %v2299, 1.0
    %v2556 = vsub.f32 %v2300, 1.0
    %v2557 = vsub.f32 %v2301, 1.0
    %v2558 = vsub.f32 %v2302, 1.0
    %v2559 = vsub.f32 %v2303, 1.0
    %v2560 = vsub.f32 %v2304, 1.0
    %v2561 = vsub.f32 %v2305, 1.0
    %v2562 = vsub.f32 %v2306, 1.0
    %v2563 = vsub.f32 %v2307, 1.0
    %v2564 = vsub.f32 %v2308, 1.0
    %v2565 = vsub.f32 %v2309, 1.0
    %v2566 = vsub.f32 %v2310, 1.0
    %v2567 = vsub.f32 %v2311, 1.0
    %v2568 = vsub.f32 %v2312, 1.0
    %v2569 = vsub.f32 %v2313, 1.0
    %v2570 = vsub.f32 %v2314, 1.0
    %v2571 = vsub.f32 %v2315, 1.0
    %v2572 = vsub.f32 %v2316, 1.0
    %v2573 = vsub.f32 %v2317, 1.0
    %v2574 = vsub.f32 %v2318, 1.0
    %v2575 = vsub.f32 %v2319, 1.0
    %v2576 = vsub.f32 %v2320, 1.0
    %v2577 = vsub.f32 %v2321, 1.0
    %v2578 = vsub.f32 %v2322, 1.0
    %v2579 = vsub.f32 %v2323, 1.0
    %v2580 = vsub.f32 %v2324, 1.0
    %v2581 = vsub.f32 %v2325, 1.0
    %v2582 = vsub.f32 %v2326, 1.0
    %v2583 = vsub.f32 %v2327, 1.0
    %v2584 = vsub.f32 %v2328, 1.0
    %v2585 = vmul.f32 %v793, %v2329
    %v2586 = vmul.f32 %v794, %v2330
    %v2587 = vmul.f32 %v795, %v2331
    %v2588 = vmul.f32 %v796, %v2332
    %v2589 = vmul.f32 %v797, %v2333
    %v2590 = vmul.f32 %v798, %v2334
    %v2591 = vmul.f32 %v799, %v2335
    %v2592 = vmul.f32 %v800, %v2336
    %v2593 = vmul.f32 %v801, %v2337
    %v2594 = vmul.f32 %v802, %v2338
    %v2595 = vmul.f32 %v803, %v2339
    %v2596 = vmul.f32 %v804, %v2340
    %v2597 = vmul.f32 %v805, %v2341
    %v2598 = vmul.f32 %v806, %v2342
    %v2599 = vmul.f32 %v807, %v2343
    %v2600 = vmul.f32 %v808, %v2344
    %v2601 = vmul.f32 %v809, %v2345
    %v2602 = vmul.f32 %v810, %v2346
    %v2603 = vmul.f32 %v811, %v2347
    %v2604 = vmul.f32 %v812, %v2348
    %v2605 = vmul.f32 %v813, %v2349
    %v2606 = vmul.f32 %v814, %v2350
    %v2607 = vmul.f32 %v815, %v2351
    %v2608 = vmul.f32 %v816, %v2352
    %v2609 = vmul.f32 %v817, %v2353
    %v2610 = vmul.f32 %v818, %v2354
    %v2611 = vmul.f32 %v819, %v2355
    %v2612 = vmul.f32 %v820, %v2356
    %v2613 = vmul.f32 %v821, %v2357
    %v2614 = vmul.f32 %v822, %v2358
    %v2615 = vmul.f32 %v823, %v2359
    %v2616 = vmul.f32 %v824, %v2360
    %v2617 = vmul.f32 %v825, %v2361
    %v2618 = vmul.f32 %v826, %v2362
    %v2619 = vmul.f32 %v827, %v2363
    %v2620 = vmul.f32 %v828, %v2364
    %v2621 = vmul.f32 %v829, %v2365
    %v2622 = vmul.f32 %v830, %v2366
    %v2623 = vmul.f32 %v831, %v2367
    %v2624 = vmul.f32 %v832, %v2368
    %v2625 = vmul.f32 %v833, %v2369
    %v2626 = vmul.f32 %v834, %v2370
    %v2627 = vmul.f32 %v835, %v2371
    %v2628 = vmul.f32 %v836, %v2372
    %v2629 = vmul.f32 %v837, %v2373
    %v2630 = vmul.f32 %v838, %v2374
    %v2631 = vmul.f32 %v839, %v2375
    %v2632 = vmul.f32 %v840, %v2376
    %v2633 = vmul.f32 %v841, %v2377
    %v2634 = vmul.f32 %v842, %v2378
    %v2635 = vmul.f32 %v843, %v2379
    %v2636 = vmul.f32 %v844, %v2380
    %v2637 = vmul.f32 %v845, %v2381
    %v2638 = vmul.f32 %v846, %v2382
    %v2639 = vmul.f32 %v847, %v2383
    %v2640 = vmul.f32 %v848, %v2384
    %v2641 = vmul.f32 %v849, %v2385
    %v2642 = vmul.f32 %v850, %v2386
    %v2643 = vmul.f32 %v851, %v2387
    %v2644 = vmul.f32 %v852, %v2388
    %v2645 = vmul.f32 %v853, %v2389
    %v2646 = vmul.f32 %v854, %v2390
    %v2647 = vmul.f32 %v855, %v2391
    %v2648 = vmul.f32 %v856, %v2392
    %v2649 = vmul.f32 %v857, %v2393
    %v2650 = vmul.f32 %v858, %v2394
    %v2651 = vmul.f32 %v859, %v2395
    %v2652 = vmul.f32 %v860, %v2396
    %v2653 = vmul.f32 %v861, %v2397
    %v2654 = vmul.f32 %v862, %v2398
    %v2655 = vmul.f32 %v863, %v2399
    %v2656 = vmul.f32 %v864, %v2400
    %v2657 = vmul.f32 %v865, %v2401
    %v2658 = vmul.f32 %v866, %v2402
    %v2659 = vmul.f32 %v867, %v2403
    %v2660 = vmul.f32 %v868, %v2404
    %v2661 = vmul.f32 %v869, %v2405
    %v2662 = vmul.f32 %v870, %v2406
    %v2663 = vmul.f32 %v871, %v2407
    %v2664 = vmul.f32 %v872, %v2408
    %v2665 = vmul.f32 %v873, %v2409
    %v2666 = vmul.f32 %v874, %v2410
    %v2667 = vmul.f32 %v875, %v2411
    %v2668 = vmul.f32 %v876, %v2412
    %v2669 = vmul.f32 %v877, %v2413
    %v2670 = vmul.f32 %v878, %v2414
    %v2671 = vmul.f32 %v879, %v2415
    %v2672 = vmul.f32 %v880, %v2416
    %v2673 = vmul.f32 %v881, %v2417
    %v2674 = vmul.f32 %v882, %v2418
    %v2675 = vmul.f32 %v883, %v2419
    %v2676 = vmul.f32 %v884, %v2420
    %v2677 = vmul.f32 %v885, %v2421
    %v2678 = vmul.f32 %v886, %v2422
    %v2679 = vmul.f32 %v887, %v2423
    %v2680 = vmul.f32 %v888, %v2424
    %v2681 = vmul.f32 %v889, %v2425
    %v2682 = vmul.f32 %v890, %v2426
    %v2683 = vmul.f32 %v891, %v2427
    %v2684 = vmul.f32 %v892, %v2428
    %v2685 = vmul.f32 %v893, %v2429
    %v2686 = vmul.f32 %v894, %v2430
    %v2687 = vmul.f32 %v895, %v2431
    %v2688 = vmul.f32 %v896, %v2432
    %v2689 = vmul.f32 %v897, %v2433
    %v2690 = vmul.f32 %v898, %v2434
    %v2691 = vmul.f32 %v899, %v2435
    %v2692 = vmul.f32 %v900, %v2436
    %v2693 = vmul.f32 %v901, %v2437
    %v2694 = vmul.f32 %v902, %v2438
    %v2695 = vmul.f32 %v903, %v2439
    %v2696 = vmul.f32 %v904, %v2440
    %v2697 = vmul.f32 %v905, %v2441
    %v2698 = vmul.f32 %v906, %v2442
    %v2699 = vmul.f32 %v907, %v2443
    %v2700 = vmul.f32 %v908, %v2444
    %v2701 = vmul.f32 %v909, %v2445
    %v2702 = vmul.f32 %v910, %v2446
    %v2703 = vmul.f32 %v911, %v2447
    %v2704 = vmul.f32 %v912, %v2448
    %v2705 = vmul.f32 %v913, %v2449
    %v2706 = vmul.f32 %v914, %v2450
    %v2707 = vmul.f32 %v915, %v2451
    %v2708 = vmul.f32 %v916, %v2452
    %v2709 = vmul.f32 %v917, %v2453
    %v2710 = vmul.f32 %v918, %v2454
    %v2711 = vmul.f32 %v919, %v2455
    %v2712 = vmul.f32 %v920, %v2456
    %v2713 = vmul.f32 %v921, %v2457
    %v2714 = vmul.f32 %v922, %v2458
    %v2715 = vmul.f32 %v923, %v2459
    %v2716 = vmul.f32 %v924, %v2460
    %v2717 = vmul.f32 %v925, %v2461
    %v2718 = vmul.f32 %v926, %v2462
    %v2719 = vmul.f32 %v927, %v2463
    %v2720 = vmul.f32 %v928, %v2464
    %v2721 = vmul.f32 %v929, %v2465
    %v2722 = vmul.f32 %v930, %v2466
    %v2723 = vmul.f32 %v931, %v2467
    %v2724 = vmul.f32 %v932, %v2468
    %v2725 = vmul.f32 %v933, %v2469
    %v2726 = vmul.f32 %v934, %v2470
    %v2727 = vmul.f32 %v935, %v2471
    %v2728 = vmul.f32 %v936, %v2472
    %v2729 = vmul.f32 %v937, %v2473
    %v2730 = vmul.f32 %v938, %v2474
    %v2731 = vmul.f32 %v939, %v2475
    %v2732 = vmul.f32 %v940, %v2476
    %v2733 = vmul.f32 %v941, %v2477
    %v2734 = vmul.f32 %v942, %v2478
    %v2735 = vmul.f32 %v943, %v2479
    %v2736 = vmul.f32 %v944, %v2480
    %v2737 = vmul.f32 %v945, %v2481
    %v2738 = vmul.f32 %v946, %v2482
    %v2739 = vmul.f32 %v947, %v2483
    %v2740 = vmul.f32 %v948, %v2484
    %v2741 = vmul.f32 %v949, %v2485
    %v2742 = vmul.f32 %v950, %v2486
    %v2743 = vmul.f32 %v951, %v2487
    %v2744 = vmul.f32 %v952, %v2488
    %v2745 = vmul.f32 %v953, %v2489
    %v2746 = vmul.f32 %v954, %v2490
    %v2747 = vmul.f32 %v955, %v2491
    %v2748 = vmul.f32 %v956, %v2492
    %v2749 = vmul.f32 %v957, %v2493
    %v2750 = vmul.f32 %v958, %v2494
    %v2751 = vmul.f32 %v959, %v2495
    %v2752 = vmul.f32 %v960, %v2496
    %v2753 = vmul.f32 %v961, %v2497
    %v2754 = vmul.f32 %v962, %v2498
    %v2755 = vmul.f32 %v963, %v2499
    %v2756 = vmul.f32 %v964, %v2500
    %v2757 = vmul.f32 %v965, %v2501
    %v2758 = vmul.f32 %v966, %v2502
    %v2759 = vmul.f32 %v967, %v2503
    %v2760 = vmul.f32 %v968, %v2504
    %v2761 = vmul.f32 %v969, %v2505
    %v2762 = vmul.f32 %v970, %v2506
    %v2763 = vmul.f32 %v971, %v2507
    %v2764 = vmul.f32 %v972, %v2508
    %v2765 = vmul.f32 %v973, %v2509
    %v2766 = vmul.f32 %v974, %v2510
    %v2767 = vmul.f32 %v975, %v2511
    %v2768 = vmul.f32 %v976, %v2512
    %v2769 = vmul.f32 %v977, %v2513
    %v2770 = vmul.f32 %v978, %v2514
    %v2771 = vmul.f32 %v979, %v2515
    %v2772 = vmul.f32 %v980, %v2516
    %v2773 = vmul.f32 %v981, %v2517
    %v2774 = vmul.f32 %v982, %v2518
    %v2775 = vmul.f32 %v983, %v2519
    %v2776 = vmul.f32 %v984, %v2520
    %v2777 = vmul.f32 %v985, %v2521
    %v2778 = vmul.f32 %v986, %v2522
    %v2779 = vmul.f32 %v987, %v2523
    %v2780 = vmul.f32 %v988, %v2524
    %v2781 = vmul.f32 %v989, %v2525
    %v2782 = vmul.f32 %v990, %v2526
    %v2783 = vmul.f32 %v991, %v2527
    %v2784 = vmul.f32 %v992, %v2528
    %v2785 = vmul.f32 %v993, %v2529
    %v2786 = vmul.f32 %v994, %v2530
    %v2787 = vmul.f32 %v995, %v2531
    %v2788 = vmul.f32 %v996, %v2532
    %v2789 = vmul.f32 %v997, %v2533
    %v2790 = vmul.f32 %v998, %v2534
    %v2791 = vmul.f32 %v999, %v2535
    %v2792 = vmul.f32 %v1000, %v2536
    %v2793 = vmul.f32 %v1001, %v2537
    %v2794 = vmul.f32 %v1002, %v2538
    %v2795 = vmul.f32 %v1003, %v2539
    %v2796 = vmul.f32 %v1004, %v2540
    %v2797 = vmul.f32 %v1005, %v2541
    %v2798 = vmul.f32 %v1006, %v2542
    %v2799 = vmul.f32 %v1007, %v2543
    %v2800 = vmul.f32 %v1008, %v2544
    %v2801 = vmul.f32 %v1009, %v2545
    %v2802 = vmul.f32 %v1010, %v2546
    %v2803 = vmul.f32 %v1011, %v2547
    %v2804 = vmul.f32 %v1012, %v2548
    %v2805 = vmul.f32 %v1013, %v2549
    %v2806 = vmul.f32 %v1014, %v2550
    %v2807 = vmul.f32 %v1015, %v2551
    %v2808 = vmul.f32 %v1016, %v2552
    %v2809 = vmul.f32 %v1017, %v2553
    %v2810 = vmul.f32 %v1018, %v2554
    %v2811 = vmul.f32 %v1019, %v2555
    %v2812 = vmul.f32 %v1020, %v2556
    %v2813 = vmul.f32 %v1021, %v2557
    %v2814 = vmul.f32 %v1022, %v2558
    %v2815 = vmul.f32 %v1023, %v2559
    %v2816 = vmul.f32 %v1024, %v2560
    %v2817 = vmul.f32 %v1025, %v2561
    %v2818 = vmul.f32 %v1026, %v2562
    %v2819 = vmul.f32 %v1027, %v2563
    %v2820 = vmul.f32 %v1028, %v2564
    %v2821 = vmul.f32 %v1029, %v2565
    %v2822 = vmul.f32 %v1030, %v2566
    %v2823 = vmul.f32 %v1031, %v2567
    %v2824 = vmul.f32 %v1032, %v2568
    %v2825 = vmul.f32 %v1033, %v2569
    %v2826 = vmul.f32 %v1034, %v2570
    %v2827 = vmul.f32 %v1035, %v2571
    %v2828 = vmul.f32 %v1036, %v2572
    %v2829 = vmul.f32 %v1037, %v2573
    %v2830 = vmul.f32 %v1038, %v2574
    %v2831 = vmul.f32 %v1039, %v2575
    %v2832 = vmul.f32 %v1040, %v2576
    %v2833 = vmul.f32 %v1041, %v2577
    %v2834 = vmul.f32 %v1042, %v2578
    %v2835 = vmul.f32 %v1043, %v2579
    %v2836 = vmul.f32 %v1044, %v2580
    %v2837 = vmul.f32 %v1045, %v2581
    %v2838 = vmul.f32 %v1046, %v2582
    %v2839 = vmul.f32 %v1047, %v2583
    %v2840 = vmul.f32 %v1048, %v2584
    %v2841 = vadd.f32 %v2073, 1.0
    %v2842 = vadd.f32 %v2074, 1.0
    %v2843 = vadd.f32 %v2075, 1.0
    %v2844 = vadd.f32 %v2076, 1.0
    %v2845 = vadd.f32 %v2077, 1.0
    %v2846 = vadd.f32 %v2078, 1.0
    %v2847 = vadd.f32 %v2079, 1.0
    %v2848 = vadd.f32 %v2080, 1.0
    %v2849 = vadd.f32 %v2081, 1.0
    %v2850 = vadd.f32 %v2082, 1.0
    %v2851 = vadd.f32 %v2083, 1.0
    %v2852 = vadd.f32 %v2084, 1.0
    %v2853 = vadd.f32 %v2085, 1.0
    %v2854 = vadd.f32 %v2086, 1.0
    %v2855 = vadd.f32 %v2087, 1.0
    %v2856 = vadd.f32 %v2088, 1.0
    %v2857 = vadd.f32 %v2089, 1.0
    %v2858 = vadd.f32 %v2090, 1.0
    %v2859 = vadd.f32 %v2091, 1.0
    %v2860 = vadd.f32 %v2092, 1.0
    %v2861 = vadd.f32 %v2093, 1.0
    %v2862 = vadd.f32 %v2094, 1.0
    %v2863 = vadd.f32 %v2095, 1.0
    %v2864 = vadd.f32 %v2096, 1.0
    %v2865 = vadd.f32 %v2097, 1.0
    %v2866 = vadd.f32 %v2098, 1.0
    %v2867 = vadd.f32 %v2099, 1.0
    %v2868 = vadd.f32 %v2100, 1.0
    %v2869 = vadd.f32 %v2101, 1.0
    %v2870 = vadd.f32 %v2102, 1.0
    %v2871 = vadd.f32 %v2103, 1.0
    %v2872 = vadd.f32 %v2104, 1.0
    %v2873 = vadd.f32 %v2105, 1.0
    %v2874 = vadd.f32 %v2106, 1.0
    %v2875 = vadd.f32 %v2107, 1.0
    %v2876 = vadd.f32 %v2108, 1.0
    %v2877 = vadd.f32 %v2109, 1.0
    %v2878 = vadd.f32 %v2110, 1.0
    %v2879 = vadd.f32 %v2111, 1.0
    %v2880 = vadd.f32 %v2112, 1.0
    %v2881 = vadd.f32 %v2113, 1.0
    %v2882 = vadd.f32 %v2114, 1.0
    %v2883 = vadd.f32 %v2115, 1.0
    %v2884 = vadd.f32 %v2116, 1.0
    %v2885 = vadd.f32 %v2117, 1.0
    %v2886 = vadd.f32 %v2118, 1.0
    %v2887 = vadd.f32 %v2119, 1.0
    %v2888 = vadd.f32 %v2120, 1.0
    %v2889 = vadd.f32 %v2121, 1.0
    %v2890 = vadd.f32 %v2122, 1.0
    %v2891 = vadd.f32 %v2123, 1.0
    %v2892 = vadd.f32 %v2124, 1.0
    %v2893 = vadd.f32 %v2125, 1.0
    %v2894 = vadd.f32 %v2126, 1.0
    %v2895 = vadd.f32 %v2127, 1.0
    %v2896 = vadd.f32 %v2128, 1.0
    %v2897 = vadd.f32 %v2129, 1.0
    %v2898 = vadd.f32 %v2130, 1.0
    %v2899 = vadd.f32 %v2131, 1.0
    %v2900 = vadd.f32 %v2132, 1.0
    %v2901 = vadd.f32 %v2133, 1.0
    %v2902 = vadd.f32 %v2134, 1.0
    %v2903 = vadd.f32 %v2135, 1.0
    %v2904 = vadd.f32 %v2136, 1.0
    %v2905 = vadd.f32 %v2137, 1.0
    %v2906 = vadd.f32 %v2138, 1.0
    %v2907 = vadd.f32 %v2139, 1.0
    %v2908 = vadd.f32 %v2140, 1.0
    %v2909 = vadd.f32 %v2141, 1.0
    %v2910 = vadd.f32 %v2142, 1.0
    %v2911 = vadd.f32 %v2143, 1.0
    %v2912 = vadd.f32 %v2144, 1.0
    %v2913 = vadd.f32 %v2145, 1.0
    %v2914 = vadd.f32 %v2146, 1.0
    %v2915 = vadd.f32 %v2147, 1.0
    %v2916 = vadd.f32 %v2148, 1.0
    %v2917 = vadd.f32 %v2149, 1.0
    %v2918 = vadd.f32 %v2150, 1.0
    %v2919 = vadd.f32 %v2151, 1.0
    %v2920 = vadd.f32 %v2152, 1.0
    %v2921 = vadd.f32 %v2153, 1.0
    %v2922 = vadd.f32 %v2154, 1.0
    %v2923 = vadd.f32 %v2155, 1.0
    %v2924 = vadd.f32 %v2156, 1.0
    %v2925 = vadd.f32 %v2157, 1.0
    %v2926 = vadd.f32 %v2158, 1.0
    %v2927 = vadd.f32 %v2159, 1.0
    %v2928 = vadd.f32 %v2160, 1.0
    %v2929 = vadd.f32 %v2161, 1.0
    %v2930 = vadd.f32 %v2162, 1.0
    %v2931 = vadd.f32 %v2163, 1.0
    %v2932 = vadd.f32 %v2164, 1.0
    %v2933 = vadd.f32 %v2165, 1.0
    %v2934 = vadd.f32 %v2166, 1.0
    %v2935 = vadd.f32 %v2167, 1.0
    %v2936 = vadd.f32 %v2168, 1.0
    %v2937 = vadd.f32 %v2169, 1.0
    %v2938 = vadd.f32 %v2170, 1.0
    %v2939 = vadd.f32 %v2171, 1.0
    %v2940 = vadd.f32 %v2172, 1.0
    %v2941 = vadd.f32 %v2173, 1.0
    %v2942 = vadd.f32 %v2174, 1.0
    %v2943 = vadd.f32 %v2175, 1.0
    %v2944 = vadd.f32 %v2176, 1.0
    %v2945 = vadd.f32 %v2177, 1.0
    %v2946 = vadd.f32 %v2178, 1.0
    %v2947 = vadd.f32 %v2179, 1.0
    %v2948 = vadd.f32 %v2180, 1.0
    %v2949 = vadd.f32 %v2181, 1.0
    %v2950 = vadd.f32 %v2182, 1.0
    %v2951 = vadd.f32 %v2183, 1.0
    %v2952 = vadd.f32 %v2184, 1.0
    %v2953 = vadd.f32 %v2185, 1.0
    %v2954 = vadd.f32 %v2186, 1.0
    %v2955 = vadd.f32 %v2187, 1.0
    %v2956 = vadd.f32 %v2188, 1.0
    %v2957 = vadd.f32 %v2189, 1.0
    %v2958 = vadd.f32 %v2190, 1.0
    %v2959 = vadd.f32 %v2191, 1.0
    %v2960 = vadd.f32 %v2192, 1.0
    %v2961 = vadd.f32 %v2193, 1.0
    %v2962 = vadd.f32 %v2194, 1.0
    %v2963 = vadd.f32 %v2195, 1.0
    %v2964 = vadd.f32 %v2196, 1.0
    %v2965 = vadd.f32 %v2197, 1.0
    %v2966 = vadd.f32 %v2198, 1.0
    %v2967 = vadd.f32 %v2199, 1.0
    %v2968 = vadd.f32 %v2200, 1.0
    %v2969 = vadd.f32 %v2201, 1.0
    %v2970 = vadd.f32 %v2202, 1.0
    %v2971 = vadd.f32 %v2203, 1.0
    %v2972 = vadd.f32 %v2204, 1.0
    %v2973 = vadd.f32 %v2205, 1.0
    %v2974 = vadd.f32 %v2206, 1.0
    %v2975 = vadd.f32 %v2207, 1.0
    %v2976 = vadd.f32 %v2208, 1.0
    %v2977 = vadd.f32 %v2209, 1.0
    %v2978 = vadd.f32 %v2210, 1.0
    %v2979 = vadd.f32 %v2211, 1.0
    %v2980 = vadd.f32 %v2212, 1.0
    %v2981 = vadd.f32 %v2213, 1.0
    %v2982 = vadd.f32 %v2214, 1.0
    %v2983 = vadd.f32 %v2215, 1.0
    %v2984 = vadd.f32 %v2216, 1.0
    %v2985 = vadd.f32 %v2217, 1.0
    %v2986 = vadd.f32 %v2218, 1.0
    %v2987 = vadd.f32 %v2219, 1.0
    %v2988 = vadd.f32 %v2220, 1.0
    %v2989 = vadd.f32 %v2221, 1.0
    %v2990 = vadd.f32 %v2222, 1.0
    %v2991 = vadd.f32 %v2223, 1.0
    %v2992 = vadd.f32 %v2224, 1.0
    %v2993 = vadd.f32 %v2225, 1.0
    %v2994 = vadd.f32 %v2226, 1.0
    %v2995 = vadd.f32 %v2227, 1.0
    %v2996 = vadd.f32 %v2228, 1.0
    %v2997 = vadd.f32 %v2229, 1.0
    %v2998 = vadd.f32 %v2230, 1.0
    %v2999 = vadd.f32 %v2231, 1.0
    %v3000 = vadd.f32 %v2232, 1.0
    %v3001 = vadd.f32 %v2233, 1.0
    %v3002 = vadd.f32 %v2234, 1.0
    %v3003 = vadd.f32 %v2235, 1.0
    %v3004 = vadd.f32 %v2236, 1.0
    %v3005 = vadd.f32 %v2237, 1.0
    %v3006 = vadd.f32 %v2238, 1.0
    %v3007 = vadd.f32 %v2239, 1.0
    %v3008 = vadd.f32 %v2240, 1.0
    %v3009 = vadd.f32 %v2241, 1.0
    %v3010 = vadd.f32 %v2242, 1.0
    %v3011 = vadd.f32 %v2243, 1.0
    %v3012 = vadd.f32 %v2244, 1.0
    %v3013 = vadd.f32 %v2245, 1.0
    %v3014 = vadd.f32 %v2246, 1.0
    %v3015 = vadd.f32 %v2247, 1.0
    %v3016 = vadd.f32 %v2248, 1.0
    %v3017 = vadd.f32 %v2249, 1.0
    %v3018 = vadd.f32 %v2250, 1.0
    %v3019 = vadd.f32 %v2251, 1.0
    %v3020 = vadd.f32 %v2252, 1.0
    %v3021 = vadd.f32 %v2253, 1.0
    %v3022 = vadd.f32 %v2254, 1.0
    %v3023 = vadd.f32 %v2255, 1.0
    %v3024 = vadd.f32 %v2256, 1.0
    %v3025 = vadd.f32 %v2257, 1.0
    %v3026 = vadd.f32 %v2258, 1.0
    %v3027 = vadd.f32 %v2259, 1.0
    %v3028 = vadd.f32 %v2260, 1.0
    %v3029 = vadd.f32 %v2261, 1.0
    %v3030 = vadd.f32 %v2262, 1.0
    %v3031 = vadd.f32 %v2263, 1.0
    %v3032 = vadd.f32 %v2264, 1.0
    %v3033 = vadd.f32 %v2265, 1.0
    %v3034 = vadd.f32 %v2266, 1.0
    %v3035 = vadd.f32 %v2267, 1.0
    %v3036 = vadd.f32 %v2268, 1.0
    %v3037 = vadd.f32 %v2269, 1.0
    %v3038 = vadd.f32 %v2270, 1.0
    %v3039 = vadd.f32 %v2271, 1.0
    %v3040 = vadd.f32 %v2272, 1.0
    %v3041 = vadd.f32 %v2273, 1.0
    %v3042 = vadd.f32 %v2274, 1.0
    %v3043 = vadd.f32 %v2275, 1.0
    %v3044 = vadd.f32 %v2276, 1.0
    %v3045 = vadd.f32 %v2277, 1.0
    %v3046 = vadd.f32 %v2278, 1.0
    %v3047 = vadd.f32 %v2279, 1.0
    %v3048 = vadd.f32 %v2280, 1.0
    %v3049 = vadd.f32 %v2281, 1.0
    %v3050 = vadd.f32 %v2282, 1.0
    %v3051 = vadd.f32 %v2283, 1.0
    %v3052 = vadd.f32 %v2284, 1.0
    %v3053 = vadd.f32 %v2285, 1.0
    %v3054 = vadd.f32 %v2286, 1.0
    %v3055 = vadd.f32 %v2287, 1.0
    %v3056 = vadd.f32 %v2288, 1.0
    %v3057 = vadd.f32 %v2289, 1.0
    %v3058 = vadd.f32 %v2290, 1.0
    %v3059 = vadd.f32 %v2291, 1.0
    %v3060 = vadd.f32 %v2292, 1.0
    %v3061 = vadd.f32 %v2293, 1.0
    %v3062 = vadd.f32 %v2294, 1.0
    %v3063 = vadd.f32 %v2295, 1.0
    %v3064 = vadd.f32 %v2296, 1.0
    %v3065 = vadd.f32 %v2297, 1.0
    %v3066 = vadd.f32 %v2298, 1.0
    %v3067 = vadd.f32 %v2299, 1.0
    %v3068 = vadd.f32 %v2300, 1.0
    %v3069 = vadd.f32 %v2301, 1.0
    %v3070 = vadd.f32 %v2302, 1.0
    %v3071 = vadd.f32 %v2303, 1.0
    %v3072 = vadd.f32 %v2304, 1.0
    %v3073 = vadd.f32 %v2305, 1.0
    %v3074 = vadd.f32 %v2306, 1.0
    %v3075 = vadd.f32 %v2307, 1.0
    %v3076 = vadd.f32 %v2308, 1.0
    %v3077 = vadd.f32 %v2309, 1.0
    %v3078 = vadd.f32 %v2310, 1.0
    %v3079 = vadd.f32 %v2311, 1.0
    %v3080 = vadd.f32 %v2312, 1.0
    %v3081 = vadd.f32 %v2313, 1.0
    %v3082 = vadd.f32 %v2314, 1.0
    %v3083 = vadd.f32 %v2315, 1.0
    %v3084 = vadd.f32 %v2316, 1.0
    %v3085 = vadd.f32 %v2317, 1.0
    %v3086 = vadd.f32 %v2318, 1.0
    %v3087 = vadd.f32 %v2319, 1.0
    %v3088 = vadd.f32 %v2320, 1.0
    %v3089 = vadd.f32 %v2321, 1.0
    %v3090 = vadd.f32 %v2322, 1.0
    %v3091 = vadd.f32 %v2323, 1.0
    %v3092 = vadd.f32 %v2324, 1.0
    %v3093 = vadd.f32 %v2325, 1.0
    %v3094 = vadd.f32 %v2326, 1.0
    %v3095 = vadd.f32 %v2327, 1.0
    %v3096 = vadd.f32 %v2328, 1.0
    %v3097 = vrcp.pop %v2841
    %v3098 = vmul.f32 %v2585, %v3097
    %v3099 = vrcp.pop %v2842
    %v3100 = vmul.f32 %v2586, %v3099
    %v3101 = vrcp.pop %v2843
    %v3102 = vmul.f32 %v2587, %v3101
    %v3103 = vrcp.pop %v2844
    %v3104 = vmul.f32 %v2588, %v3103
    %v3105 = vrcp.pop %v2845
    %v3106 = vmul.f32 %v2589, %v3105
    %v3107 = vrcp.pop %v2846
    %v3108 = vmul.f32 %v2590, %v3107
    %v3109 = vrcp.pop %v2847
    %v3110 = vmul.f32 %v2591, %v3109
    %v3111 = vrcp.pop %v2848
    %v3112 = vmul.f32 %v2592, %v3111
    %v3113 = vrcp.pop %v2849
    %v3114 = vmul.f32 %v2593, %v3113
    %v3115 = vrcp.pop %v2850
    %v3116 = vmul.f32 %v2594, %v3115
    %v3117 = vrcp.pop %v2851
    %v3118 = vmul.f32 %v2595, %v3117
    %v3119 = vrcp.pop %v2852
    %v3120 = vmul.f32 %v2596, %v3119
    %v3121 = vrcp.pop %v2853
    %v3122 = vmul.f32 %v2597, %v3121
    %v3123 = vrcp.pop %v2854
    %v3124 = vmul.f32 %v2598, %v3123
    %v3125 = vrcp.pop %v2855
    %v3126 = vmul.f32 %v2599, %v3125
    %v3127 = vrcp.pop %v2856
    %v3128 = vmul.f32 %v2600, %v3127
    %v3129 = vrcp.pop %v2857
    %v3130 = vmul.f32 %v2601, %v3129
    %v3131 = vrcp.pop %v2858
    %v3132 = vmul.f32 %v2602, %v3131
    %v3133 = vrcp.pop %v2859
    %v3134 = vmul.f32 %v2603, %v3133
    %v3135 = vrcp.pop %v2860
    %v3136 = vmul.f32 %v2604, %v3135
    %v3137 = vrcp.pop %v2861
    %v3138 = vmul.f32 %v2605, %v3137
    %v3139 = vrcp.pop %v2862
    %v3140 = vmul.f32 %v2606, %v3139
    %v3141 = vrcp.pop %v2863
    %v3142 = vmul.f32 %v2607, %v3141
    %v3143 = vrcp.pop %v2864
    %v3144 = vmul.f32 %v2608, %v3143
    %v3145 = vrcp.pop %v2865
    %v3146 = vmul.f32 %v2609, %v3145
    %v3147 = vrcp.pop %v2866
    %v3148 = vmul.f32 %v2610, %v3147
    %v3149 = vrcp.pop %v2867
    %v3150 = vmul.f32 %v2611, %v3149
    %v3151 = vrcp.pop %v2868
    %v3152 = vmul.f32 %v2612, %v3151
    %v3153 = vrcp.pop %v2869
    %v3154 = vmul.f32 %v2613, %v3153
    %v3155 = vrcp.pop %v2870
    %v3156 = vmul.f32 %v2614, %v3155
    %v3157 = vrcp.pop %v2871
    %v3158 = vmul.f32 %v2615, %v3157
    %v3159 = vrcp.pop %v2872
    %v3160 = vmul.f32 %v2616, %v3159
    %v3161 = vrcp.pop %v2873
    %v3162 = vmul.f32 %v2617, %v3161
    %v3163 = vrcp.pop %v2874
    %v3164 = vmul.f32 %v2618, %v3163
    %v3165 = vrcp.pop %v2875
    %v3166 = vmul.f32 %v2619, %v3165
    %v3167 = vrcp.pop %v2876
    %v3168 = vmul.f32 %v2620, %v3167
    %v3169 = vrcp.pop %v2877
    %v3170 = vmul.f32 %v2621, %v3169
    %v3171 = vrcp.pop %v2878
    %v3172 = vmul.f32 %v2622, %v3171
    %v3173 = vrcp.pop %v2879
    %v3174 = vmul.f32 %v2623, %v3173
    %v3175 = vrcp.pop %v2880
    %v3176 = vmul.f32 %v2624, %v3175
    %v3177 = vrcp.pop %v2881
    %v3178 = vmul.f32 %v2625, %v3177
    %v3179 = vrcp.pop %v2882
    %v3180 = vmul.f32 %v2626, %v3179
    %v3181 = vrcp.pop %v2883
    %v3182 = vmul.f32 %v2627, %v3181
    %v3183 = vrcp.pop %v2884
    %v3184 = vmul.f32 %v2628, %v3183
    %v3185 = vrcp.pop %v2885
    %v3186 = vmul.f32 %v2629, %v3185
    %v3187 = vrcp.pop %v2886
    %v3188 = vmul.f32 %v2630, %v3187
    %v3189 = vrcp.pop %v2887
    %v3190 = vmul.f32 %v2631, %v3189
    %v3191 = vrcp.pop %v2888
    %v3192 = vmul.f32 %v2632, %v3191
    %v3193 = vrcp.pop %v2889
    %v3194 = vmul.f32 %v2633, %v3193
    %v3195 = vrcp.pop %v2890
    %v3196 = vmul.f32 %v2634, %v3195
    %v3197 = vrcp.pop %v2891
    %v3198 = vmul.f32 %v2635, %v3197
    %v3199 = vrcp.pop %v2892
    %v3200 = vmul.f32 %v2636, %v3199
    %v3201 = vrcp.pop %v2893
    %v3202 = vmul.f32 %v2637, %v3201
    %v3203 = vrcp.pop %v2894
    %v3204 = vmul.f32 %v2638, %v3203
    %v3205 = vrcp.pop %v2895
    %v3206 = vmul.f32 %v2639, %v3205
    %v3207 = vrcp.pop %v2896
    %v3208 = vmul.f32 %v2640, %v3207
    %v3209 = vrcp.pop %v2897
    %v3210 = vmul.f32 %v2641, %v3209
    %v3211 = vrcp.pop %v2898
    %v3212 = vmul.f32 %v2642, %v3211
    %v3213 = vrcp.pop %v2899
    %v3214 = vmul.f32 %v2643, %v3213
    %v3215 = vrcp.pop %v2900
    %v3216 = vmul.f32 %v2644, %v3215
    %v3217 = vrcp.pop %v2901
    %v3218 = vmul.f32 %v2645, %v3217
    %v3219 = vrcp.pop %v2902
    %v3220 = vmul.f32 %v2646, %v3219
    %v3221 = vrcp.pop %v2903
    %v3222 = vmul.f32 %v2647, %v3221
    %v3223 = vrcp.pop %v2904
    %v3224 = vmul.f32 %v2648, %v3223
    %v3225 = vrcp.pop %v2905
    %v3226 = vmul.f32 %v2649, %v3225
    %v3227 = vrcp.pop %v2906
    %v3228 = vmul.f32 %v2650, %v3227
    %v3229 = vrcp.pop %v2907
    %v3230 = vmul.f32 %v2651, %v3229
    %v3231 = vrcp.pop %v2908
    %v3232 = vmul.f32 %v2652, %v3231
    %v3233 = vrcp.pop %v2909
    %v3234 = vmul.f32 %v2653, %v3233
    %v3235 = vrcp.pop %v2910
    %v3236 = vmul.f32 %v2654, %v3235
    %v3237 = vrcp.pop %v2911
    %v3238 = vmul.f32 %v2655, %v3237
    %v3239 = vrcp.pop %v2912
    %v3240 = vmul.f32 %v2656, %v3239
    %v3241 = vrcp.pop %v2913
    %v3242 = vmul.f32 %v2657, %v3241
    %v3243 = vrcp.pop %v2914
    %v3244 = vmul.f32 %v2658, %v3243
    %v3245 = vrcp.pop %v2915
    %v3246 = vmul.f32 %v2659, %v3245
    %v3247 = vrcp.pop %v2916
    %v3248 = vmul.f32 %v2660, %v3247
    %v3249 = vrcp.pop %v2917
    %v3250 = vmul.f32 %v2661, %v3249
    %v3251 = vrcp.pop %v2918
    %v3252 = vmul.f32 %v2662, %v3251
    %v3253 = vrcp.pop %v2919
    %v3254 = vmul.f32 %v2663, %v3253
    %v3255 = vrcp.pop %v2920
    %v3256 = vmul.f32 %v2664, %v3255
    %v3257 = vrcp.pop %v2921
    %v3258 = vmul.f32 %v2665, %v3257
    %v3259 = vrcp.pop %v2922
    %v3260 = vmul.f32 %v2666, %v3259
    %v3261 = vrcp.pop %v2923
    %v3262 = vmul.f32 %v2667, %v3261
    %v3263 = vrcp.pop %v2924
    %v3264 = vmul.f32 %v2668, %v3263
    %v3265 = vrcp.pop %v2925
    %v3266 = vmul.f32 %v2669, %v3265
    %v3267 = vrcp.pop %v2926
    %v3268 = vmul.f32 %v2670, %v3267
    %v3269 = vrcp.pop %v2927
    %v3270 = vmul.f32 %v2671, %v3269
    %v3271 = vrcp.pop %v2928
    %v3272 = vmul.f32 %v2672, %v3271
    %v3273 = vrcp.pop %v2929
    %v3274 = vmul.f32 %v2673, %v3273
    %v3275 = vrcp.pop %v2930
    %v3276 = vmul.f32 %v2674, %v3275
    %v3277 = vrcp.pop %v2931
    %v3278 = vmul.f32 %v2675, %v3277
    %v3279 = vrcp.pop %v2932
    %v3280 = vmul.f32 %v2676, %v3279
    %v3281 = vrcp.pop %v2933
    %v3282 = vmul.f32 %v2677, %v3281
    %v3283 = vrcp.pop %v2934
    %v3284 = vmul.f32 %v2678, %v3283
    %v3285 = vrcp.pop %v2935
    %v3286 = vmul.f32 %v2679, %v3285
    %v3287 = vrcp.pop %v2936
    %v3288 = vmul.f32 %v2680, %v3287
    %v3289 = vrcp.pop %v2937
    %v3290 = vmul.f32 %v2681, %v3289
    %v3291 = vrcp.pop %v2938
    %v3292 = vmul.f32 %v2682, %v3291
    %v3293 = vrcp.pop %v2939
    %v3294 = vmul.f32 %v2683, %v3293
    %v3295 = vrcp.pop %v2940
    %v3296 = vmul.f32 %v2684, %v3295
    %v3297 = vrcp.pop %v2941
    %v3298 = vmul.f32 %v2685, %v3297
    %v3299 = vrcp.pop %v2942
    %v3300 = vmul.f32 %v2686, %v3299
    %v3301 = vrcp.pop %v2943
    %v3302 = vmul.f32 %v2687, %v3301
    %v3303 = vrcp.pop %v2944
    %v3304 = vmul.f32 %v2688, %v3303
    %v3305 = vrcp.pop %v2945
    %v3306 = vmul.f32 %v2689, %v3305
    %v3307 = vrcp.pop %v2946
    %v3308 = vmul.f32 %v2690, %v3307
    %v3309 = vrcp.pop %v2947
    %v3310 = vmul.f32 %v2691, %v3309
    %v3311 = vrcp.pop %v2948
    %v3312 = vmul.f32 %v2692, %v3311
    %v3313 = vrcp.pop %v2949
    %v3314 = vmul.f32 %v2693, %v3313
    %v3315 = vrcp.pop %v2950
    %v3316 = vmul.f32 %v2694, %v3315
    %v3317 = vrcp.pop %v2951
    %v3318 = vmul.f32 %v2695, %v3317
    %v3319 = vrcp.pop %v2952
    %v3320 = vmul.f32 %v2696, %v3319
    %v3321 = vrcp.pop %v2953
    %v3322 = vmul.f32 %v2697, %v3321
    %v3323 = vrcp.pop %v2954
    %v3324 = vmul.f32 %v2698, %v3323
    %v3325 = vrcp.pop %v2955
    %v3326 = vmul.f32 %v2699, %v3325
    %v3327 = vrcp.pop %v2956
    %v3328 = vmul.f32 %v2700, %v3327
    %v3329 = vrcp.pop %v2957
    %v3330 = vmul.f32 %v2701, %v3329
    %v3331 = vrcp.pop %v2958
    %v3332 = vmul.f32 %v2702, %v3331
    %v3333 = vrcp.pop %v2959
    %v3334 = vmul.f32 %v2703, %v3333
    %v3335 = vrcp.pop %v2960
    %v3336 = vmul.f32 %v2704, %v3335
    %v3337 = vrcp.pop %v2961
    %v3338 = vmul.f32 %v2705, %v3337
    %v3339 = vrcp.pop %v2962
    %v3340 = vmul.f32 %v2706, %v3339
    %v3341 = vrcp.pop %v2963
    %v3342 = vmul.f32 %v2707, %v3341
    %v3343 = vrcp.pop %v2964
    %v3344 = vmul.f32 %v2708, %v3343
    %v3345 = vrcp.pop %v2965
    %v3346 = vmul.f32 %v2709, %v3345
    %v3347 = vrcp.pop %v2966
    %v3348 = vmul.f32 %v2710, %v3347
    %v3349 = vrcp.pop %v2967
    %v3350 = vmul.f32 %v2711, %v3349
    %v3351 = vrcp.pop %v2968
    %v3352 = vmul.f32 %v2712, %v3351
    %v3353 = vrcp.pop %v2969
    %v3354 = vmul.f32 %v2713, %v3353
    %v3355 = vrcp.pop %v2970
    %v3356 = vmul.f32 %v2714, %v3355
    %v3357 = vrcp.pop %v2971
    %v3358 = vmul.f32 %v2715, %v3357
    %v3359 = vrcp.pop %v2972
    %v3360 = vmul.f32 %v2716, %v3359
    %v3361 = vrcp.pop %v2973
    %v3362 = vmul.f32 %v2717, %v3361
    %v3363 = vrcp.pop %v2974
    %v3364 = vmul.f32 %v2718, %v3363
    %v3365 = vrcp.pop %v2975
    %v3366 = vmul.f32 %v2719, %v3365
    %v3367 = vrcp.pop %v2976
    %v3368 = vmul.f32 %v2720, %v3367
    %v3369 = vrcp.pop %v2977
    %v3370 = vmul.f32 %v2721, %v3369
    %v3371 = vrcp.pop %v2978
    %v3372 = vmul.f32 %v2722, %v3371
    %v3373 = vrcp.pop %v2979
    %v3374 = vmul.f32 %v2723, %v3373
    %v3375 = vrcp.pop %v2980
    %v3376 = vmul.f32 %v2724, %v3375
    %v3377 = vrcp.pop %v2981
    %v3378 = vmul.f32 %v2725, %v3377
    %v3379 = vrcp.pop %v2982
    %v3380 = vmul.f32 %v2726, %v3379
    %v3381 = vrcp.pop %v2983
    %v3382 = vmul.f32 %v2727, %v3381
    %v3383 = vrcp.pop %v2984
    %v3384 = vmul.f32 %v2728, %v3383
    %v3385 = vrcp.pop %v2985
    %v3386 = vmul.f32 %v2729, %v3385
    %v3387 = vrcp.pop %v2986
    %v3388 = vmul.f32 %v2730, %v3387
    %v3389 = vrcp.pop %v2987
    %v3390 = vmul.f32 %v2731, %v3389
    %v3391 = vrcp.pop %v2988
    %v3392 = vmul.f32 %v2732, %v3391
    %v3393 = vrcp.pop %v2989
    %v3394 = vmul.f32 %v2733, %v3393
    %v3395 = vrcp.pop %v2990
    %v3396 = vmul.f32 %v2734, %v3395
    %v3397 = vrcp.pop %v2991
    %v3398 = vmul.f32 %v2735, %v3397
    %v3399 = vrcp.pop %v2992
    %v3400 = vmul.f32 %v2736, %v3399
    %v3401 = vrcp.pop %v2993
    %v3402 = vmul.f32 %v2737, %v3401
    %v3403 = vrcp.pop %v2994
    %v3404 = vmul.f32 %v2738, %v3403
    %v3405 = vrcp.pop %v2995
    %v3406 = vmul.f32 %v2739, %v3405
    %v3407 = vrcp.pop %v2996
    %v3408 = vmul.f32 %v2740, %v3407
    %v3409 = vrcp.pop %v2997
    %v3410 = vmul.f32 %v2741, %v3409
    %v3411 = vrcp.pop %v2998
    %v3412 = vmul.f32 %v2742, %v3411
    %v3413 = vrcp.pop %v2999
    %v3414 = vmul.f32 %v2743, %v3413
    %v3415 = vrcp.pop %v3000
    %v3416 = vmul.f32 %v2744, %v3415
    %v3417 = vrcp.pop %v3001
    %v3418 = vmul.f32 %v2745, %v3417
    %v3419 = vrcp.pop %v3002
    %v3420 = vmul.f32 %v2746, %v3419
    %v3421 = vrcp.pop %v3003
    %v3422 = vmul.f32 %v2747, %v3421
    %v3423 = vrcp.pop %v3004
    %v3424 = vmul.f32 %v2748, %v3423
    %v3425 = vrcp.pop %v3005
    %v3426 = vmul.f32 %v2749, %v3425
    %v3427 = vrcp.pop %v3006
    %v3428 = vmul.f32 %v2750, %v3427
    %v3429 = vrcp.pop %v3007
    %v3430 = vmul.f32 %v2751, %v3429
    %v3431 = vrcp.pop %v3008
    %v3432 = vmul.f32 %v2752, %v3431
    %v3433 = vrcp.pop %v3009
    %v3434 = vmul.f32 %v2753, %v3433
    %v3435 = vrcp.pop %v3010
    %v3436 = vmul.f32 %v2754, %v3435
    %v3437 = vrcp.pop %v3011
    %v3438 = vmul.f32 %v2755, %v3437
    %v3439 = vrcp.pop %v3012
    %v3440 = vmul.f32 %v2756, %v3439
    %v3441 = vrcp.pop %v3013
    %v3442 = vmul.f32 %v2757, %v3441
    %v3443 = vrcp.pop %v3014
    %v3444 = vmul.f32 %v2758, %v3443
    %v3445 = vrcp.pop %v3015
    %v3446 = vmul.f32 %v2759, %v3445
    %v3447 = vrcp.pop %v3016
    %v3448 = vmul.f32 %v2760, %v3447
    %v3449 = vrcp.pop %v3017
    %v3450 = vmul.f32 %v2761, %v3449
    %v3451 = vrcp.pop %v3018
    %v3452 = vmul.f32 %v2762, %v3451
    %v3453 = vrcp.pop %v3019
    %v3454 = vmul.f32 %v2763, %v3453
    %v3455 = vrcp.pop %v3020
    %v3456 = vmul.f32 %v2764, %v3455
    %v3457 = vrcp.pop %v3021
    %v3458 = vmul.f32 %v2765, %v3457
    %v3459 = vrcp.pop %v3022
    %v3460 = vmul.f32 %v2766, %v3459
    %v3461 = vrcp.pop %v3023
    %v3462 = vmul.f32 %v2767, %v3461
    %v3463 = vrcp.pop %v3024
    %v3464 = vmul.f32 %v2768, %v3463
    %v3465 = vrcp.pop %v3025
    %v3466 = vmul.f32 %v2769, %v3465
    %v3467 = vrcp.pop %v3026
    %v3468 = vmul.f32 %v2770, %v3467
    %v3469 = vrcp.pop %v3027
    %v3470 = vmul.f32 %v2771, %v3469
    %v3471 = vrcp.pop %v3028
    %v3472 = vmul.f32 %v2772, %v3471
    %v3473 = vrcp.pop %v3029
    %v3474 = vmul.f32 %v2773, %v3473
    %v3475 = vrcp.pop %v3030
    %v3476 = vmul.f32 %v2774, %v3475
    %v3477 = vrcp.pop %v3031
    %v3478 = vmul.f32 %v2775, %v3477
    %v3479 = vrcp.pop %v3032
    %v3480 = vmul.f32 %v2776, %v3479
    %v3481 = vrcp.pop %v3033
    %v3482 = vmul.f32 %v2777, %v3481
    %v3483 = vrcp.pop %v3034
    %v3484 = vmul.f32 %v2778, %v3483
    %v3485 = vrcp.pop %v3035
    %v3486 = vmul.f32 %v2779, %v3485
    %v3487 = vrcp.pop %v3036
    %v3488 = vmul.f32 %v2780, %v3487
    %v3489 = vrcp.pop %v3037
    %v3490 = vmul.f32 %v2781, %v3489
    %v3491 = vrcp.pop %v3038
    %v3492 = vmul.f32 %v2782, %v3491
    %v3493 = vrcp.pop %v3039
    %v3494 = vmul.f32 %v2783, %v3493
    %v3495 = vrcp.pop %v3040
    %v3496 = vmul.f32 %v2784, %v3495
    %v3497 = vrcp.pop %v3041
    %v3498 = vmul.f32 %v2785, %v3497
    %v3499 = vrcp.pop %v3042
    %v3500 = vmul.f32 %v2786, %v3499
    %v3501 = vrcp.pop %v3043
    %v3502 = vmul.f32 %v2787, %v3501
    %v3503 = vrcp.pop %v3044
    %v3504 = vmul.f32 %v2788, %v3503
    %v3505 = vrcp.pop %v3045
    %v3506 = vmul.f32 %v2789, %v3505
    %v3507 = vrcp.pop %v3046
    %v3508 = vmul.f32 %v2790, %v3507
    %v3509 = vrcp.pop %v3047
    %v3510 = vmul.f32 %v2791, %v3509
    %v3511 = vrcp.pop %v3048
    %v3512 = vmul.f32 %v2792, %v3511
    %v3513 = vrcp.pop %v3049
    %v3514 = vmul.f32 %v2793, %v3513
    %v3515 = vrcp.pop %v3050
    %v3516 = vmul.f32 %v2794, %v3515
    %v3517 = vrcp.pop %v3051
    %v3518 = vmul.f32 %v2795, %v3517
    %v3519 = vrcp.pop %v3052
    %v3520 = vmul.f32 %v2796, %v3519
    %v3521 = vrcp.pop %v3053
    %v3522 = vmul.f32 %v2797, %v3521
    %v3523 = vrcp.pop %v3054
    %v3524 = vmul.f32 %v2798, %v3523
    %v3525 = vrcp.pop %v3055
    %v3526 = vmul.f32 %v2799, %v3525
    %v3527 = vrcp.pop %v3056
    %v3528 = vmul.f32 %v2800, %v3527
    %v3529 = vrcp.pop %v3057
    %v3530 = vmul.f32 %v2801, %v3529
    %v3531 = vrcp.pop %v3058
    %v3532 = vmul.f32 %v2802, %v3531
    %v3533 = vrcp.pop %v3059
    %v3534 = vmul.f32 %v2803, %v3533
    %v3535 = vrcp.pop %v3060
    %v3536 = vmul.f32 %v2804, %v3535
    %v3537 = vrcp.pop %v3061
    %v3538 = vmul.f32 %v2805, %v3537
    %v3539 = vrcp.pop %v3062
    %v3540 = vmul.f32 %v2806, %v3539
    %v3541 = vrcp.pop %v3063
    %v3542 = vmul.f32 %v2807, %v3541
    %v3543 = vrcp.pop %v3064
    %v3544 = vmul.f32 %v2808, %v3543
    %v3545 = vrcp.pop %v3065
    %v3546 = vmul.f32 %v2809, %v3545
    %v3547 = vrcp.pop %v3066
    %v3548 = vmul.f32 %v2810, %v3547
    %v3549 = vrcp.pop %v3067
    %v3550 = vmul.f32 %v2811, %v3549
    %v3551 = vrcp.pop %v3068
    %v3552 = vmul.f32 %v2812, %v3551
    %v3553 = vrcp.pop %v3069
    %v3554 = vmul.f32 %v2813, %v3553
    %v3555 = vrcp.pop %v3070
    %v3556 = vmul.f32 %v2814, %v3555
    %v3557 = vrcp.pop %v3071
    %v3558 = vmul.f32 %v2815, %v3557
    %v3559 = vrcp.pop %v3072
    %v3560 = vmul.f32 %v2816, %v3559
    %v3561 = vrcp.pop %v3073
    %v3562 = vmul.f32 %v2817, %v3561
    %v3563 = vrcp.pop %v3074
    %v3564 = vmul.f32 %v2818, %v3563
    %v3565 = vrcp.pop %v3075
    %v3566 = vmul.f32 %v2819, %v3565
    %v3567 = vrcp.pop %v3076
    %v3568 = vmul.f32 %v2820, %v3567
    %v3569 = vrcp.pop %v3077
    %v3570 = vmul.f32 %v2821, %v3569
    %v3571 = vrcp.pop %v3078
    %v3572 = vmul.f32 %v2822, %v3571
    %v3573 = vrcp.pop %v3079
    %v3574 = vmul.f32 %v2823, %v3573
    %v3575 = vrcp.pop %v3080
    %v3576 = vmul.f32 %v2824, %v3575
    %v3577 = vrcp.pop %v3081
    %v3578 = vmul.f32 %v2825, %v3577
    %v3579 = vrcp.pop %v3082
    %v3580 = vmul.f32 %v2826, %v3579
    %v3581 = vrcp.pop %v3083
    %v3582 = vmul.f32 %v2827, %v3581
    %v3583 = vrcp.pop %v3084
    %v3584 = vmul.f32 %v2828, %v3583
    %v3585 = vrcp.pop %v3085
    %v3586 = vmul.f32 %v2829, %v3585
    %v3587 = vrcp.pop %v3086
    %v3588 = vmul.f32 %v2830, %v3587
    %v3589 = vrcp.pop %v3087
    %v3590 = vmul.f32 %v2831, %v3589
    %v3591 = vrcp.pop %v3088
    %v3592 = vmul.f32 %v2832, %v3591
    %v3593 = vrcp.pop %v3089
    %v3594 = vmul.f32 %v2833, %v3593
    %v3595 = vrcp.pop %v3090
    %v3596 = vmul.f32 %v2834, %v3595
    %v3597 = vrcp.pop %v3091
    %v3598 = vmul.f32 %v2835, %v3597
    %v3599 = vrcp.pop %v3092
    %v3600 = vmul.f32 %v2836, %v3599
    %v3601 = vrcp.pop %v3093
    %v3602 = vmul.f32 %v2837, %v3601
    %v3603 = vrcp.pop %v3094
    %v3604 = vmul.f32 %v2838, %v3603
    %v3605 = vrcp.pop %v3095
    %v3606 = vmul.f32 %v2839, %v3605
    %v3607 = vrcp.pop %v3096
    %v3608 = vmul.f32 %v2840, %v3607
    %v3609 = vpack.c.bf16 %v3100, %v3098
    %v3610 = vpack.c.bf16 %v3104, %v3102
    %v3611 = vpack.c.bf16 %v3108, %v3106
    %v3612 = vpack.c.bf16 %v3112, %v3110
    %v3613 = vpack.c.bf16 %v3116, %v3114
    %v3614 = vpack.c.bf16 %v3120, %v3118
    %v3615 = vpack.c.bf16 %v3124, %v3122
    %v3616 = vpack.c.bf16 %v3128, %v3126
    %v3617 = vpack.c.bf16 %v3132, %v3130
    %v3618 = vpack.c.bf16 %v3136, %v3134
    %v3619 = vpack.c.bf16 %v3140, %v3138
    %v3620 = vpack.c.bf16 %v3144, %v3142
    %v3621 = vpack.c.bf16 %v3148, %v3146
    %v3622 = vpack.c.bf16 %v3152, %v3150
    %v3623 = vpack.c.bf16 %v3156, %v3154
    %v3624 = vpack.c.bf16 %v3160, %v3158
    %v3625 = vpack.c.bf16 %v3164, %v3162
    %v3626 = vpack.c.bf16 %v3168, %v3166
    %v3627 = vpack.c.bf16 %v3172, %v3170
    %v3628 = vpack.c.bf16 %v3176, %v3174
    %v3629 = vpack.c.bf16 %v3180, %v3178
    %v3630 = vpack.c.bf16 %v3184, %v3182
    %v3631 = vpack.c.bf16 %v3188, %v3186
    %v3632 = vpack.c.bf16 %v3192, %v3190
    %v3633 = vpack.c.bf16 %v3196, %v3194
    %v3634 = vpack.c.bf16 %v3200, %v3198
    %v3635 = vpack.c.bf16 %v3204, %v3202
    %v3636 = vpack.c.bf16 %v3208, %v3206
    %v3637 = vpack.c.bf16 %v3212, %v3210
    %v3638 = vpack.c.bf16 %v3216, %v3214
    %v3639 = vpack.c.bf16 %v3220, %v3218
    %v3640 = vpack.c.bf16 %v3224, %v3222
    %v3641 = vpack.c.bf16 %v3228, %v3226
    %v3642 = vpack.c.bf16 %v3232, %v3230
    %v3643 = vpack.c.bf16 %v3236, %v3234
    %v3644 = vpack.c.bf16 %v3240, %v3238
    %v3645 = vpack.c.bf16 %v3244, %v3242
    %v3646 = vpack.c.bf16 %v3248, %v3246
    %v3647 = vpack.c.bf16 %v3252, %v3250
    %v3648 = vpack.c.bf16 %v3256, %v3254
    %v3649 = vpack.c.bf16 %v3260, %v3258
    %v3650 = vpack.c.bf16 %v3264, %v3262
    %v3651 = vpack.c.bf16 %v3268, %v3266
    %v3652 = vpack.c.bf16 %v3272, %v3270
    %v3653 = vpack.c.bf16 %v3276, %v3274
    %v3654 = vpack.c.bf16 %v3280, %v3278
    %v3655 = vpack.c.bf16 %v3284, %v3282
    %v3656 = vpack.c.bf16 %v3288, %v3286
    %v3657 = vpack.c.bf16 %v3292, %v3290
    %v3658 = vpack.c.bf16 %v3296, %v3294
    %v3659 = vpack.c.bf16 %v3300, %v3298
    %v3660 = vpack.c.bf16 %v3304, %v3302
    %v3661 = vpack.c.bf16 %v3308, %v3306
    %v3662 = vpack.c.bf16 %v3312, %v3310
    %v3663 = vpack.c.bf16 %v3316, %v3314
    %v3664 = vpack.c.bf16 %v3320, %v3318
    %v3665 = vpack.c.bf16 %v3324, %v3322
    %v3666 = vpack.c.bf16 %v3328, %v3326
    %v3667 = vpack.c.bf16 %v3332, %v3330
    %v3668 = vpack.c.bf16 %v3336, %v3334
    %v3669 = vpack.c.bf16 %v3340, %v3338
    %v3670 = vpack.c.bf16 %v3344, %v3342
    %v3671 = vpack.c.bf16 %v3348, %v3346
    %v3672 = vpack.c.bf16 %v3352, %v3350
    %v3673 = vpack.c.bf16 %v3356, %v3354
    %v3674 = vpack.c.bf16 %v3360, %v3358
    %v3675 = vpack.c.bf16 %v3364, %v3362
    %v3676 = vpack.c.bf16 %v3368, %v3366
    %v3677 = vpack.c.bf16 %v3372, %v3370
    %v3678 = vpack.c.bf16 %v3376, %v3374
    %v3679 = vpack.c.bf16 %v3380, %v3378
    %v3680 = vpack.c.bf16 %v3384, %v3382
    %v3681 = vpack.c.bf16 %v3388, %v3386
    %v3682 = vpack.c.bf16 %v3392, %v3390
    %v3683 = vpack.c.bf16 %v3396, %v3394
    %v3684 = vpack.c.bf16 %v3400, %v3398
    %v3685 = vpack.c.bf16 %v3404, %v3402
    %v3686 = vpack.c.bf16 %v3408, %v3406
    %v3687 = vpack.c.bf16 %v3412, %v3410
    %v3688 = vpack.c.bf16 %v3416, %v3414
    %v3689 = vpack.c.bf16 %v3420, %v3418
    %v3690 = vpack.c.bf16 %v3424, %v3422
    %v3691 = vpack.c.bf16 %v3428, %v3426
    %v3692 = vpack.c.bf16 %v3432, %v3430
    %v3693 = vpack.c.bf16 %v3436, %v3434
    %v3694 = vpack.c.bf16 %v3440, %v3438
    %v3695 = vpack.c.bf16 %v3444, %v3442
    %v3696 = vpack.c.bf16 %v3448, %v3446
    %v3697 = vpack.c.bf16 %v3452, %v3450
    %v3698 = vpack.c.bf16 %v3456, %v3454
    %v3699 = vpack.c.bf16 %v3460, %v3458
    %v3700 = vpack.c.bf16 %v3464, %v3462
    %v3701 = vpack.c.bf16 %v3468, %v3466
    %v3702 = vpack.c.bf16 %v3472, %v3470
    %v3703 = vpack.c.bf16 %v3476, %v3474
    %v3704 = vpack.c.bf16 %v3480, %v3478
    %v3705 = vpack.c.bf16 %v3484, %v3482
    %v3706 = vpack.c.bf16 %v3488, %v3486
    %v3707 = vpack.c.bf16 %v3492, %v3490
    %v3708 = vpack.c.bf16 %v3496, %v3494
    %v3709 = vpack.c.bf16 %v3500, %v3498
    %v3710 = vpack.c.bf16 %v3504, %v3502
    %v3711 = vpack.c.bf16 %v3508, %v3506
    %v3712 = vpack.c.bf16 %v3512, %v3510
    %v3713 = vpack.c.bf16 %v3516, %v3514
    %v3714 = vpack.c.bf16 %v3520, %v3518
    %v3715 = vpack.c.bf16 %v3524, %v3522
    %v3716 = vpack.c.bf16 %v3528, %v3526
    %v3717 = vpack.c.bf16 %v3532, %v3530
    %v3718 = vpack.c.bf16 %v3536, %v3534
    %v3719 = vpack.c.bf16 %v3540, %v3538
    %v3720 = vpack.c.bf16 %v3544, %v3542
    %v3721 = vpack.c.bf16 %v3548, %v3546
    %v3722 = vpack.c.bf16 %v3552, %v3550
    %v3723 = vpack.c.bf16 %v3556, %v3554
    %v3724 = vpack.c.bf16 %v3560, %v3558
    %v3725 = vpack.c.bf16 %v3564, %v3562
    %v3726 = vpack.c.bf16 %v3568, %v3566
    %v3727 = vpack.c.bf16 %v3572, %v3570
    %v3728 = vpack.c.bf16 %v3576, %v3574
    %v3729 = vpack.c.bf16 %v3580, %v3578
    %v3730 = vpack.c.bf16 %v3584, %v3582
    %v3731 = vpack.c.bf16 %v3588, %v3586
    %v3732 = vpack.c.bf16 %v3592, %v3590
    %v3733 = vpack.c.bf16 %v3596, %v3594
    %v3734 = vpack.c.bf16 %v3600, %v3598
    %v3735 = vpack.c.bf16 %v3604, %v3602
    %v3736 = vpack.c.bf16 %v3608, %v3606
    %v3865 = vunpack.c.l.b16 %v3609
    %v3866 = vunpack.c.h.b16 %v3609
    %v3867 = vunpack.c.l.b16 %v3610
    %v3868 = vunpack.c.h.b16 %v3610
    %v3869 = vunpack.c.l.b16 %v3611
    %v3870 = vunpack.c.h.b16 %v3611
    %v3871 = vunpack.c.l.b16 %v3612
    %v3872 = vunpack.c.h.b16 %v3612
    %v3873 = vunpack.c.l.b16 %v3613
    %v3874 = vunpack.c.h.b16 %v3613
    %v3875 = vunpack.c.l.b16 %v3614
    %v3876 = vunpack.c.h.b16 %v3614
    %v3877 = vunpack.c.l.b16 %v3615
    %v3878 = vunpack.c.h.b16 %v3615
    %v3879 = vunpack.c.l.b16 %v3616
    %v3880 = vunpack.c.h.b16 %v3616
    %v3881 = vunpack.c.l.b16 %v3617
    %v3882 = vunpack.c.h.b16 %v3617
    %v3883 = vunpack.c.l.b16 %v3618
    %v3884 = vunpack.c.h.b16 %v3618
    %v3885 = vunpack.c.l.b16 %v3619
    %v3886 = vunpack.c.h.b16 %v3619
    %v3887 = vunpack.c.l.b16 %v3620
    %v3888 = vunpack.c.h.b16 %v3620
    %v3889 = vunpack.c.l.b16 %v3621
    %v3890 = vunpack.c.h.b16 %v3621
    %v3891 = vunpack.c.l.b16 %v3622
    %v3892 = vunpack.c.h.b16 %v3622
    %v3893 = vunpack.c.l.b16 %v3623
    %v3894 = vunpack.c.h.b16 %v3623
    %v3895 = vunpack.c.l.b16 %v3624
    %v3896 = vunpack.c.h.b16 %v3624
    %v3897 = vunpack.c.l.b16 %v3625
    %v3898 = vunpack.c.h.b16 %v3625
    %v3899 = vunpack.c.l.b16 %v3626
    %v3900 = vunpack.c.h.b16 %v3626
    %v3901 = vunpack.c.l.b16 %v3627
    %v3902 = vunpack.c.h.b16 %v3627
    %v3903 = vunpack.c.l.b16 %v3628
    %v3904 = vunpack.c.h.b16 %v3628
    %v3905 = vunpack.c.l.b16 %v3629
    %v3906 = vunpack.c.h.b16 %v3629
    %v3907 = vunpack.c.l.b16 %v3630
    %v3908 = vunpack.c.h.b16 %v3630
    %v3909 = vunpack.c.l.b16 %v3631
    %v3910 = vunpack.c.h.b16 %v3631
    %v3911 = vunpack.c.l.b16 %v3632
    %v3912 = vunpack.c.h.b16 %v3632
    %v3913 = vunpack.c.l.b16 %v3633
    %v3914 = vunpack.c.h.b16 %v3633
    %v3915 = vunpack.c.l.b16 %v3634
    %v3916 = vunpack.c.h.b16 %v3634
    %v3917 = vunpack.c.l.b16 %v3635
    %v3918 = vunpack.c.h.b16 %v3635
    %v3919 = vunpack.c.l.b16 %v3636
    %v3920 = vunpack.c.h.b16 %v3636
    %v3921 = vunpack.c.l.b16 %v3637
    %v3922 = vunpack.c.h.b16 %v3637
    %v3923 = vunpack.c.l.b16 %v3638
    %v3924 = vunpack.c.h.b16 %v3638
    %v3925 = vunpack.c.l.b16 %v3639
    %v3926 = vunpack.c.h.b16 %v3639
    %v3927 = vunpack.c.l.b16 %v3640
    %v3928 = vunpack.c.h.b16 %v3640
    %v3929 = vunpack.c.l.b16 %v3641
    %v3930 = vunpack.c.h.b16 %v3641
    %v3931 = vunpack.c.l.b16 %v3642
    %v3932 = vunpack.c.h.b16 %v3642
    %v3933 = vunpack.c.l.b16 %v3643
    %v3934 = vunpack.c.h.b16 %v3643
    %v3935 = vunpack.c.l.b16 %v3644
    %v3936 = vunpack.c.h.b16 %v3644
    %v3937 = vunpack.c.l.b16 %v3645
    %v3938 = vunpack.c.h.b16 %v3645
    %v3939 = vunpack.c.l.b16 %v3646
    %v3940 = vunpack.c.h.b16 %v3646
    %v3941 = vunpack.c.l.b16 %v3647
    %v3942 = vunpack.c.h.b16 %v3647
    %v3943 = vunpack.c.l.b16 %v3648
    %v3944 = vunpack.c.h.b16 %v3648
    %v3945 = vunpack.c.l.b16 %v3649
    %v3946 = vunpack.c.h.b16 %v3649
    %v3947 = vunpack.c.l.b16 %v3650
    %v3948 = vunpack.c.h.b16 %v3650
    %v3949 = vunpack.c.l.b16 %v3651
    %v3950 = vunpack.c.h.b16 %v3651
    %v3951 = vunpack.c.l.b16 %v3652
    %v3952 = vunpack.c.h.b16 %v3652
    %v3953 = vunpack.c.l.b16 %v3653
    %v3954 = vunpack.c.h.b16 %v3653
    %v3955 = vunpack.c.l.b16 %v3654
    %v3956 = vunpack.c.h.b16 %v3654
    %v3957 = vunpack.c.l.b16 %v3655
    %v3958 = vunpack.c.h.b16 %v3655
    %v3959 = vunpack.c.l.b16 %v3656
    %v3960 = vunpack.c.h.b16 %v3656
    %v3961 = vunpack.c.l.b16 %v3657
    %v3962 = vunpack.c.h.b16 %v3657
    %v3963 = vunpack.c.l.b16 %v3658
    %v3964 = vunpack.c.h.b16 %v3658
    %v3965 = vunpack.c.l.b16 %v3659
    %v3966 = vunpack.c.h.b16 %v3659
    %v3967 = vunpack.c.l.b16 %v3660
    %v3968 = vunpack.c.h.b16 %v3660
    %v3969 = vunpack.c.l.b16 %v3661
    %v3970 = vunpack.c.h.b16 %v3661
    %v3971 = vunpack.c.l.b16 %v3662
    %v3972 = vunpack.c.h.b16 %v3662
    %v3973 = vunpack.c.l.b16 %v3663
    %v3974 = vunpack.c.h.b16 %v3663
    %v3975 = vunpack.c.l.b16 %v3664
    %v3976 = vunpack.c.h.b16 %v3664
    %v3977 = vunpack.c.l.b16 %v3665
    %v3978 = vunpack.c.h.b16 %v3665
    %v3979 = vunpack.c.l.b16 %v3666
    %v3980 = vunpack.c.h.b16 %v3666
    %v3981 = vunpack.c.l.b16 %v3667
    %v3982 = vunpack.c.h.b16 %v3667
    %v3983 = vunpack.c.l.b16 %v3668
    %v3984 = vunpack.c.h.b16 %v3668
    %v3985 = vunpack.c.l.b16 %v3669
    %v3986 = vunpack.c.h.b16 %v3669
    %v3987 = vunpack.c.l.b16 %v3670
    %v3988 = vunpack.c.h.b16 %v3670
    %v3989 = vunpack.c.l.b16 %v3671
    %v3990 = vunpack.c.h.b16 %v3671
    %v3991 = vunpack.c.l.b16 %v3672
    %v3992 = vunpack.c.h.b16 %v3672
    %v3993 = vunpack.c.l.b16 %v3673
    %v3994 = vunpack.c.h.b16 %v3673
    %v3995 = vunpack.c.l.b16 %v3674
    %v3996 = vunpack.c.h.b16 %v3674
    %v3997 = vunpack.c.l.b16 %v3675
    %v3998 = vunpack.c.h.b16 %v3675
    %v3999 = vunpack.c.l.b16 %v3676
    %v4000 = vunpack.c.h.b16 %v3676
    %v4001 = vunpack.c.l.b16 %v3677
    %v4002 = vunpack.c.h.b16 %v3677
    %v4003 = vunpack.c.l.b16 %v3678
    %v4004 = vunpack.c.h.b16 %v3678
    %v4005 = vunpack.c.l.b16 %v3679
    %v4006 = vunpack.c.h.b16 %v3679
    %v4007 = vunpack.c.l.b16 %v3680
    %v4008 = vunpack.c.h.b16 %v3680
    %v4009 = vunpack.c.l.b16 %v3681
    %v4010 = vunpack.c.h.b16 %v3681
    %v4011 = vunpack.c.l.b16 %v3682
    %v4012 = vunpack.c.h.b16 %v3682
    %v4013 = vunpack.c.l.b16 %v3683
    %v4014 = vunpack.c.h.b16 %v3683
    %v4015 = vunpack.c.l.b16 %v3684
    %v4016 = vunpack.c.h.b16 %v3684
    %v4017 = vunpack.c.l.b16 %v3685
    %v4018 = vunpack.c.h.b16 %v3685
    %v4019 = vunpack.c.l.b16 %v3686
    %v4020 = vunpack.c.h.b16 %v3686
    %v4021 = vunpack.c.l.b16 %v3687
    %v4022 = vunpack.c.h.b16 %v3687
    %v4023 = vunpack.c.l.b16 %v3688
    %v4024 = vunpack.c.h.b16 %v3688
    %v4025 = vunpack.c.l.b16 %v3689
    %v4026 = vunpack.c.h.b16 %v3689
    %v4027 = vunpack.c.l.b16 %v3690
    %v4028 = vunpack.c.h.b16 %v3690
    %v4029 = vunpack.c.l.b16 %v3691
    %v4030 = vunpack.c.h.b16 %v3691
    %v4031 = vunpack.c.l.b16 %v3692
    %v4032 = vunpack.c.h.b16 %v3692
    %v4033 = vunpack.c.l.b16 %v3693
    %v4034 = vunpack.c.h.b16 %v3693
    %v4035 = vunpack.c.l.b16 %v3694
    %v4036 = vunpack.c.h.b16 %v3694
    %v4037 = vunpack.c.l.b16 %v3695
    %v4038 = vunpack.c.h.b16 %v3695
    %v4039 = vunpack.c.l.b16 %v3696
    %v4040 = vunpack.c.h.b16 %v3696
    %v4041 = vunpack.c.l.b16 %v3697
    %v4042 = vunpack.c.h.b16 %v3697
    %v4043 = vunpack.c.l.b16 %v3698
    %v4044 = vunpack.c.h.b16 %v3698
    %v4045 = vunpack.c.l.b16 %v3699
    %v4046 = vunpack.c.h.b16 %v3699
    %v4047 = vunpack.c.l.b16 %v3700
    %v4048 = vunpack.c.h.b16 %v3700
    %v4049 = vunpack.c.l.b16 %v3701
    %v4050 = vunpack.c.h.b16 %v3701
    %v4051 = vunpack.c.l.b16 %v3702
    %v4052 = vunpack.c.h.b16 %v3702
    %v4053 = vunpack.c.l.b16 %v3703
    %v4054 = vunpack.c.h.b16 %v3703
    %v4055 = vunpack.c.l.b16 %v3704
    %v4056 = vunpack.c.h.b16 %v3704
    %v4057 = vunpack.c.l.b16 %v3705
    %v4058 = vunpack.c.h.b16 %v3705
    %v4059 = vunpack.c.l.b16 %v3706
    %v4060 = vunpack.c.h.b16 %v3706
    %v4061 = vunpack.c.l.b16 %v3707
    %v4062 = vunpack.c.h.b16 %v3707
    %v4063 = vunpack.c.l.b16 %v3708
    %v4064 = vunpack.c.h.b16 %v3708
    %v4065 = vunpack.c.l.b16 %v3709
    %v4066 = vunpack.c.h.b16 %v3709
    %v4067 = vunpack.c.l.b16 %v3710
    %v4068 = vunpack.c.h.b16 %v3710
    %v4069 = vunpack.c.l.b16 %v3711
    %v4070 = vunpack.c.h.b16 %v3711
    %v4071 = vunpack.c.l.b16 %v3712
    %v4072 = vunpack.c.h.b16 %v3712
    %v4073 = vunpack.c.l.b16 %v3713
    %v4074 = vunpack.c.h.b16 %v3713
    %v4075 = vunpack.c.l.b16 %v3714
    %v4076 = vunpack.c.h.b16 %v3714
    %v4077 = vunpack.c.l.b16 %v3715
    %v4078 = vunpack.c.h.b16 %v3715
    %v4079 = vunpack.c.l.b16 %v3716
    %v4080 = vunpack.c.h.b16 %v3716
    %v4081 = vunpack.c.l.b16 %v3717
    %v4082 = vunpack.c.h.b16 %v3717
    %v4083 = vunpack.c.l.b16 %v3718
    %v4084 = vunpack.c.h.b16 %v3718
    %v4085 = vunpack.c.l.b16 %v3719
    %v4086 = vunpack.c.h.b16 %v3719
    %v4087 = vunpack.c.l.b16 %v3720
    %v4088 = vunpack.c.h.b16 %v3720
    %v4089 = vunpack.c.l.b16 %v3721
    %v4090 = vunpack.c.h.b16 %v3721
    %v4091 = vunpack.c.l.b16 %v3722
    %v4092 = vunpack.c.h.b16 %v3722
    %v4093 = vunpack.c.l.b16 %v3723
    %v4094 = vunpack.c.h.b16 %v3723
    %v4095 = vunpack.c.l.b16 %v3724
    %v4096 = vunpack.c.h.b16 %v3724
    %v4097 = vunpack.c.l.b16 %v3725
    %v4098 = vunpack.c.h.b16 %v3725
    %v4099 = vunpack.c.l.b16 %v3726
    %v4100 = vunpack.c.h.b16 %v3726
    %v4101 = vunpack.c.l.b16 %v3727
    %v4102 = vunpack.c.h.b16 %v3727
    %v4103 = vunpack.c.l.b16 %v3728
    %v4104 = vunpack.c.h.b16 %v3728
    %v4105 = vunpack.c.l.b16 %v3729
    %v4106 = vunpack.c.h.b16 %v3729
    %v4107 = vunpack.c.l.b16 %v3730
    %v4108 = vunpack.c.h.b16 %v3730
    %v4109 = vunpack.c.l.b16 %v3731
    %v4110 = vunpack.c.h.b16 %v3731
    %v4111 = vunpack.c.l.b16 %v3732
    %v4112 = vunpack.c.h.b16 %v3732
    %v4113 = vunpack.c.l.b16 %v3733
    %v4114 = vunpack.c.h.b16 %v3733
    %v4115 = vunpack.c.l.b16 %v3734
    %v4116 = vunpack.c.h.b16 %v3734
    %v4117 = vunpack.c.l.b16 %v3735
    %v4118 = vunpack.c.h.b16 %v3735
    %v4119 = vunpack.c.l.b16 %v3736
    %v4120 = vunpack.c.h.b16 %v3736
    %v4121 = vpack.c.b16 %v3865, %v3865
    %v4122 = vpack.c.b16 %v3866, %v3866
    %v4123 = vpack.c.b16 %v3867, %v3867
    %v4124 = vpack.c.b16 %v3868, %v3868
    %v4125 = vpack.c.b16 %v3869, %v3869
    %v4126 = vpack.c.b16 %v3870, %v3870
    %v4127 = vpack.c.b16 %v3871, %v3871
    %v4128 = vpack.c.b16 %v3872, %v3872
    %v4129 = vpack.c.b16 %v3873, %v3873
    %v4130 = vpack.c.b16 %v3874, %v3874
    %v4131 = vpack.c.b16 %v3875, %v3875
    %v4132 = vpack.c.b16 %v3876, %v3876
    %v4133 = vpack.c.b16 %v3877, %v3877
    %v4134 = vpack.c.b16 %v3878, %v3878
    %v4135 = vpack.c.b16 %v3879, %v3879
    %v4136 = vpack.c.b16 %v3880, %v3880
    %v4137 = vpack.c.b16 %v3881, %v3881
    %v4138 = vpack.c.b16 %v3882, %v3882
    %v4139 = vpack.c.b16 %v3883, %v3883
    %v4140 = vpack.c.b16 %v3884, %v3884
    %v4141 = vpack.c.b16 %v3885, %v3885
    %v4142 = vpack.c.b16 %v3886, %v3886
    %v4143 = vpack.c.b16 %v3887, %v3887
    %v4144 = vpack.c.b16 %v3888, %v3888
    %v4145 = vpack.c.b16 %v3889, %v3889
    %v4146 = vpack.c.b16 %v3890, %v3890
    %v4147 = vpack.c.b16 %v3891, %v3891
    %v4148 = vpack.c.b16 %v3892, %v3892
    %v4149 = vpack.c.b16 %v3893, %v3893
    %v4150 = vpack.c.b16 %v3894, %v3894
    %v4151 = vpack.c.b16 %v3895, %v3895
    %v4152 = vpack.c.b16 %v3896, %v3896
    %v4153 = vpack.c.b16 %v3897, %v3897
    %v4154 = vpack.c.b16 %v3898, %v3898
    %v4155 = vpack.c.b16 %v3899, %v3899
    %v4156 = vpack.c.b16 %v3900, %v3900
    %v4157 = vpack.c.b16 %v3901, %v3901
    %v4158 = vpack.c.b16 %v3902, %v3902
    %v4159 = vpack.c.b16 %v3903, %v3903
    %v4160 = vpack.c.b16 %v3904, %v3904
    %v4161 = vpack.c.b16 %v3905, %v3905
    %v4162 = vpack.c.b16 %v3906, %v3906
    %v4163 = vpack.c.b16 %v3907, %v3907
    %v4164 = vpack.c.b16 %v3908, %v3908
    %v4165 = vpack.c.b16 %v3909, %v3909
    %v4166 = vpack.c.b16 %v3910, %v3910
    %v4167 = vpack.c.b16 %v3911, %v3911
    %v4168 = vpack.c.b16 %v3912, %v3912
    %v4169 = vpack.c.b16 %v3913, %v3913
    %v4170 = vpack.c.b16 %v3914, %v3914
    %v4171 = vpack.c.b16 %v3915, %v3915
    %v4172 = vpack.c.b16 %v3916, %v3916
    %v4173 = vpack.c.b16 %v3917, %v3917
    %v4174 = vpack.c.b16 %v3918, %v3918
    %v4175 = vpack.c.b16 %v3919, %v3919
    %v4176 = vpack.c.b16 %v3920, %v3920
    %v4177 = vpack.c.b16 %v3921, %v3921
    %v4178 = vpack.c.b16 %v3922, %v3922
    %v4179 = vpack.c.b16 %v3923, %v3923
    %v4180 = vpack.c.b16 %v3924, %v3924
    %v4181 = vpack.c.b16 %v3925, %v3925
    %v4182 = vpack.c.b16 %v3926, %v3926
    %v4183 = vpack.c.b16 %v3927, %v3927
    %v4184 = vpack.c.b16 %v3928, %v3928
    %v4185 = vpack.c.b16 %v3929, %v3929
    %v4186 = vpack.c.b16 %v3930, %v3930
    %v4187 = vpack.c.b16 %v3931, %v3931
    %v4188 = vpack.c.b16 %v3932, %v3932
    %v4189 = vpack.c.b16 %v3933, %v3933
    %v4190 = vpack.c.b16 %v3934, %v3934
    %v4191 = vpack.c.b16 %v3935, %v3935
    %v4192 = vpack.c.b16 %v3936, %v3936
    %v4193 = vpack.c.b16 %v3937, %v3937
    %v4194 = vpack.c.b16 %v3938, %v3938
    %v4195 = vpack.c.b16 %v3939, %v3939
    %v4196 = vpack.c.b16 %v3940, %v3940
    %v4197 = vpack.c.b16 %v3941, %v3941
    %v4198 = vpack.c.b16 %v3942, %v3942
    %v4199 = vpack.c.b16 %v3943, %v3943
    %v4200 = vpack.c.b16 %v3944, %v3944
    %v4201 = vpack.c.b16 %v3945, %v3945
    %v4202 = vpack.c.b16 %v3946, %v3946
    %v4203 = vpack.c.b16 %v3947, %v3947
    %v4204 = vpack.c.b16 %v3948, %v3948
    %v4205 = vpack.c.b16 %v3949, %v3949
    %v4206 = vpack.c.b16 %v3950, %v3950
    %v4207 = vpack.c.b16 %v3951, %v3951
    %v4208 = vpack.c.b16 %v3952, %v3952
    %v4209 = vpack.c.b16 %v3953, %v3953
    %v4210 = vpack.c.b16 %v3954, %v3954
    %v4211 = vpack.c.b16 %v3955, %v3955
    %v4212 = vpack.c.b16 %v3956, %v3956
    %v4213 = vpack.c.b16 %v3957, %v3957
    %v4214 = vpack.c.b16 %v3958, %v3958
    %v4215 = vpack.c.b16 %v3959, %v3959
    %v4216 = vpack.c.b16 %v3960, %v3960
    %v4217 = vpack.c.b16 %v3961, %v3961
    %v4218 = vpack.c.b16 %v3962, %v3962
    %v4219 = vpack.c.b16 %v3963, %v3963
    %v4220 = vpack.c.b16 %v3964, %v3964
    %v4221 = vpack.c.b16 %v3965, %v3965
    %v4222 = vpack.c.b16 %v3966, %v3966
    %v4223 = vpack.c.b16 %v3967, %v3967
    %v4224 = vpack.c.b16 %v3968, %v3968
    %v4225 = vpack.c.b16 %v3969, %v3969
    %v4226 = vpack.c.b16 %v3970, %v3970
    %v4227 = vpack.c.b16 %v3971, %v3971
    %v4228 = vpack.c.b16 %v3972, %v3972
    %v4229 = vpack.c.b16 %v3973, %v3973
    %v4230 = vpack.c.b16 %v3974, %v3974
    %v4231 = vpack.c.b16 %v3975, %v3975
    %v4232 = vpack.c.b16 %v3976, %v3976
    %v4233 = vpack.c.b16 %v3977, %v3977
    %v4234 = vpack.c.b16 %v3978, %v3978
    %v4235 = vpack.c.b16 %v3979, %v3979
    %v4236 = vpack.c.b16 %v3980, %v3980
    %v4237 = vpack.c.b16 %v3981, %v3981
    %v4238 = vpack.c.b16 %v3982, %v3982
    %v4239 = vpack.c.b16 %v3983, %v3983
    %v4240 = vpack.c.b16 %v3984, %v3984
    %v4241 = vpack.c.b16 %v3985, %v3985
    %v4242 = vpack.c.b16 %v3986, %v3986
    %v4243 = vpack.c.b16 %v3987, %v3987
    %v4244 = vpack.c.b16 %v3988, %v3988
    %v4245 = vpack.c.b16 %v3989, %v3989
    %v4246 = vpack.c.b16 %v3990, %v3990
    %v4247 = vpack.c.b16 %v3991, %v3991
    %v4248 = vpack.c.b16 %v3992, %v3992
    %v4249 = vpack.c.b16 %v3993, %v3993
    %v4250 = vpack.c.b16 %v3994, %v3994
    %v4251 = vpack.c.b16 %v3995, %v3995
    %v4252 = vpack.c.b16 %v3996, %v3996
    %v4253 = vpack.c.b16 %v3997, %v3997
    %v4254 = vpack.c.b16 %v3998, %v3998
    %v4255 = vpack.c.b16 %v3999, %v3999
    %v4256 = vpack.c.b16 %v4000, %v4000
    %v4257 = vpack.c.b16 %v4001, %v4001
    %v4258 = vpack.c.b16 %v4002, %v4002
    %v4259 = vpack.c.b16 %v4003, %v4003
    %v4260 = vpack.c.b16 %v4004, %v4004
    %v4261 = vpack.c.b16 %v4005, %v4005
    %v4262 = vpack.c.b16 %v4006, %v4006
    %v4263 = vpack.c.b16 %v4007, %v4007
    %v4264 = vpack.c.b16 %v4008, %v4008
    %v4265 = vpack.c.b16 %v4009, %v4009
    %v4266 = vpack.c.b16 %v4010, %v4010
    %v4267 = vpack.c.b16 %v4011, %v4011
    %v4268 = vpack.c.b16 %v4012, %v4012
    %v4269 = vpack.c.b16 %v4013, %v4013
    %v4270 = vpack.c.b16 %v4014, %v4014
    %v4271 = vpack.c.b16 %v4015, %v4015
    %v4272 = vpack.c.b16 %v4016, %v4016
    %v4273 = vpack.c.b16 %v4017, %v4017
    %v4274 = vpack.c.b16 %v4018, %v4018
    %v4275 = vpack.c.b16 %v4019, %v4019
    %v4276 = vpack.c.b16 %v4020, %v4020
    %v4277 = vpack.c.b16 %v4021, %v4021
    %v4278 = vpack.c.b16 %v4022, %v4022
    %v4279 = vpack.c.b16 %v4023, %v4023
    %v4280 = vpack.c.b16 %v4024, %v4024
    %v4281 = vpack.c.b16 %v4025, %v4025
    %v4282 = vpack.c.b16 %v4026, %v4026
    %v4283 = vpack.c.b16 %v4027, %v4027
    %v4284 = vpack.c.b16 %v4028, %v4028
    %v4285 = vpack.c.b16 %v4029, %v4029
    %v4286 = vpack.c.b16 %v4030, %v4030
    %v4287 = vpack.c.b16 %v4031, %v4031
    %v4288 = vpack.c.b16 %v4032, %v4032
    %v4289 = vpack.c.b16 %v4033, %v4033
    %v4290 = vpack.c.b16 %v4034, %v4034
    %v4291 = vpack.c.b16 %v4035, %v4035
    %v4292 = vpack.c.b16 %v4036, %v4036
    %v4293 = vpack.c.b16 %v4037, %v4037
    %v4294 = vpack.c.b16 %v4038, %v4038
    %v4295 = vpack.c.b16 %v4039, %v4039
    %v4296 = vpack.c.b16 %v4040, %v4040
    %v4297 = vpack.c.b16 %v4041, %v4041
    %v4298 = vpack.c.b16 %v4042, %v4042
    %v4299 = vpack.c.b16 %v4043, %v4043
    %v4300 = vpack.c.b16 %v4044, %v4044
    %v4301 = vpack.c.b16 %v4045, %v4045
    %v4302 = vpack.c.b16 %v4046, %v4046
    %v4303 = vpack.c.b16 %v4047, %v4047
    %v4304 = vpack.c.b16 %v4048, %v4048
    %v4305 = vpack.c.b16 %v4049, %v4049
    %v4306 = vpack.c.b16 %v4050, %v4050
    %v4307 = vpack.c.b16 %v4051, %v4051
    %v4308 = vpack.c.b16 %v4052, %v4052
    %v4309 = vpack.c.b16 %v4053, %v4053
    %v4310 = vpack.c.b16 %v4054, %v4054
    %v4311 = vpack.c.b16 %v4055, %v4055
    %v4312 = vpack.c.b16 %v4056, %v4056
    %v4313 = vpack.c.b16 %v4057, %v4057
    %v4314 = vpack.c.b16 %v4058, %v4058
    %v4315 = vpack.c.b16 %v4059, %v4059
    %v4316 = vpack.c.b16 %v4060, %v4060
    %v4317 = vpack.c.b16 %v4061, %v4061
    %v4318 = vpack.c.b16 %v4062, %v4062
    %v4319 = vpack.c.b16 %v4063, %v4063
    %v4320 = vpack.c.b16 %v4064, %v4064
    %v4321 = vpack.c.b16 %v4065, %v4065
    %v4322 = vpack.c.b16 %v4066, %v4066
    %v4323 = vpack.c.b16 %v4067, %v4067
    %v4324 = vpack.c.b16 %v4068, %v4068
    %v4325 = vpack.c.b16 %v4069, %v4069
    %v4326 = vpack.c.b16 %v4070, %v4070
    %v4327 = vpack.c.b16 %v4071, %v4071
    %v4328 = vpack.c.b16 %v4072, %v4072
    %v4329 = vpack.c.b16 %v4073, %v4073
    %v4330 = vpack.c.b16 %v4074, %v4074
    %v4331 = vpack.c.b16 %v4075, %v4075
    %v4332 = vpack.c.b16 %v4076, %v4076
    %v4333 = vpack.c.b16 %v4077, %v4077
    %v4334 = vpack.c.b16 %v4078, %v4078
    %v4335 = vpack.c.b16 %v4079, %v4079
    %v4336 = vpack.c.b16 %v4080, %v4080
    %v4337 = vpack.c.b16 %v4081, %v4081
    %v4338 = vpack.c.b16 %v4082, %v4082
    %v4339 = vpack.c.b16 %v4083, %v4083
    %v4340 = vpack.c.b16 %v4084, %v4084
    %v4341 = vpack.c.b16 %v4085, %v4085
    %v4342 = vpack.c.b16 %v4086, %v4086
    %v4343 = vpack.c.b16 %v4087, %v4087
    %v4344 = vpack.c.b16 %v4088, %v4088
    %v4345 = vpack.c.b16 %v4089, %v4089
    %v4346 = vpack.c.b16 %v4090, %v4090
    %v4347 = vpack.c.b16 %v4091, %v4091
    %v4348 = vpack.c.b16 %v4092, %v4092
    %v4349 = vpack.c.b16 %v4093, %v4093
    %v4350 = vpack.c.b16 %v4094, %v4094
    %v4351 = vpack.c.b16 %v4095, %v4095
    %v4352 = vpack.c.b16 %v4096, %v4096
    %v4353 = vpack.c.b16 %v4097, %v4097
    %v4354 = vpack.c.b16 %v4098, %v4098
    %v4355 = vpack.c.b16 %v4099, %v4099
    %v4356 = vpack.c.b16 %v4100, %v4100
    %v4357 = vpack.c.b16 %v4101, %v4101
    %v4358 = vpack.c.b16 %v4102, %v4102
    %v4359 = vpack.c.b16 %v4103, %v4103
    %v4360 = vpack.c.b16 %v4104, %v4104
    %v4361 = vpack.c.b16 %v4105, %v4105
    %v4362 = vpack.c.b16 %v4106, %v4106
    %v4363 = vpack.c.b16 %v4107, %v4107
    %v4364 = vpack.c.b16 %v4108, %v4108
    %v4365 = vpack.c.b16 %v4109, %v4109
    %v4366 = vpack.c.b16 %v4110, %v4110
    %v4367 = vpack.c.b16 %v4111, %v4111
    %v4368 = vpack.c.b16 %v4112, %v4112
    %v4369 = vpack.c.b16 %v4113, %v4113
    %v4370 = vpack.c.b16 %v4114, %v4114
    %v4371 = vpack.c.b16 %v4115, %v4115
    %v4372 = vpack.c.b16 %v4116, %v4116
    %v4373 = vpack.c.b16 %v4117, %v4117
    %v4374 = vpack.c.b16 %v4118, %v4118
    %v4375 = vpack.c.b16 %v4119, %v4119
    %v4376 = vpack.c.b16 %v4120, %v4120
    %4633 = vst [vmem:[#allocation2] sm:$0xf] %v4121
    %4634 = vst [vmem:[#allocation2 + $0x4] sm:$0xf] %v4122
    %4635 = vst [vmem:[#allocation2 + $0x8] sm:$0xf] %v4123
    %4636 = vst [vmem:[#allocation2 + $0xc] sm:$0xf] %v4124
    %4637 = vst [vmem:[#allocation2 + $0x10] sm:$0xf] %v4125
    %4638 = vst [vmem:[#allocation2 + $0x14] sm:$0xf] %v4126
    %4639 = vst [vmem:[#allocation2 + $0x18] sm:$0xf] %v4127
    %4640 = vst [vmem:[#allocation2 + $0x1c] sm:$0xf] %v4128
    %4641 = vst [vmem:[#allocation2 + $0x20] sm:$0xf] %v4129
    %4642 = vst [vmem:[#allocation2 + $0x24] sm:$0xf] %v4130
    %4643 = vst [vmem:[#allocation2 + $0x28] sm:$0xf] %v4131
    %4644 = vst [vmem:[#allocation2 + $0x2c] sm:$0xf] %v4132
    %4645 = vst [vmem:[#allocation2 + $0x30] sm:$0xf] %v4133
    %4646 = vst [vmem:[#allocation2 + $0x34] sm:$0xf] %v4134
    %4647 = vst [vmem:[#allocation2 + $0x38] sm:$0xf] %v4135
    %4648 = vst [vmem:[#allocation2 + $0x3c] sm:$0xf] %v4136
    %4649 = vst [vmem:[#allocation2 + $0x40] sm:$0xf] %v4137
    %4650 = vst [vmem:[#allocation2 + $0x44] sm:$0xf] %v4138
    %4651 = vst [vmem:[#allocation2 + $0x48] sm:$0xf] %v4139
    %4652 = vst [vmem:[#allocation2 + $0x4c] sm:$0xf] %v4140
    %4653 = vst [vmem:[#allocation2 + $0x50] sm:$0xf] %v4141
    %4654 = vst [vmem:[#allocation2 + $0x54] sm:$0xf] %v4142
    %4655 = vst [vmem:[#allocation2 + $0x58] sm:$0xf] %v4143
    %4656 = vst [vmem:[#allocation2 + $0x5c] sm:$0xf] %v4144
    %4657 = vst [vmem:[#allocation2 + $0x60] sm:$0xf] %v4145
    %4658 = vst [vmem:[#allocation2 + $0x64] sm:$0xf] %v4146
    %4659 = vst [vmem:[#allocation2 + $0x68] sm:$0xf] %v4147
    %4660 = vst [vmem:[#allocation2 + $0x6c] sm:$0xf] %v4148
    %4661 = vst [vmem:[#allocation2 + $0x70] sm:$0xf] %v4149
    %4662 = vst [vmem:[#allocation2 + $0x74] sm:$0xf] %v4150
    %4663 = vst [vmem:[#allocation2 + $0x78] sm:$0xf] %v4151
    %4664 = vst [vmem:[#allocation2 + $0x7c] sm:$0xf] %v4152
    %4665 = vst [vmem:[#allocation2 + $0x80] sm:$0xf] %v4153
    %4666 = vst [vmem:[#allocation2 + $0x84] sm:$0xf] %v4154
    %4667 = vst [vmem:[#allocation2 + $0x88] sm:$0xf] %v4155
    %4668 = vst [vmem:[#allocation2 + $0x8c] sm:$0xf] %v4156
    %4669 = vst [vmem:[#allocation2 + $0x90] sm:$0xf] %v4157
    %4670 = vst [vmem:[#allocation2 + $0x94] sm:$0xf] %v4158
    %4671 = vst [vmem:[#allocation2 + $0x98] sm:$0xf] %v4159
    %4672 = vst [vmem:[#allocation2 + $0x9c] sm:$0xf] %v4160
    %4673 = vst [vmem:[#allocation2 + $0xa0] sm:$0xf] %v4161
    %4674 = vst [vmem:[#allocation2 + $0xa4] sm:$0xf] %v4162
    %4675 = vst [vmem:[#allocation2 + $0xa8] sm:$0xf] %v4163
    %4676 = vst [vmem:[#allocation2 + $0xac] sm:$0xf] %v4164
    %4677 = vst [vmem:[#allocation2 + $0xb0] sm:$0xf] %v4165
    %4678 = vst [vmem:[#allocation2 + $0xb4] sm:$0xf] %v4166
    %4679 = vst [vmem:[#allocation2 + $0xb8] sm:$0xf] %v4167
    %4680 = vst [vmem:[#allocation2 + $0xbc] sm:$0xf] %v4168
    %4681 = vst [vmem:[#allocation2 + $0xc0] sm:$0xf] %v4169
    %4682 = vst [vmem:[#allocation2 + $0xc4] sm:$0xf] %v4170
    %4683 = vst [vmem:[#allocation2 + $0xc8] sm:$0xf] %v4171
    %4684 = vst [vmem:[#allocation2 + $0xcc] sm:$0xf] %v4172
    %4685 = vst [vmem:[#allocation2 + $0xd0] sm:$0xf] %v4173
    %4686 = vst [vmem:[#allocation2 + $0xd4] sm:$0xf] %v4174
    %4687 = vst [vmem:[#allocation2 + $0xd8] sm:$0xf] %v4175
    %4688 = vst [vmem:[#allocation2 + $0xdc] sm:$0xf] %v4176
    %4689 = vst [vmem:[#allocation2 + $0xe0] sm:$0xf] %v4177
    %4690 = vst [vmem:[#allocation2 + $0xe4] sm:$0xf] %v4178
    %4691 = vst [vmem:[#allocation2 + $0xe8] sm:$0xf] %v4179
    %4692 = vst [vmem:[#allocation2 + $0xec] sm:$0xf] %v4180
    %4693 = vst [vmem:[#allocation2 + $0xf0] sm:$0xf] %v4181
    %4694 = vst [vmem:[#allocation2 + $0xf4] sm:$0xf] %v4182
    %4695 = vst [vmem:[#allocation2 + $0xf8] sm:$0xf] %v4183
    %4696 = vst [vmem:[#allocation2 + $0xfc] sm:$0xf] %v4184
    %4697 = vst [vmem:[#allocation2 + $0x100] sm:$0xf] %v4185
    %4698 = vst [vmem:[#allocation2 + $0x104] sm:$0xf] %v4186
    %4699 = vst [vmem:[#allocation2 + $0x108] sm:$0xf] %v4187
    %4700 = vst [vmem:[#allocation2 + $0x10c] sm:$0xf] %v4188
    %4701 = vst [vmem:[#allocation2 + $0x110] sm:$0xf] %v4189
    %4702 = vst [vmem:[#allocation2 + $0x114] sm:$0xf] %v4190
    %4703 = vst [vmem:[#allocation2 + $0x118] sm:$0xf] %v4191
    %4704 = vst [vmem:[#allocation2 + $0x11c] sm:$0xf] %v4192
    %4705 = vst [vmem:[#allocation2 + $0x120] sm:$0xf] %v4193
    %4706 = vst [vmem:[#allocation2 + $0x124] sm:$0xf] %v4194
    %4707 = vst [vmem:[#allocation2 + $0x128] sm:$0xf] %v4195
    %4708 = vst [vmem:[#allocation2 + $0x12c] sm:$0xf] %v4196
    %4709 = vst [vmem:[#allocation2 + $0x130] sm:$0xf] %v4197
    %4710 = vst [vmem:[#allocation2 + $0x134] sm:$0xf] %v4198
    %4711 = vst [vmem:[#allocation2 + $0x138] sm:$0xf] %v4199
    %4712 = vst [vmem:[#allocation2 + $0x13c] sm:$0xf] %v4200
    %4713 = vst [vmem:[#allocation2 + $0x140] sm:$0xf] %v4201
    %4714 = vst [vmem:[#allocation2 + $0x144] sm:$0xf] %v4202
    %4715 = vst [vmem:[#allocation2 + $0x148] sm:$0xf] %v4203
    %4716 = vst [vmem:[#allocation2 + $0x14c] sm:$0xf] %v4204
    %4717 = vst [vmem:[#allocation2 + $0x150] sm:$0xf] %v4205
    %4718 = vst [vmem:[#allocation2 + $0x154] sm:$0xf] %v4206
    %4719 = vst [vmem:[#allocation2 + $0x158] sm:$0xf] %v4207
    %4720 = vst [vmem:[#allocation2 + $0x15c] sm:$0xf] %v4208
    %4721 = vst [vmem:[#allocation2 + $0x160] sm:$0xf] %v4209
    %4722 = vst [vmem:[#allocation2 + $0x164] sm:$0xf] %v4210
    %4723 = vst [vmem:[#allocation2 + $0x168] sm:$0xf] %v4211
    %4724 = vst [vmem:[#allocation2 + $0x16c] sm:$0xf] %v4212
    %4725 = vst [vmem:[#allocation2 + $0x170] sm:$0xf] %v4213
    %4726 = vst [vmem:[#allocation2 + $0x174] sm:$0xf] %v4214
    %4727 = vst [vmem:[#allocation2 + $0x178] sm:$0xf] %v4215
    %4728 = vst [vmem:[#allocation2 + $0x17c] sm:$0xf] %v4216
    %4729 = vst [vmem:[#allocation2 + $0x180] sm:$0xf] %v4217
    %4730 = vst [vmem:[#allocation2 + $0x184] sm:$0xf] %v4218
    %4731 = vst [vmem:[#allocation2 + $0x188] sm:$0xf] %v4219
    %4732 = vst [vmem:[#allocation2 + $0x18c] sm:$0xf] %v4220
    %4733 = vst [vmem:[#allocation2 + $0x190] sm:$0xf] %v4221
    %4734 = vst [vmem:[#allocation2 + $0x194] sm:$0xf] %v4222
    %4735 = vst [vmem:[#allocation2 + $0x198] sm:$0xf] %v4223
    %4736 = vst [vmem:[#allocation2 + $0x19c] sm:$0xf] %v4224
    %4737 = vst [vmem:[#allocation2 + $0x1a0] sm:$0xf] %v4225
    %4738 = vst [vmem:[#allocation2 + $0x1a4] sm:$0xf] %v4226
    %4739 = vst [vmem:[#allocation2 + $0x1a8] sm:$0xf] %v4227
    %4740 = vst [vmem:[#allocation2 + $0x1ac] sm:$0xf] %v4228
    %4741 = vst [vmem:[#allocation2 + $0x1b0] sm:$0xf] %v4229
    %4742 = vst [vmem:[#allocation2 + $0x1b4] sm:$0xf] %v4230
    %4743 = vst [vmem:[#allocation2 + $0x1b8] sm:$0xf] %v4231
    %4744 = vst [vmem:[#allocation2 + $0x1bc] sm:$0xf] %v4232
    %4745 = vst [vmem:[#allocation2 + $0x1c0] sm:$0xf] %v4233
    %4746 = vst [vmem:[#allocation2 + $0x1c4] sm:$0xf] %v4234
    %4747 = vst [vmem:[#allocation2 + $0x1c8] sm:$0xf] %v4235
    %4748 = vst [vmem:[#allocation2 + $0x1cc] sm:$0xf] %v4236
    %4749 = vst [vmem:[#allocation2 + $0x1d0] sm:$0xf] %v4237
    %4750 = vst [vmem:[#allocation2 + $0x1d4] sm:$0xf] %v4238
    %4751 = vst [vmem:[#allocation2 + $0x1d8] sm:$0xf] %v4239
    %4752 = vst [vmem:[#allocation2 + $0x1dc] sm:$0xf] %v4240
    %4753 = vst [vmem:[#allocation2 + $0x1e0] sm:$0xf] %v4241
    %4754 = vst [vmem:[#allocation2 + $0x1e4] sm:$0xf] %v4242
    %4755 = vst [vmem:[#allocation2 + $0x1e8] sm:$0xf] %v4243
    %4756 = vst [vmem:[#allocation2 + $0x1ec] sm:$0xf] %v4244
    %4757 = vst [vmem:[#allocation2 + $0x1f0] sm:$0xf] %v4245
    %4758 = vst [vmem:[#allocation2 + $0x1f4] sm:$0xf] %v4246
    %4759 = vst [vmem:[#allocation2 + $0x1f8] sm:$0xf] %v4247
    %4760 = vst [vmem:[#allocation2 + $0x1fc] sm:$0xf] %v4248
    %4761 = vst [vmem:[#allocation2 + $0x200] sm:$0xf] %v4249
    %4762 = vst [vmem:[#allocation2 + $0x204] sm:$0xf] %v4250
    %4763 = vst [vmem:[#allocation2 + $0x208] sm:$0xf] %v4251
    %4764 = vst [vmem:[#allocation2 + $0x20c] sm:$0xf] %v4252
    %4765 = vst [vmem:[#allocation2 + $0x210] sm:$0xf] %v4253
    %4766 = vst [vmem:[#allocation2 + $0x214] sm:$0xf] %v4254
    %4767 = vst [vmem:[#allocation2 + $0x218] sm:$0xf] %v4255
    %4768 = vst [vmem:[#allocation2 + $0x21c] sm:$0xf] %v4256
    %4769 = vst [vmem:[#allocation2 + $0x220] sm:$0xf] %v4257
    %4770 = vst [vmem:[#allocation2 + $0x224] sm:$0xf] %v4258
    %4771 = vst [vmem:[#allocation2 + $0x228] sm:$0xf] %v4259
    %4772 = vst [vmem:[#allocation2 + $0x22c] sm:$0xf] %v4260
    %4773 = vst [vmem:[#allocation2 + $0x230] sm:$0xf] %v4261
    %4774 = vst [vmem:[#allocation2 + $0x234] sm:$0xf] %v4262
    %4775 = vst [vmem:[#allocation2 + $0x238] sm:$0xf] %v4263
    %4776 = vst [vmem:[#allocation2 + $0x23c] sm:$0xf] %v4264
    %4777 = vst [vmem:[#allocation2 + $0x240] sm:$0xf] %v4265
    %4778 = vst [vmem:[#allocation2 + $0x244] sm:$0xf] %v4266
    %4779 = vst [vmem:[#allocation2 + $0x248] sm:$0xf] %v4267
    %4780 = vst [vmem:[#allocation2 + $0x24c] sm:$0xf] %v4268
    %4781 = vst [vmem:[#allocation2 + $0x250] sm:$0xf] %v4269
    %4782 = vst [vmem:[#allocation2 + $0x254] sm:$0xf] %v4270
    %4783 = vst [vmem:[#allocation2 + $0x258] sm:$0xf] %v4271
    %4784 = vst [vmem:[#allocation2 + $0x25c] sm:$0xf] %v4272
    %4785 = vst [vmem:[#allocation2 + $0x260] sm:$0xf] %v4273
    %4786 = vst [vmem:[#allocation2 + $0x264] sm:$0xf] %v4274
    %4787 = vst [vmem:[#allocation2 + $0x268] sm:$0xf] %v4275
    %4788 = vst [vmem:[#allocation2 + $0x26c] sm:$0xf] %v4276
    %4789 = vst [vmem:[#allocation2 + $0x270] sm:$0xf] %v4277
    %4790 = vst [vmem:[#allocation2 + $0x274] sm:$0xf] %v4278
    %4791 = vst [vmem:[#allocation2 + $0x278] sm:$0xf] %v4279
    %4792 = vst [vmem:[#allocation2 + $0x27c] sm:$0xf] %v4280
    %4793 = vst [vmem:[#allocation2 + $0x280] sm:$0xf] %v4281
    %4794 = vst [vmem:[#allocation2 + $0x284] sm:$0xf] %v4282
    %4795 = vst [vmem:[#allocation2 + $0x288] sm:$0xf] %v4283
    %4796 = vst [vmem:[#allocation2 + $0x28c] sm:$0xf] %v4284
    %4797 = vst [vmem:[#allocation2 + $0x290] sm:$0xf] %v4285
    %4798 = vst [vmem:[#allocation2 + $0x294] sm:$0xf] %v4286
    %4799 = vst [vmem:[#allocation2 + $0x298] sm:$0xf] %v4287
    %4800 = vst [vmem:[#allocation2 + $0x29c] sm:$0xf] %v4288
    %4801 = vst [vmem:[#allocation2 + $0x2a0] sm:$0xf] %v4289
    %4802 = vst [vmem:[#allocation2 + $0x2a4] sm:$0xf] %v4290
    %4803 = vst [vmem:[#allocation2 + $0x2a8] sm:$0xf] %v4291
    %4804 = vst [vmem:[#allocation2 + $0x2ac] sm:$0xf] %v4292
    %4805 = vst [vmem:[#allocation2 + $0x2b0] sm:$0xf] %v4293
    %4806 = vst [vmem:[#allocation2 + $0x2b4] sm:$0xf] %v4294
    %4807 = vst [vmem:[#allocation2 + $0x2b8] sm:$0xf] %v4295
    %4808 = vst [vmem:[#allocation2 + $0x2bc] sm:$0xf] %v4296
    %4809 = vst [vmem:[#allocation2 + $0x2c0] sm:$0xf] %v4297
    %4810 = vst [vmem:[#allocation2 + $0x2c4] sm:$0xf] %v4298
    %4811 = vst [vmem:[#allocation2 + $0x2c8] sm:$0xf] %v4299
    %4812 = vst [vmem:[#allocation2 + $0x2cc] sm:$0xf] %v4300
    %4813 = vst [vmem:[#allocation2 + $0x2d0] sm:$0xf] %v4301
    %4814 = vst [vmem:[#allocation2 + $0x2d4] sm:$0xf] %v4302
    %4815 = vst [vmem:[#allocation2 + $0x2d8] sm:$0xf] %v4303
    %4816 = vst [vmem:[#allocation2 + $0x2dc] sm:$0xf] %v4304
    %4817 = vst [vmem:[#allocation2 + $0x2e0] sm:$0xf] %v4305
    %4818 = vst [vmem:[#allocation2 + $0x2e4] sm:$0xf] %v4306
    %4819 = vst [vmem:[#allocation2 + $0x2e8] sm:$0xf] %v4307
    %4820 = vst [vmem:[#allocation2 + $0x2ec] sm:$0xf] %v4308
    %4821 = vst [vmem:[#allocation2 + $0x2f0] sm:$0xf] %v4309
    %4822 = vst [vmem:[#allocation2 + $0x2f4] sm:$0xf] %v4310
    %4823 = vst [vmem:[#allocation2 + $0x2f8] sm:$0xf] %v4311
    %4824 = vst [vmem:[#allocation2 + $0x2fc] sm:$0xf] %v4312
    %4825 = vst [vmem:[#allocation2 + $0x300] sm:$0xf] %v4313
    %4826 = vst [vmem:[#allocation2 + $0x304] sm:$0xf] %v4314
    %4827 = vst [vmem:[#allocation2 + $0x308] sm:$0xf] %v4315
    %4828 = vst [vmem:[#allocation2 + $0x30c] sm:$0xf] %v4316
    %4829 = vst [vmem:[#allocation2 + $0x310] sm:$0xf] %v4317
    %4830 = vst [vmem:[#allocation2 + $0x314] sm:$0xf] %v4318
    %4831 = vst [vmem:[#allocation2 + $0x318] sm:$0xf] %v4319
    %4832 = vst [vmem:[#allocation2 + $0x31c] sm:$0xf] %v4320
    %4833 = vst [vmem:[#allocation2 + $0x320] sm:$0xf] %v4321
    %4834 = vst [vmem:[#allocation2 + $0x324] sm:$0xf] %v4322
    %4835 = vst [vmem:[#allocation2 + $0x328] sm:$0xf] %v4323
    %4836 = vst [vmem:[#allocation2 + $0x32c] sm:$0xf] %v4324
    %4837 = vst [vmem:[#allocation2 + $0x330] sm:$0xf] %v4325
    %4838 = vst [vmem:[#allocation2 + $0x334] sm:$0xf] %v4326
    %4839 = vst [vmem:[#allocation2 + $0x338] sm:$0xf] %v4327
    %4840 = vst [vmem:[#allocation2 + $0x33c] sm:$0xf] %v4328
    %4841 = vst [vmem:[#allocation2 + $0x340] sm:$0xf] %v4329
    %4842 = vst [vmem:[#allocation2 + $0x344] sm:$0xf] %v4330
    %4843 = vst [vmem:[#allocation2 + $0x348] sm:$0xf] %v4331
    %4844 = vst [vmem:[#allocation2 + $0x34c] sm:$0xf] %v4332
    %4845 = vst [vmem:[#allocation2 + $0x350] sm:$0xf] %v4333
    %4846 = vst [vmem:[#allocation2 + $0x354] sm:$0xf] %v4334
    %4847 = vst [vmem:[#allocation2 + $0x358] sm:$0xf] %v4335
    %4848 = vst [vmem:[#allocation2 + $0x35c] sm:$0xf] %v4336
    %4849 = vst [vmem:[#allocation2 + $0x360] sm:$0xf] %v4337
    %4850 = vst [vmem:[#allocation2 + $0x364] sm:$0xf] %v4338
    %4851 = vst [vmem:[#allocation2 + $0x368] sm:$0xf] %v4339
    %4852 = vst [vmem:[#allocation2 + $0x36c] sm:$0xf] %v4340
    %4853 = vst [vmem:[#allocation2 + $0x370] sm:$0xf] %v4341
    %4854 = vst [vmem:[#allocation2 + $0x374] sm:$0xf] %v4342
    %4855 = vst [vmem:[#allocation2 + $0x378] sm:$0xf] %v4343
    %4856 = vst [vmem:[#allocation2 + $0x37c] sm:$0xf] %v4344
    %4857 = vst [vmem:[#allocation2 + $0x380] sm:$0xf] %v4345
    %4858 = vst [vmem:[#allocation2 + $0x384] sm:$0xf] %v4346
    %4859 = vst [vmem:[#allocation2 + $0x388] sm:$0xf] %v4347
    %4860 = vst [vmem:[#allocation2 + $0x38c] sm:$0xf] %v4348
    %4861 = vst [vmem:[#allocation2 + $0x390] sm:$0xf] %v4349
    %4862 = vst [vmem:[#allocation2 + $0x394] sm:$0xf] %v4350
    %4863 = vst [vmem:[#allocation2 + $0x398] sm:$0xf] %v4351
    %4864 = vst [vmem:[#allocation2 + $0x39c] sm:$0xf] %v4352
    %4865 = vst [vmem:[#allocation2 + $0x3a0] sm:$0xf] %v4353
    %4866 = vst [vmem:[#allocation2 + $0x3a4] sm:$0xf] %v4354
    %4867 = vst [vmem:[#allocation2 + $0x3a8] sm:$0xf] %v4355
    %4868 = vst [vmem:[#allocation2 + $0x3ac] sm:$0xf] %v4356
    %4869 = vst [vmem:[#allocation2 + $0x3b0] sm:$0xf] %v4357
    %4870 = vst [vmem:[#allocation2 + $0x3b4] sm:$0xf] %v4358
    %4871 = vst [vmem:[#allocation2 + $0x3b8] sm:$0xf] %v4359
    %4872 = vst [vmem:[#allocation2 + $0x3bc] sm:$0xf] %v4360
    %4873 = vst [vmem:[#allocation2 + $0x3c0] sm:$0xf] %v4361
    %4874 = vst [vmem:[#allocation2 + $0x3c4] sm:$0xf] %v4362
    %4875 = vst [vmem:[#allocation2 + $0x3c8] sm:$0xf] %v4363
    %4876 = vst [vmem:[#allocation2 + $0x3cc] sm:$0xf] %v4364
    %4877 = vst [vmem:[#allocation2 + $0x3d0] sm:$0xf] %v4365
    %4878 = vst [vmem:[#allocation2 + $0x3d4] sm:$0xf] %v4366
    %4879 = vst [vmem:[#allocation2 + $0x3d8] sm:$0xf] %v4367
    %4880 = vst [vmem:[#allocation2 + $0x3dc] sm:$0xf] %v4368
    %4881 = vst [vmem:[#allocation2 + $0x3e0] sm:$0xf] %v4369
    %4882 = vst [vmem:[#allocation2 + $0x3e4] sm:$0xf] %v4370
    %4883 = vst [vmem:[#allocation2 + $0x3e8] sm:$0xf] %v4371
    %4884 = vst [vmem:[#allocation2 + $0x3ec] sm:$0xf] %v4372
    %4885 = vst [vmem:[#allocation2 + $0x3f0] sm:$0xf] %v4373
    %4886 = vst [vmem:[#allocation2 + $0x3f4] sm:$0xf] %v4374
    %4887 = vst [vmem:[#allocation2 + $0x3f8] sm:$0xf] %v4375
    %4888 = vst [vmem:[#allocation2 + $0x3fc] sm:$0xf] %v4376
    // Predicated region
    $region14: #{conv_bn_mish_nhwc.3} parent=1 // pred_check
      _
    $region15: #{conv_bn_mish_nhwc.3} parent=1 // pred_check_branch
      %4890 = sbr.rel (0) target = $region17
    $region16: #{conv_bn_mish_nhwc.3} parent=1 // pred_region
      %s4892 = ssub.s32 16384, 16384
      %4893 = vsyncadd [#allocation3], %s4892
      %s4894 = sshll.u32 [#allocation2], 4
      %s4895 = int_to_ptr.vmem [resolvable:$true] %s4894
      %4900 = dma.vmem_to_hbm [thread:$0]  %s4895, 16384, %s3, [#allocation3], 64, 64, 4
    $region17: #{conv_bn_mish_nhwc.3} parent=1 // pred_fallthru
      _
    // Predicated region
    $region18: #{conv_bn_mish_nhwc.3} parent=1 // pred_check
      _
    $region19: #{conv_bn_mish_nhwc.3} parent=1 // pred_check_branch
      %4902 = sbr.rel (0) target = $region21
    $region20: #{conv_bn_mish_nhwc.3} parent=1 // pred_region
      %4903 = dma.done [#allocation3], 16384
    $region21: #{conv_bn_mish_nhwc.3} parent=1 // pred_fallthru
      _
    %4904 = vsyncpa [#allocation3], 1

</llo_original>
